<compile_context>
chip_gen: v6e
topology: v6e:2x2x1
jax: 0.10.0
libtpu: 0.0.40
codegen_flags: <defaults>
</compile_context>

<pallas_src>
import jax
import jax.numpy as jnp
from jax.experimental import pallas as pl
from jax.experimental.pallas import tpu as pltpu

S = 8            # sequence length (free choice)
B = 10           # LSTM batch, fixed by the module (h0 batch and Linear in_features)
H = 16           # hidden_dim
E = 8            # embedding dim
VOCAB = 11
D0 = 2 * E       # layer-0 LSTM input size  = 16
D1 = 2 * H       # layer-1 LSTM input size  = 32 (bidirectional)
OUT = 10         # final Linear out_features

GATES = ("i", "f", "g", "o")        # generation / reference order (PyTorch-style)
GATE_ORDER = ("i", "f", "o", "g")   # packed column order: sigmoid gates first, tanh last


# ----------------------------------------------------------------------------------
# Fused kernel: 2-layer bidirectional LSTM + final Linear, single invocation.
# ----------------------------------------------------------------------------------
def task3_kernel(x0c_ref,                    # (S*B, 2*D0)  combined layer-0 input
                 win0_ref, whh0_ref, b0_ref,  # (2*D0, 8H), (2H, 8H), (1, 8H)
                 win1_ref, whh1_ref, b1_ref,  # (2*D1, 8H), (2H, 8H), (1, 8H)
                 wout_ref, bout_ref,          # (B*2H, OUT), (1, OUT)
                 h0c_ref, c0c_ref,            # (2, B, 2H) each: per-layer [fwd|bwd] init
                 o_ref,                       # (S, OUT) output
                 gx0_s, gx1_s,                # (S*B, 8H) scratch: precomputed gate inputs
                 l0c_s,                       # (S*B, 4H) scratch: combined layer-1 input
                 out1_s):                     # (S*B, 2H) scratch: layer-1 outputs (flat rows)

    # ---- layer-0 input projection: every timestep x both directions, one MXU matmul ----
    gx0_s[...] = (jnp.dot(x0c_ref[...], win0_ref[...],
                          preferred_element_type=jnp.float32) + b0_ref[...])

    def bidir_layer(gx_s, whh_ref, h_init, c_init, store):
        """Fused fwd+bwd recurrence. h/c layout: lanes 0:H fwd, H:2H bwd.
        gx_s rows k*B.. hold [fwd gates at time k | bwd gates at time S-1-k] (+bias)."""
        whh = whh_ref[...]                                   # hoisted, loaded once
        h, c = h_init, c_init                                # (B, 2H) each
        for k in range(S):                                   # fully unrolled
            gates = gx_s[pl.ds(k * B, B), :] + jnp.dot(
                h, whh, preferred_element_type=jnp.float32)  # (B, 8H)
            sig = jax.nn.sigmoid(gates[:, 0:6 * H])          # i | f | o, both directions
            gi = sig[:, 0:2 * H]
            gf = sig[:, 2 * H:4 * H]
            go = sig[:, 4 * H:6 * H]
            gg = jnp.tanh(gates[:, 6 * H:8 * H])
            c = gf * c + gi * gg
            h = go * jnp.tanh(c)
            store(k, h)
        return h, c

    # layer-0 stores build the combined layer-1 input:
    #   row k*B+b of l0c_s = [h0f[k,b], h0b[k,b], h0f[S-1-k,b], h0b[S-1-k,b]]
    def store_l0(k, h):
        kk = S - 1 - k
        hf = h[:, 0:H]          # forward hidden at time k
        hb = h[:, H:2 * H]      # backward hidden at time S-1-k
        l0c_s[pl.ds(k * B, B), 0:H] = hf
        l0c_s[pl.ds(kk * B, B), 2 * H:3 * H] = hf
        l0c_s[pl.ds(kk * B, B), H:2 * H] = hb
        l0c_s[pl.ds(k * B, B), 3 * H:4 * H] = hb

    bidir_layer(gx0_s, whh0_ref, h0c_ref[0], c0c_ref[0], store_l0)

    # ---- layer-1 input projection: one (80, 64) @ (64, 128) matmul ----
    gx1_s[...] = (jnp.dot(l0c_s[...], win1_ref[...],
                          preferred_element_type=jnp.float32) + b1_ref[...])

    # layer-1 stores: row s*B+b of out1_s = [h1f[s,b] | h1b[s,b]]
    def store_l1(k, h):
        out1_s[pl.ds(k * B, B), 0:H] = h[:, 0:H]
        out1_s[pl.ds((S - 1 - k) * B, B), H:2 * H] = h[:, H:2 * H]

    bidir_layer(gx1_s, whh1_ref, h0c_ref[1], c0c_ref[1], store_l1)

    # ---- fused final Linear: out[s,:] = flatten_b(out1[s]) @ W_out + b_out ----
    # flatten over batch is realised as a sum of per-batch (S,2H)@(2H,OUT) matmuls,
    # gathering batch-b rows with a strided slice (rows b, b+B, ..., b+(S-1)*B).
    acc = jnp.broadcast_to(bout_ref[...], (S, OUT))
    for b in range(B):
        rows_b = out1_s[pl.ds(b, S, stride=B), :]            # (S, 2H): batch b, all times
        acc = acc + jnp.dot(rows_b, wout_ref[b * 2 * H:(b + 1) * 2 * H, :],
                            preferred_element_type=jnp.float32)
    o_ref[...] = acc


# ----------------------------------------------------------------------------------
# Parameter construction & packing
# ----------------------------------------------------------------------------------
def make_params(key):
    """Raw per-gate weights (the PyTorch-equivalent parameterisation), random f32."""
    keys = jax.random.split(key, 64)
    it = iter(keys)

    def rnd(shape, scale=0.1):
        return jax.random.normal(next(it), shape, jnp.float32) * scale

    raw = {
        "emb": rnd((VOCAB, E), 1.0),
        # TODO(synk): the PyTorch module re-randomizes self.h with torch.randn on every
        # forward; here h0/c0 are a fixed deterministic random init (intentional divergence).
        "h0": rnd((4, B, H), 1.0), "c0": rnd((4, B, H), 1.0),
        "w_out": rnd((B * 2 * H, OUT)), "b_out": rnd((OUT,)),
    }
    for l, din in ((0, D0), (1, D1)):
        for d in ("f", "b"):
            for g in GATES:
                raw[f"wx{l}{d}{g}"] = rnd((din, H))   # input->gate  (already transposed)
                raw[f"wh{l}{d}{g}"] = rnd((H, H))     # hidden->gate (already transposed)
                raw[f"b{l}{d}{g}"] = rnd((H,))        # b_ih + b_hh combined
    return raw


def pack_params(raw):
    """Pack per-gate weights into the fused block-diagonal layouts used by the kernel.

    Column layout of every 8H=128-wide gate tile (groups of H=16 lanes):
        [i_f, i_b, f_f, f_b, o_f, o_b, g_f, g_b]
    Input weights are block matrices over the combined input [u[k] | u[S-1-k]];
    recurrent weights are block-diagonal over the combined state [h_f | h_b].
    """
    def pack_layer(l, din):
        zx = jnp.zeros((din, H), jnp.float32)
        zh = jnp.zeros((H, H), jnp.float32)
        win_cols, whh_cols, b_cols = [], [], []
        for g in GATE_ORDER:
            win_cols += [jnp.concatenate([raw[f"wx{l}f{g}"], zx], axis=0),
                         jnp.concatenate([zx, raw[f"wx{l}b{g}"]], axis=0)]
            whh_cols += [jnp.concatenate([raw[f"wh{l}f{g}"], zh], axis=0),
                         jnp.concatenate([zh, raw[f"wh{l}b{g}"]], axis=0)]
            b_cols += [raw[f"b{l}f{g}"], raw[f"b{l}b{g}"]]
        return (jnp.concatenate(win_cols, axis=1),               # (2*din, 8H)
                jnp.concatenate(whh_cols, axis=1),               # (2H, 8H)
                jnp.concatenate(b_cols).reshape(1, 8 * H))       # (1, 8H)

    win0, whh0, b0 = pack_layer(0, D0)
    win1, whh1, b1 = pack_layer(1, D1)
    h0, c0 = raw["h0"], raw["c0"]
    return {
        "emb": raw["emb"],
        "win0": win0, "whh0": whh0, "b0": b0,
        "win1": win1, "whh1": whh1, "b1": b1,
        "w_out": raw["w_out"], "b_out": raw["b_out"].reshape(1, OUT),
        "h0c": jnp.stack([jnp.concatenate([h0[0], h0[1]], axis=-1),
                          jnp.concatenate([h0[2], h0[3]], axis=-1)], axis=0),
        "c0c": jnp.stack([jnp.concatenate([c0[0], c0[1]], axis=-1),
                          jnp.concatenate([c0[2], c0[3]], axis=-1)], axis=0),
    }


# ----------------------------------------------------------------------------------
# Forward pass (embedding gather + input packing in XLA, everything else in the kernel)
# ----------------------------------------------------------------------------------
@jax.jit
def forward(x_idx, xq_idx, pp):
    x_emb = jnp.take(pp["emb"], x_idx, axis=0)              # (S, B, 8)
    q_emb = jnp.take(pp["emb"], xq_idx, axis=0)             # (S, 1, 8)
    q_emb = jnp.broadcast_to(q_emb, (S, B, E))              # x_query.repeat(1, 10, 1)
    x = jnp.concatenate([x_emb, q_emb], axis=2)             # (S, B, 16)
    # combined layer-0 input: row (k, b) = [x[k, b, :], x[S-1-k, b, :]]
    x0c = jnp.concatenate([x, x[::-1]], axis=2).reshape(S * B, 2 * D0)

    vmem = pl.BlockSpec(memory_space=pltpu.MemorySpace.VMEM)
    return pl.pallas_call(
        task3_kernel,
        out_shape=jax.ShapeDtypeStruct((S, OUT), jnp.float32),
        in_specs=[vmem] * 11,
        out_specs=vmem,
        scratch_shapes=[
            pltpu.VMEM((S * B, 8 * H), jnp.float32),   # gx0: layer-0 gate inputs (+bias)
            pltpu.VMEM((S * B, 8 * H), jnp.float32),   # gx1: layer-1 gate inputs (+bias)
            pltpu.VMEM((S * B, 4 * H), jnp.float32),   # combined layer-1 input
            pltpu.VMEM((S * B, 2 * H), jnp.float32),   # layer-1 outputs (flat rows)
        ],
    )(x0c, pp["win0"], pp["whh0"], pp["b0"],
      pp["win1"], pp["whh1"], pp["b1"],
      pp["w_out"], pp["b_out"], pp["h0c"], pp["c0c"])


# ----------------------------------------------------------------------------------
# Pure-JAX reference (same math, straightforward per-direction loops) for validation
# ----------------------------------------------------------------------------------
def _ref_forward(x_idx, xq_idx, raw):
    x_emb = jnp.take(raw["emb"], x_idx, axis=0)
    q_emb = jnp.take(raw["emb"], xq_idx, axis=0)
    q_emb = jnp.broadcast_to(q_emb, (S, B, E))
    x = jnp.concatenate([x_emb, q_emb], axis=2)

    def run_dir(xs, l, d, h, c, reverse):
        hs = [None] * S
        order = range(S - 1, -1, -1) if reverse else range(S)
        for t in order:
            xt = xs[t]
            pre = {g: xt @ raw[f"wx{l}{d}{g}"] + h @ raw[f"wh{l}{d}{g}"] + raw[f"b{l}{d}{g}"]
                   for g in GATES}
            i = jax.nn.sigmoid(pre["i"])
            f = jax.nn.sigmoid(pre["f"])
            g_ = jnp.tanh(pre["g"])
            o = jax.nn.sigmoid(pre["o"])
            c = f * c + i * g_
            h = o * jnp.tanh(c)
            hs[t] = h
        return jnp.stack(hs, axis=0)

    l0f = run_dir(x, 0, "f", raw["h0"][0], raw["c0"][0], False)
    l0b = run_dir(x, 0, "b", raw["h0"][1], raw["c0"][1], True)
    l0 = jnp.concatenate([l0f, l0b], axis=-1)
    l1f = run_dir(l0, 1, "f", raw["h0"][2], raw["c0"][2], False)
    l1b = run_dir(l0, 1, "b", raw["h0"][3], raw["c0"][3], True)
    out = jnp.concatenate([l1f, l1b], axis=-1)              # (S, B, 2H)
    flat = out.reshape(S, B * 2 * H)
    return flat @ raw["w_out"] + raw["b_out"]


if __name__ == "__main__":
    key = jax.random.PRNGKey(0)
    k_in, k_q, k_p = jax.random.split(key, 3)

    # Integer token ids, as implied by nn.Embedding(11, 8).
    x_idx = jax.random.randint(k_in, (S, B), 0, VOCAB, dtype=jnp.int32)    # x
    xq_idx = jax.random.randint(k_q, (S, 1), 0, VOCAB, dtype=jnp.int32)    # x_query

    raw = make_params(k_p)
    packed = pack_params(raw)

    out = forward(x_idx, xq_idx, packed)
    out = jax.block_until_ready(out)
    assert out.shape == (S, OUT) and out.dtype == jnp.float32
    assert bool(jnp.all(jnp.isfinite(out)))

    # Validate against the pure-JAX reference of the same module.
    ref = jax.block_until_ready(jax.jit(_ref_forward)(x_idx, xq_idx, raw))
    err = float(jnp.max(jnp.abs(out - ref)))
    assert err < 1e-3, f"kernel/reference mismatch: max abs err = {err}"

    print("KERNEL_OK")
</pallas_src>

<mosaic_0001>
module attributes {stable_mosaic.version = 11 : i64} {
  func.func @task3_kernel(%arg0: memref<80x32xf32, #tpu.memory_space<vmem>>, %arg1: memref<32x128xf32, #tpu.memory_space<vmem>>, %arg2: memref<32x128xf32, #tpu.memory_space<vmem>>, %arg3: memref<1x128xf32, #tpu.memory_space<vmem>>, %arg4: memref<64x128xf32, #tpu.memory_space<vmem>>, %arg5: memref<32x128xf32, #tpu.memory_space<vmem>>, %arg6: memref<1x128xf32, #tpu.memory_space<vmem>>, %arg7: memref<320x10xf32, #tpu.memory_space<vmem>>, %arg8: memref<1x10xf32, #tpu.memory_space<vmem>>, %arg9: memref<2x10x32xf32, #tpu.memory_space<vmem>>, %arg10: memref<2x10x32xf32, #tpu.memory_space<vmem>>, %arg11: memref<8x10xf32, #tpu.memory_space<vmem>>, %arg12: memref<80x128xf32, #tpu.memory_space<vmem>>, %arg13: memref<80x128xf32, #tpu.memory_space<vmem>>, %arg14: memref<80x64xf32, #tpu.memory_space<vmem>>, %arg15: memref<80x32xf32, #tpu.memory_space<vmem>>) attributes {dimension_semantics = [], scalar_prefetch = 0 : i64, scratch_operands = 4 : i64, tpu.core_type = #tpu.core_type<tc>} {
    %c0 = arith.constant 0 : index
    %c0_0 = arith.constant 0 : index
    %0 = vector.load %arg0[%c0, %c0_0] : memref<80x32xf32, #tpu.memory_space<vmem>>, vector<80x32xf32>
    %c0_1 = arith.constant 0 : index
    %c0_2 = arith.constant 0 : index
    %1 = vector.load %arg1[%c0_1, %c0_2] : memref<32x128xf32, #tpu.memory_space<vmem>>, vector<32x128xf32>
    %cst = arith.constant dense<0.000000e+00> : vector<80x128xf32>
    %2 = tpu.matmul %0, %1, %cst {dimension_numbers = #tpu.dot_dimension_numbers<[1], [0], [0], [1], [0, 0, 1, 1], [], []>} : vector<80x32xf32>, vector<32x128xf32>, vector<80x128xf32> -> vector<80x128xf32>
    %c0_3 = arith.constant 0 : index
    %c0_4 = arith.constant 0 : index
    %3 = vector.load %arg3[%c0_3, %c0_4] : memref<1x128xf32, #tpu.memory_space<vmem>>, vector<1x128xf32>
    %4 = vector.broadcast %3 : vector<1x128xf32> to vector<80x128xf32>
    %5 = arith.addf %2, %4 : vector<80x128xf32>
    %c0_5 = arith.constant 0 : index
    %c0_6 = arith.constant 0 : index
    %6 = vector.load %arg12[%c0_5, %c0_6] : memref<80x128xf32, #tpu.memory_space<vmem>>, vector<80x128xf32>
    tpu.vector_store %arg12[%c0_5, %c0_6], %5 {strides = array<i32>} : memref<80x128xf32, #tpu.memory_space<vmem>>, vector<80x128xf32>,
    %c0_7 = arith.constant 0 : index
    %c0_8 = arith.constant 0 : index
    %c0_9 = arith.constant 0 : index
    %7 = vector.load %arg9[%c0_7, %c0_8, %c0_9] : memref<2x10x32xf32, #tpu.memory_space<vmem>>, vector<1x10x32xf32>
    %8 = vector.shape_cast %7 : vector<1x10x32xf32> to vector<10x32xf32>
    %c0_10 = arith.constant 0 : index
    %c0_11 = arith.constant 0 : index
    %c0_12 = arith.constant 0 : index
    %9 = vector.load %arg10[%c0_10, %c0_11, %c0_12] : memref<2x10x32xf32, #tpu.memory_space<vmem>>, vector<1x10x32xf32>
    %10 = vector.shape_cast %9 : vector<1x10x32xf32> to vector<10x32xf32>
    %c0_13 = arith.constant 0 : index
    %c0_14 = arith.constant 0 : index
    %11 = vector.load %arg2[%c0_13, %c0_14] : memref<32x128xf32, #tpu.memory_space<vmem>>, vector<32x128xf32>
    %c0_15 = arith.constant 0 : index
    %c0_16 = arith.constant 0 : index
    %12 = vector.load %arg12[%c0_15, %c0_16] : memref<80x128xf32, #tpu.memory_space<vmem>>, vector<10x128xf32>
    %cst_17 = arith.constant dense<0.000000e+00> : vector<10x128xf32>
    %13 = tpu.matmul %8, %11, %cst_17 {dimension_numbers = #tpu.dot_dimension_numbers<[1], [0], [0], [1], [0, 0, 1, 1], [], []>} : vector<10x32xf32>, vector<32x128xf32>, vector<10x128xf32> -> vector<10x128xf32>
    %14 = arith.addf %12, %13 : vector<10x128xf32>
    %15 = vector.extract_strided_slice %14 {offsets = [0, 0], sizes = [10, 96], strides = [1, 1]} : vector<10x128xf32> to vector<10x96xf32>
    %16 = arith.negf %15 : vector<10x96xf32>
    %17 = math.exp %16 : vector<10x96xf32>
    %cst_18 = arith.constant 1.000000e+00 : f32
    %18 = vector.broadcast %cst_18 : f32 to vector<10x96xf32>
    %19 = arith.addf %18, %17 : vector<10x96xf32>
    %20 = arith.divf %18, %19 : vector<10x96xf32>
    %21 = vector.extract_strided_slice %20 {offsets = [0, 0], sizes = [10, 32], strides = [1, 1]} : vector<10x96xf32> to vector<10x32xf32>
    %22 = vector.extract_strided_slice %20 {offsets = [0, 32], sizes = [10, 32], strides = [1, 1]} : vector<10x96xf32> to vector<10x32xf32>
    %23 = vector.extract_strided_slice %20 {offsets = [0, 64], sizes = [10, 32], strides = [1, 1]} : vector<10x96xf32> to vector<10x32xf32>
    %24 = vector.extract_strided_slice %14 {offsets = [0, 96], sizes = [10, 32], strides = [1, 1]} : vector<10x128xf32> to vector<10x32xf32>
    %25 = math.tanh %24 : vector<10x32xf32>
    %26 = arith.mulf %22, %10 : vector<10x32xf32>
    %27 = arith.mulf %21, %25 : vector<10x32xf32>
    %28 = arith.addf %26, %27 : vector<10x32xf32>
    %29 = math.tanh %28 : vector<10x32xf32>
    %30 = arith.mulf %23, %29 : vector<10x32xf32>
    %31 = vector.extract_strided_slice %30 {offsets = [0, 0], sizes = [10, 16], strides = [1, 1]} : vector<10x32xf32> to vector<10x16xf32>
    %32 = vector.extract_strided_slice %30 {offsets = [0, 16], sizes = [10, 16], strides = [1, 1]} : vector<10x32xf32> to vector<10x16xf32>
    %c0_19 = arith.constant 0 : index
    %c0_20 = arith.constant 0 : index
    %33 = vector.load %arg14[%c0_19, %c0_20] : memref<80x64xf32, #tpu.memory_space<vmem>>, vector<10x16xf32>
    tpu.vector_store %arg14[%c0_19, %c0_20], %31 {strides = array<i32>} : memref<80x64xf32, #tpu.memory_space<vmem>>, vector<10x16xf32>,
    %c70 = arith.constant 70 : index
    %c32 = arith.constant 32 : index
    %34 = vector.load %arg14[%c70, %c32] : memref<80x64xf32, #tpu.memory_space<vmem>>, vector<10x16xf32>
    tpu.vector_store %arg14[%c70, %c32], %31 {strides = array<i32>} : memref<80x64xf32, #tpu.memory_space<vmem>>, vector<10x16xf32>,
    %c70_21 = arith.constant 70 : index
    %c16 = arith.constant 16 : index
    %35 = vector.load %arg14[%c70_21, %c16] : memref<80x64xf32, #tpu.memory_space<vmem>>, vector<10x16xf32>
    tpu.vector_store %arg14[%c70_21, %c16], %32 {strides = array<i32>} : memref<80x64xf32, #tpu.memory_space<vmem>>, vector<10x16xf32>,
    %c0_22 = arith.constant 0 : index
    %c48 = arith.constant 48 : index
    %36 = vector.load %arg14[%c0_22, %c48] : memref<80x64xf32, #tpu.memory_space<vmem>>, vector<10x16xf32>
    tpu.vector_store %arg14[%c0_22, %c48], %32 {strides = array<i32>} : memref<80x64xf32, #tpu.memory_space<vmem>>, vector<10x16xf32>,
    %c10 = arith.constant 10 : index
    %c0_23 = arith.constant 0 : index
    %37 = vector.load %arg12[%c10, %c0_23] : memref<80x128xf32, #tpu.memory_space<vmem>>, vector<10x128xf32>
    %cst_24 = arith.constant dense<0.000000e+00> : vector<10x128xf32>
    %38 = tpu.matmul %30, %11, %cst_24 {dimension_numbers = #tpu.dot_dimension_numbers<[1], [0], [0], [1], [0, 0, 1, 1], [], []>} : vector<10x32xf32>, vector<32x128xf32>, vector<10x128xf32> -> vector<10x128xf32>
    %39 = arith.addf %37, %38 : vector<10x128xf32>
    %40 = vector.extract_strided_slice %39 {offsets = [0, 0], sizes = [10, 96], strides = [1, 1]} : vector<10x128xf32> to vector<10x96xf32>
    %41 = arith.negf %40 : vector<10x96xf32>
    %42 = math.exp %41 : vector<10x96xf32>
    %cst_25 = arith.constant 1.000000e+00 : f32
    %43 = vector.broadcast %cst_25 : f32 to vector<10x96xf32>
    %44 = arith.addf %43, %42 : vector<10x96xf32>
    %45 = arith.divf %43, %44 : vector<10x96xf32>
    %46 = vector.extract_strided_slice %45 {offsets = [0, 0], sizes = [10, 32], strides = [1, 1]} : vector<10x96xf32> to vector<10x32xf32>
    %47 = vector.extract_strided_slice %45 {offsets = [0, 32], sizes = [10, 32], strides = [1, 1]} : vector<10x96xf32> to vector<10x32xf32>
    %48 = vector.extract_strided_slice %45 {offsets = [0, 64], sizes = [10, 32], strides = [1, 1]} : vector<10x96xf32> to vector<10x32xf32>
    %49 = vector.extract_strided_slice %39 {offsets = [0, 96], sizes = [10, 32], strides = [1, 1]} : vector<10x128xf32> to vector<10x32xf32>
    %50 = math.tanh %49 : vector<10x32xf32>
    %51 = arith.mulf %47, %28 : vector<10x32xf32>
    %52 = arith.mulf %46, %50 : vector<10x32xf32>
    %53 = arith.addf %51, %52 : vector<10x32xf32>
    %54 = math.tanh %53 : vector<10x32xf32>
    %55 = arith.mulf %48, %54 : vector<10x32xf32>
    %56 = vector.extract_strided_slice %55 {offsets = [0, 0], sizes = [10, 16], strides = [1, 1]} : vector<10x32xf32> to vector<10x16xf32>
    %57 = vector.extract_strided_slice %55 {offsets = [0, 16], sizes = [10, 16], strides = [1, 1]} : vector<10x32xf32> to vector<10x16xf32>
    %c10_26 = arith.constant 10 : index
    %c0_27 = arith.constant 0 : index
    %58 = vector.load %arg14[%c10_26, %c0_27] : memref<80x64xf32, #tpu.memory_space<vmem>>, vector<10x16xf32>
    tpu.vector_store %arg14[%c10_26, %c0_27], %56 {strides = array<i32>} : memref<80x64xf32, #tpu.memory_space<vmem>>, vector<10x16xf32>,
    %c60 = arith.constant 60 : index
    %c32_28 = arith.constant 32 : index
    %59 = vector.load %arg14[%c60, %c32_28] : memref<80x64xf32, #tpu.memory_space<vmem>>, vector<10x16xf32>
    tpu.vector_store %arg14[%c60, %c32_28], %56 {strides = array<i32>} : memref<80x64xf32, #tpu.memory_space<vmem>>, vector<10x16xf32>,
    %c60_29 = arith.constant 60 : index
    %c16_30 = arith.constant 16 : index
    %60 = vector.load %arg14[%c60_29, %c16_30] : memref<80x64xf32, #tpu.memory_space<vmem>>, vector<10x16xf32>
    tpu.vector_store %arg14[%c60_29, %c16_30], %57 {strides = array<i32>} : memref<80x64xf32, #tpu.memory_space<vmem>>, vector<10x16xf32>,
    %c10_31 = arith.constant 10 : index
    %c48_32 = arith.constant 48 : index
    %61 = vector.load %arg14[%c10_31, %c48_32] : memref<80x64xf32, #tpu.memory_space<vmem>>, vector<10x16xf32>
    tpu.vector_store %arg14[%c10_31, %c48_32], %57 {strides = array<i32>} : memref<80x64xf32, #tpu.memory_space<vmem>>, vector<10x16xf32>,
    %c20 = arith.constant 20 : index
    %c0_33 = arith.constant 0 : index
    %62 = vector.load %arg12[%c20, %c0_33] : memref<80x128xf32, #tpu.memory_space<vmem>>, vector<10x128xf32>
    %cst_34 = arith.constant dense<0.000000e+00> : vector<10x128xf32>
    %63 = tpu.matmul %55, %11, %cst_34 {dimension_numbers = #tpu.dot_dimension_numbers<[1], [0], [0], [1], [0, 0, 1, 1], [], []>} : vector<10x32xf32>, vector<32x128xf32>, vector<10x128xf32> -> vector<10x128xf32>
    %64 = arith.addf %62, %63 : vector<10x128xf32>
    %65 = vector.extract_strided_slice %64 {offsets = [0, 0], sizes = [10, 96], strides = [1, 1]} : vector<10x128xf32> to vector<10x96xf32>
    %66 = arith.negf %65 : vector<10x96xf32>
    %67 = math.exp %66 : vector<10x96xf32>
    %cst_35 = arith.constant 1.000000e+00 : f32
    %68 = vector.broadcast %cst_35 : f32 to vector<10x96xf32>
    %69 = arith.addf %68, %67 : vector<10x96xf32>
    %70 = arith.divf %68, %69 : vector<10x96xf32>
    %71 = vector.extract_strided_slice %70 {offsets = [0, 0], sizes = [10, 32], strides = [1, 1]} : vector<10x96xf32> to vector<10x32xf32>
    %72 = vector.extract_strided_slice %70 {offsets = [0, 32], sizes = [10, 32], strides = [1, 1]} : vector<10x96xf32> to vector<10x32xf32>
    %73 = vector.extract_strided_slice %70 {offsets = [0, 64], sizes = [10, 32], strides = [1, 1]} : vector<10x96xf32> to vector<10x32xf32>
    %74 = vector.extract_strided_slice %64 {offsets = [0, 96], sizes = [10, 32], strides = [1, 1]} : vector<10x128xf32> to vector<10x32xf32>
    %75 = math.tanh %74 : vector<10x32xf32>
    %76 = arith.mulf %72, %53 : vector<10x32xf32>
    %77 = arith.mulf %71, %75 : vector<10x32xf32>
    %78 = arith.addf %76, %77 : vector<10x32xf32>
    %79 = math.tanh %78 : vector<10x32xf32>
    %80 = arith.mulf %73, %79 : vector<10x32xf32>
    %81 = vector.extract_strided_slice %80 {offsets = [0, 0], sizes = [10, 16], strides = [1, 1]} : vector<10x32xf32> to vector<10x16xf32>
    %82 = vector.extract_strided_slice %80 {offsets = [0, 16], sizes = [10, 16], strides = [1, 1]} : vector<10x32xf32> to vector<10x16xf32>
    %c20_36 = arith.constant 20 : index
    %c0_37 = arith.constant 0 : index
    %83 = vector.load %arg14[%c20_36, %c0_37] : memref<80x64xf32, #tpu.memory_space<vmem>>, vector<10x16xf32>
    tpu.vector_store %arg14[%c20_36, %c0_37], %81 {strides = array<i32>} : memref<80x64xf32, #tpu.memory_space<vmem>>, vector<10x16xf32>,
    %c50 = arith.constant 50 : index
    %c32_38 = arith.constant 32 : index
    %84 = vector.load %arg14[%c50, %c32_38] : memref<80x64xf32, #tpu.memory_space<vmem>>, vector<10x16xf32>
    tpu.vector_store %arg14[%c50, %c32_38], %81 {strides = array<i32>} : memref<80x64xf32, #tpu.memory_space<vmem>>, vector<10x16xf32>,
    %c50_39 = arith.constant 50 : index
    %c16_40 = arith.constant 16 : index
    %85 = vector.load %arg14[%c50_39, %c16_40] : memref<80x64xf32, #tpu.memory_space<vmem>>, vector<10x16xf32>
    tpu.vector_store %arg14[%c50_39, %c16_40], %82 {strides = array<i32>} : memref<80x64xf32, #tpu.memory_space<vmem>>, vector<10x16xf32>,
    %c20_41 = arith.constant 20 : index
    %c48_42 = arith.constant 48 : index
    %86 = vector.load %arg14[%c20_41, %c48_42] : memref<80x64xf32, #tpu.memory_space<vmem>>, vector<10x16xf32>
    tpu.vector_store %arg14[%c20_41, %c48_42], %82 {strides = array<i32>} : memref<80x64xf32, #tpu.memory_space<vmem>>, vector<10x16xf32>,
    %c30 = arith.constant 30 : index
    %c0_43 = arith.constant 0 : index
    %87 = vector.load %arg12[%c30, %c0_43] : memref<80x128xf32, #tpu.memory_space<vmem>>, vector<10x128xf32>
    %cst_44 = arith.constant dense<0.000000e+00> : vector<10x128xf32>
    %88 = tpu.matmul %80, %11, %cst_44 {dimension_numbers = #tpu.dot_dimension_numbers<[1], [0], [0], [1], [0, 0, 1, 1], [], []>} : vector<10x32xf32>, vector<32x128xf32>, vector<10x128xf32> -> vector<10x128xf32>
    %89 = arith.addf %87, %88 : vector<10x128xf32>
    %90 = vector.extract_strided_slice %89 {offsets = [0, 0], sizes = [10, 96], strides = [1, 1]} : vector<10x128xf32> to vector<10x96xf32>
    %91 = arith.negf %90 : vector<10x96xf32>
    %92 = math.exp %91 : vector<10x96xf32>
    %cst_45 = arith.constant 1.000000e+00 : f32
    %93 = vector.broadcast %cst_45 : f32 to vector<10x96xf32>
    %94 = arith.addf %93, %92 : vector<10x96xf32>
    %95 = arith.divf %93, %94 : vector<10x96xf32>
    %96 = vector.extract_strided_slice %95 {offsets = [0, 0], sizes = [10, 32], strides = [1, 1]} : vector<10x96xf32> to vector<10x32xf32>
    %97 = vector.extract_strided_slice %95 {offsets = [0, 32], sizes = [10, 32], strides = [1, 1]} : vector<10x96xf32> to vector<10x32xf32>
    %98 = vector.extract_strided_slice %95 {offsets = [0, 64], sizes = [10, 32], strides = [1, 1]} : vector<10x96xf32> to vector<10x32xf32>
    %99 = vector.extract_strided_slice %89 {offsets = [0, 96], sizes = [10, 32], strides = [1, 1]} : vector<10x128xf32> to vector<10x32xf32>
    %100 = math.tanh %99 : vector<10x32xf32>
    %101 = arith.mulf %97, %78 : vector<10x32xf32>
    %102 = arith.mulf %96, %100 : vector<10x32xf32>
    %103 = arith.addf %101, %102 : vector<10x32xf32>
    %104 = math.tanh %103 : vector<10x32xf32>
    %105 = arith.mulf %98, %104 : vector<10x32xf32>
    %106 = vector.extract_strided_slice %105 {offsets = [0, 0], sizes = [10, 16], strides = [1, 1]} : vector<10x32xf32> to vector<10x16xf32>
    %107 = vector.extract_strided_slice %105 {offsets = [0, 16], sizes = [10, 16], strides = [1, 1]} : vector<10x32xf32> to vector<10x16xf32>
    %c30_46 = arith.constant 30 : index
    %c0_47 = arith.constant 0 : index
    %108 = vector.load %arg14[%c30_46, %c0_47] : memref<80x64xf32, #tpu.memory_space<vmem>>, vector<10x16xf32>
    tpu.vector_store %arg14[%c30_46, %c0_47], %106 {strides = array<i32>} : memref<80x64xf32, #tpu.memory_space<vmem>>, vector<10x16xf32>,
    %c40 = arith.constant 40 : index
    %c32_48 = arith.constant 32 : index
    %109 = vector.load %arg14[%c40, %c32_48] : memref<80x64xf32, #tpu.memory_space<vmem>>, vector<10x16xf32>
    tpu.vector_store %arg14[%c40, %c32_48], %106 {strides = array<i32>} : memref<80x64xf32, #tpu.memory_space<vmem>>, vector<10x16xf32>,
    %c40_49 = arith.constant 40 : index
    %c16_50 = arith.constant 16 : index
    %110 = vector.load %arg14[%c40_49, %c16_50] : memref<80x64xf32, #tpu.memory_space<vmem>>, vector<10x16xf32>
    tpu.vector_store %arg14[%c40_49, %c16_50], %107 {strides = array<i32>} : memref<80x64xf32, #tpu.memory_space<vmem>>, vector<10x16xf32>,
    %c30_51 = arith.constant 30 : index
    %c48_52 = arith.constant 48 : index
    %111 = vector.load %arg14[%c30_51, %c48_52] : memref<80x64xf32, #tpu.memory_space<vmem>>, vector<10x16xf32>
    tpu.vector_store %arg14[%c30_51, %c48_52], %107 {strides = array<i32>} : memref<80x64xf32, #tpu.memory_space<vmem>>, vector<10x16xf32>,
    %c40_53 = arith.constant 40 : index
    %c0_54 = arith.constant 0 : index
    %112 = vector.load %arg12[%c40_53, %c0_54] : memref<80x128xf32, #tpu.memory_space<vmem>>, vector<10x128xf32>
    %cst_55 = arith.constant dense<0.000000e+00> : vector<10x128xf32>
    %113 = tpu.matmul %105, %11, %cst_55 {dimension_numbers = #tpu.dot_dimension_numbers<[1], [0], [0], [1], [0, 0, 1, 1], [], []>} : vector<10x32xf32>, vector<32x128xf32>, vector<10x128xf32> -> vector<10x128xf32>
    %114 = arith.addf %112, %113 : vector<10x128xf32>
    %115 = vector.extract_strided_slice %114 {offsets = [0, 0], sizes = [10, 96], strides = [1, 1]} : vector<10x128xf32> to vector<10x96xf32>
    %116 = arith.negf %115 : vector<10x96xf32>
    %117 = math.exp %116 : vector<10x96xf32>
    %cst_56 = arith.constant 1.000000e+00 : f32
    %118 = vector.broadcast %cst_56 : f32 to vector<10x96xf32>
    %119 = arith.addf %118, %117 : vector<10x96xf32>
    %120 = arith.divf %118, %119 : vector<10x96xf32>
    %121 = vector.extract_strided_slice %120 {offsets = [0, 0], sizes = [10, 32], strides = [1, 1]} : vector<10x96xf32> to vector<10x32xf32>
    %122 = vector.extract_strided_slice %120 {offsets = [0, 32], sizes = [10, 32], strides = [1, 1]} : vector<10x96xf32> to vector<10x32xf32>
    %123 = vector.extract_strided_slice %120 {offsets = [0, 64], sizes = [10, 32], strides = [1, 1]} : vector<10x96xf32> to vector<10x32xf32>
    %124 = vector.extract_strided_slice %114 {offsets = [0, 96], sizes = [10, 32], strides = [1, 1]} : vector<10x128xf32> to vector<10x32xf32>
    %125 = math.tanh %124 : vector<10x32xf32>
    %126 = arith.mulf %122, %103 : vector<10x32xf32>
    %127 = arith.mulf %121, %125 : vector<10x32xf32>
    %128 = arith.addf %126, %127 : vector<10x32xf32>
    %129 = math.tanh %128 : vector<10x32xf32>
    %130 = arith.mulf %123, %129 : vector<10x32xf32>
    %131 = vector.extract_strided_slice %130 {offsets = [0, 0], sizes = [10, 16], strides = [1, 1]} : vector<10x32xf32> to vector<10x16xf32>
    %132 = vector.extract_strided_slice %130 {offsets = [0, 16], sizes = [10, 16], strides = [1, 1]} : vector<10x32xf32> to vector<10x16xf32>
    %c40_57 = arith.constant 40 : index
    %c0_58 = arith.constant 0 : index
    %133 = vector.load %arg14[%c40_57, %c0_58] : memref<80x64xf32, #tpu.memory_space<vmem>>, vector<10x16xf32>
    tpu.vector_store %arg14[%c40_57, %c0_58], %131 {strides = array<i32>} : memref<80x64xf32, #tpu.memory_space<vmem>>, vector<10x16xf32>,
    %c30_59 = arith.constant 30 : index
    %c32_60 = arith.constant 32 : index
    %134 = vector.load %arg14[%c30_59, %c32_60] : memref<80x64xf32, #tpu.memory_space<vmem>>, vector<10x16xf32>
    tpu.vector_store %arg14[%c30_59, %c32_60], %131 {strides = array<i32>} : memref<80x64xf32, #tpu.memory_space<vmem>>, vector<10x16xf32>,
    %c30_61 = arith.constant 30 : index
    %c16_62 = arith.constant 16 : index
    %135 = vector.load %arg14[%c30_61, %c16_62] : memref<80x64xf32, #tpu.memory_space<vmem>>, vector<10x16xf32>
    tpu.vector_store %arg14[%c30_61, %c16_62], %132 {strides = array<i32>} : memref<80x64xf32, #tpu.memory_space<vmem>>, vector<10x16xf32>,
    %c40_63 = arith.constant 40 : index
    %c48_64 = arith.constant 48 : index
    %136 = vector.load %arg14[%c40_63, %c48_64] : memref<80x64xf32, #tpu.memory_space<vmem>>, vector<10x16xf32>
    tpu.vector_store %arg14[%c40_63, %c48_64], %132 {strides = array<i32>} : memref<80x64xf32, #tpu.memory_space<vmem>>, vector<10x16xf32>,
    %c50_65 = arith.constant 50 : index
    %c0_66 = arith.constant 0 : index
    %137 = vector.load %arg12[%c50_65, %c0_66] : memref<80x128xf32, #tpu.memory_space<vmem>>, vector<10x128xf32>
    %cst_67 = arith.constant dense<0.000000e+00> : vector<10x128xf32>
    %138 = tpu.matmul %130, %11, %cst_67 {dimension_numbers = #tpu.dot_dimension_numbers<[1], [0], [0], [1], [0, 0, 1, 1], [], []>} : vector<10x32xf32>, vector<32x128xf32>, vector<10x128xf32> -> vector<10x128xf32>
    %139 = arith.addf %137, %138 : vector<10x128xf32>
    %140 = vector.extract_strided_slice %139 {offsets = [0, 0], sizes = [10, 96], strides = [1, 1]} : vector<10x128xf32> to vector<10x96xf32>
    %141 = arith.negf %140 : vector<10x96xf32>
    %142 = math.exp %141 : vector<10x96xf32>
    %cst_68 = arith.constant 1.000000e+00 : f32
    %143 = vector.broadcast %cst_68 : f32 to vector<10x96xf32>
    %144 = arith.addf %143, %142 : vector<10x96xf32>
    %145 = arith.divf %143, %144 : vector<10x96xf32>
    %146 = vector.extract_strided_slice %145 {offsets = [0, 0], sizes = [10, 32], strides = [1, 1]} : vector<10x96xf32> to vector<10x32xf32>
    %147 = vector.extract_strided_slice %145 {offsets = [0, 32], sizes = [10, 32], strides = [1, 1]} : vector<10x96xf32> to vector<10x32xf32>
    %148 = vector.extract_strided_slice %145 {offsets = [0, 64], sizes = [10, 32], strides = [1, 1]} : vector<10x96xf32> to vector<10x32xf32>
    %149 = vector.extract_strided_slice %139 {offsets = [0, 96], sizes = [10, 32], strides = [1, 1]} : vector<10x128xf32> to vector<10x32xf32>
    %150 = math.tanh %149 : vector<10x32xf32>
    %151 = arith.mulf %147, %128 : vector<10x32xf32>
    %152 = arith.mulf %146, %150 : vector<10x32xf32>
    %153 = arith.addf %151, %152 : vector<10x32xf32>
    %154 = math.tanh %153 : vector<10x32xf32>
    %155 = arith.mulf %148, %154 : vector<10x32xf32>
    %156 = vector.extract_strided_slice %155 {offsets = [0, 0], sizes = [10, 16], strides = [1, 1]} : vector<10x32xf32> to vector<10x16xf32>
    %157 = vector.extract_strided_slice %155 {offsets = [0, 16], sizes = [10, 16], strides = [1, 1]} : vector<10x32xf32> to vector<10x16xf32>
    %c50_69 = arith.constant 50 : index
    %c0_70 = arith.constant 0 : index
    %158 = vector.load %arg14[%c50_69, %c0_70] : memref<80x64xf32, #tpu.memory_space<vmem>>, vector<10x16xf32>
    tpu.vector_store %arg14[%c50_69, %c0_70], %156 {strides = array<i32>} : memref<80x64xf32, #tpu.memory_space<vmem>>, vector<10x16xf32>,
    %c20_71 = arith.constant 20 : index
    %c32_72 = arith.constant 32 : index
    %159 = vector.load %arg14[%c20_71, %c32_72] : memref<80x64xf32, #tpu.memory_space<vmem>>, vector<10x16xf32>
    tpu.vector_store %arg14[%c20_71, %c32_72], %156 {strides = array<i32>} : memref<80x64xf32, #tpu.memory_space<vmem>>, vector<10x16xf32>,
    %c20_73 = arith.constant 20 : index
    %c16_74 = arith.constant 16 : index
    %160 = vector.load %arg14[%c20_73, %c16_74] : memref<80x64xf32, #tpu.memory_space<vmem>>, vector<10x16xf32>
    tpu.vector_store %arg14[%c20_73, %c16_74], %157 {strides = array<i32>} : memref<80x64xf32, #tpu.memory_space<vmem>>, vector<10x16xf32>,
    %c50_75 = arith.constant 50 : index
    %c48_76 = arith.constant 48 : index
    %161 = vector.load %arg14[%c50_75, %c48_76] : memref<80x64xf32, #tpu.memory_space<vmem>>, vector<10x16xf32>
    tpu.vector_store %arg14[%c50_75, %c48_76], %157 {strides = array<i32>} : memref<80x64xf32, #tpu.memory_space<vmem>>, vector<10x16xf32>,
    %c60_77 = arith.constant 60 : index
    %c0_78 = arith.constant 0 : index
    %162 = vector.load %arg12[%c60_77, %c0_78] : memref<80x128xf32, #tpu.memory_space<vmem>>, vector<10x128xf32>
    %cst_79 = arith.constant dense<0.000000e+00> : vector<10x128xf32>
    %163 = tpu.matmul %155, %11, %cst_79 {dimension_numbers = #tpu.dot_dimension_numbers<[1], [0], [0], [1], [0, 0, 1, 1], [], []>} : vector<10x32xf32>, vector<32x128xf32>, vector<10x128xf32> -> vector<10x128xf32>
    %164 = arith.addf %162, %163 : vector<10x128xf32>
    %165 = vector.extract_strided_slice %164 {offsets = [0, 0], sizes = [10, 96], strides = [1, 1]} : vector<10x128xf32> to vector<10x96xf32>
    %166 = arith.negf %165 : vector<10x96xf32>
    %167 = math.exp %166 : vector<10x96xf32>
    %cst_80 = arith.constant 1.000000e+00 : f32
    %168 = vector.broadcast %cst_80 : f32 to vector<10x96xf32>
    %169 = arith.addf %168, %167 : vector<10x96xf32>
    %170 = arith.divf %168, %169 : vector<10x96xf32>
    %171 = vector.extract_strided_slice %170 {offsets = [0, 0], sizes = [10, 32], strides = [1, 1]} : vector<10x96xf32> to vector<10x32xf32>
    %172 = vector.extract_strided_slice %170 {offsets = [0, 32], sizes = [10, 32], strides = [1, 1]} : vector<10x96xf32> to vector<10x32xf32>
    %173 = vector.extract_strided_slice %170 {offsets = [0, 64], sizes = [10, 32], strides = [1, 1]} : vector<10x96xf32> to vector<10x32xf32>
    %174 = vector.extract_strided_slice %164 {offsets = [0, 96], sizes = [10, 32], strides = [1, 1]} : vector<10x128xf32> to vector<10x32xf32>
    %175 = math.tanh %174 : vector<10x32xf32>
    %176 = arith.mulf %172, %153 : vector<10x32xf32>
    %177 = arith.mulf %171, %175 : vector<10x32xf32>
    %178 = arith.addf %176, %177 : vector<10x32xf32>
    %179 = math.tanh %178 : vector<10x32xf32>
    %180 = arith.mulf %173, %179 : vector<10x32xf32>
    %181 = vector.extract_strided_slice %180 {offsets = [0, 0], sizes = [10, 16], strides = [1, 1]} : vector<10x32xf32> to vector<10x16xf32>
    %182 = vector.extract_strided_slice %180 {offsets = [0, 16], sizes = [10, 16], strides = [1, 1]} : vector<10x32xf32> to vector<10x16xf32>
    %c60_81 = arith.constant 60 : index
    %c0_82 = arith.constant 0 : index
    %183 = vector.load %arg14[%c60_81, %c0_82] : memref<80x64xf32, #tpu.memory_space<vmem>>, vector<10x16xf32>
    tpu.vector_store %arg14[%c60_81, %c0_82], %181 {strides = array<i32>} : memref<80x64xf32, #tpu.memory_space<vmem>>, vector<10x16xf32>,
    %c10_83 = arith.constant 10 : index
    %c32_84 = arith.constant 32 : index
    %184 = vector.load %arg14[%c10_83, %c32_84] : memref<80x64xf32, #tpu.memory_space<vmem>>, vector<10x16xf32>
    tpu.vector_store %arg14[%c10_83, %c32_84], %181 {strides = array<i32>} : memref<80x64xf32, #tpu.memory_space<vmem>>, vector<10x16xf32>,
    %c10_85 = arith.constant 10 : index
    %c16_86 = arith.constant 16 : index
    %185 = vector.load %arg14[%c10_85, %c16_86] : memref<80x64xf32, #tpu.memory_space<vmem>>, vector<10x16xf32>
    tpu.vector_store %arg14[%c10_85, %c16_86], %182 {strides = array<i32>} : memref<80x64xf32, #tpu.memory_space<vmem>>, vector<10x16xf32>,
    %c60_87 = arith.constant 60 : index
    %c48_88 = arith.constant 48 : index
    %186 = vector.load %arg14[%c60_87, %c48_88] : memref<80x64xf32, #tpu.memory_space<vmem>>, vector<10x16xf32>
    tpu.vector_store %arg14[%c60_87, %c48_88], %182 {strides = array<i32>} : memref<80x64xf32, #tpu.memory_space<vmem>>, vector<10x16xf32>,
    %c70_89 = arith.constant 70 : index
    %c0_90 = arith.constant 0 : index
    %187 = vector.load %arg12[%c70_89, %c0_90] : memref<80x128xf32, #tpu.memory_space<vmem>>, vector<10x128xf32>
    %cst_91 = arith.constant dense<0.000000e+00> : vector<10x128xf32>
    %188 = tpu.matmul %180, %11, %cst_91 {dimension_numbers = #tpu.dot_dimension_numbers<[1], [0], [0], [1], [0, 0, 1, 1], [], []>} : vector<10x32xf32>, vector<32x128xf32>, vector<10x128xf32> -> vector<10x128xf32>
    %189 = arith.addf %187, %188 : vector<10x128xf32>
    %190 = vector.extract_strided_slice %189 {offsets = [0, 0], sizes = [10, 96], strides = [1, 1]} : vector<10x128xf32> to vector<10x96xf32>
    %191 = arith.negf %190 : vector<10x96xf32>
    %192 = math.exp %191 : vector<10x96xf32>
    %cst_92 = arith.constant 1.000000e+00 : f32
    %193 = vector.broadcast %cst_92 : f32 to vector<10x96xf32>
    %194 = arith.addf %193, %192 : vector<10x96xf32>
    %195 = arith.divf %193, %194 : vector<10x96xf32>
    %196 = vector.extract_strided_slice %195 {offsets = [0, 0], sizes = [10, 32], strides = [1, 1]} : vector<10x96xf32> to vector<10x32xf32>
    %197 = vector.extract_strided_slice %195 {offsets = [0, 32], sizes = [10, 32], strides = [1, 1]} : vector<10x96xf32> to vector<10x32xf32>
    %198 = vector.extract_strided_slice %195 {offsets = [0, 64], sizes = [10, 32], strides = [1, 1]} : vector<10x96xf32> to vector<10x32xf32>
    %199 = vector.extract_strided_slice %189 {offsets = [0, 96], sizes = [10, 32], strides = [1, 1]} : vector<10x128xf32> to vector<10x32xf32>
    %200 = math.tanh %199 : vector<10x32xf32>
    %201 = arith.mulf %197, %178 : vector<10x32xf32>
    %202 = arith.mulf %196, %200 : vector<10x32xf32>
    %203 = arith.addf %201, %202 : vector<10x32xf32>
    %204 = math.tanh %203 : vector<10x32xf32>
    %205 = arith.mulf %198, %204 : vector<10x32xf32>
    %206 = vector.extract_strided_slice %205 {offsets = [0, 0], sizes = [10, 16], strides = [1, 1]} : vector<10x32xf32> to vector<10x16xf32>
    %207 = vector.extract_strided_slice %205 {offsets = [0, 16], sizes = [10, 16], strides = [1, 1]} : vector<10x32xf32> to vector<10x16xf32>
    %c70_93 = arith.constant 70 : index
    %c0_94 = arith.constant 0 : index
    %208 = vector.load %arg14[%c70_93, %c0_94] : memref<80x64xf32, #tpu.memory_space<vmem>>, vector<10x16xf32>
    tpu.vector_store %arg14[%c70_93, %c0_94], %206 {strides = array<i32>} : memref<80x64xf32, #tpu.memory_space<vmem>>, vector<10x16xf32>,
    %c0_95 = arith.constant 0 : index
    %c32_96 = arith.constant 32 : index
    %209 = vector.load %arg14[%c0_95, %c32_96] : memref<80x64xf32, #tpu.memory_space<vmem>>, vector<10x16xf32>
    tpu.vector_store %arg14[%c0_95, %c32_96], %206 {strides = array<i32>} : memref<80x64xf32, #tpu.memory_space<vmem>>, vector<10x16xf32>,
    %c0_97 = arith.constant 0 : index
    %c16_98 = arith.constant 16 : index
    %210 = vector.load %arg14[%c0_97, %c16_98] : memref<80x64xf32, #tpu.memory_space<vmem>>, vector<10x16xf32>
    tpu.vector_store %arg14[%c0_97, %c16_98], %207 {strides = array<i32>} : memref<80x64xf32, #tpu.memory_space<vmem>>, vector<10x16xf32>,
    %c70_99 = arith.constant 70 : index
    %c48_100 = arith.constant 48 : index
    %211 = vector.load %arg14[%c70_99, %c48_100] : memref<80x64xf32, #tpu.memory_space<vmem>>, vector<10x16xf32>
    tpu.vector_store %arg14[%c70_99, %c48_100], %207 {strides = array<i32>} : memref<80x64xf32, #tpu.memory_space<vmem>>, vector<10x16xf32>,
    %c0_101 = arith.constant 0 : index
    %c0_102 = arith.constant 0 : index
    %212 = vector.load %arg14[%c0_101, %c0_102] : memref<80x64xf32, #tpu.memory_space<vmem>>, vector<80x64xf32>
    %c0_103 = arith.constant 0 : index
    %c0_104 = arith.constant 0 : index
    %213 = vector.load %arg4[%c0_103, %c0_104] : memref<64x128xf32, #tpu.memory_space<vmem>>, vector<64x128xf32>
    %cst_105 = arith.constant dense<0.000000e+00> : vector<80x128xf32>
    %214 = tpu.matmul %212, %213, %cst_105 {dimension_numbers = #tpu.dot_dimension_numbers<[1], [0], [0], [1], [0, 0, 1, 1], [], []>} : vector<80x64xf32>, vector<64x128xf32>, vector<80x128xf32> -> vector<80x128xf32>
    %c0_106 = arith.constant 0 : index
    %c0_107 = arith.constant 0 : index
    %215 = vector.load %arg6[%c0_106, %c0_107] : memref<1x128xf32, #tpu.memory_space<vmem>>, vector<1x128xf32>
    %216 = vector.broadcast %215 : vector<1x128xf32> to vector<80x128xf32>
    %217 = arith.addf %214, %216 : vector<80x128xf32>
    %c0_108 = arith.constant 0 : index
    %c0_109 = arith.constant 0 : index
    %218 = vector.load %arg13[%c0_108, %c0_109] : memref<80x128xf32, #tpu.memory_space<vmem>>, vector<80x128xf32>
    tpu.vector_store %arg13[%c0_108, %c0_109], %217 {strides = array<i32>} : memref<80x128xf32, #tpu.memory_space<vmem>>, vector<80x128xf32>,
    %c1 = arith.constant 1 : index
    %c0_110 = arith.constant 0 : index
    %c0_111 = arith.constant 0 : index
    %219 = vector.load %arg9[%c1, %c0_110, %c0_111] : memref<2x10x32xf32, #tpu.memory_space<vmem>>, vector<1x10x32xf32>
    %220 = vector.shape_cast %219 : vector<1x10x32xf32> to vector<10x32xf32>
    %c1_112 = arith.constant 1 : index
    %c0_113 = arith.constant 0 : index
    %c0_114 = arith.constant 0 : index
    %221 = vector.load %arg10[%c1_112, %c0_113, %c0_114] : memref<2x10x32xf32, #tpu.memory_space<vmem>>, vector<1x10x32xf32>
    %222 = vector.shape_cast %221 : vector<1x10x32xf32> to vector<10x32xf32>
    %c0_115 = arith.constant 0 : index
    %c0_116 = arith.constant 0 : index
    %223 = vector.load %arg5[%c0_115, %c0_116] : memref<32x128xf32, #tpu.memory_space<vmem>>, vector<32x128xf32>
    %c0_117 = arith.constant 0 : index
    %c0_118 = arith.constant 0 : index
    %224 = vector.load %arg13[%c0_117, %c0_118] : memref<80x128xf32, #tpu.memory_space<vmem>>, vector<10x128xf32>
    %cst_119 = arith.constant dense<0.000000e+00> : vector<10x128xf32>
    %225 = tpu.matmul %220, %223, %cst_119 {dimension_numbers = #tpu.dot_dimension_numbers<[1], [0], [0], [1], [0, 0, 1, 1], [], []>} : vector<10x32xf32>, vector<32x128xf32>, vector<10x128xf32> -> vector<10x128xf32>
    %226 = arith.addf %224, %225 : vector<10x128xf32>
    %227 = vector.extract_strided_slice %226 {offsets = [0, 0], sizes = [10, 96], strides = [1, 1]} : vector<10x128xf32> to vector<10x96xf32>
    %228 = arith.negf %227 : vector<10x96xf32>
    %229 = math.exp %228 : vector<10x96xf32>
    %cst_120 = arith.constant 1.000000e+00 : f32
    %230 = vector.broadcast %cst_120 : f32 to vector<10x96xf32>
    %231 = arith.addf %230, %229 : vector<10x96xf32>
    %232 = arith.divf %230, %231 : vector<10x96xf32>
    %233 = vector.extract_strided_slice %232 {offsets = [0, 0], sizes = [10, 32], strides = [1, 1]} : vector<10x96xf32> to vector<10x32xf32>
    %234 = vector.extract_strided_slice %232 {offsets = [0, 32], sizes = [10, 32], strides = [1, 1]} : vector<10x96xf32> to vector<10x32xf32>
    %235 = vector.extract_strided_slice %232 {offsets = [0, 64], sizes = [10, 32], strides = [1, 1]} : vector<10x96xf32> to vector<10x32xf32>
    %236 = vector.extract_strided_slice %226 {offsets = [0, 96], sizes = [10, 32], strides = [1, 1]} : vector<10x128xf32> to vector<10x32xf32>
    %237 = math.tanh %236 : vector<10x32xf32>
    %238 = arith.mulf %234, %222 : vector<10x32xf32>
    %239 = arith.mulf %233, %237 : vector<10x32xf32>
    %240 = arith.addf %238, %239 : vector<10x32xf32>
    %241 = math.tanh %240 : vector<10x32xf32>
    %242 = arith.mulf %235, %241 : vector<10x32xf32>
    %243 = vector.extract_strided_slice %242 {offsets = [0, 0], sizes = [10, 16], strides = [1, 1]} : vector<10x32xf32> to vector<10x16xf32>
    %c0_121 = arith.constant 0 : index
    %c0_122 = arith.constant 0 : index
    %244 = vector.load %arg15[%c0_121, %c0_122] : memref<80x32xf32, #tpu.memory_space<vmem>>, vector<10x16xf32>
    tpu.vector_store %arg15[%c0_121, %c0_122], %243 {strides = array<i32>} : memref<80x32xf32, #tpu.memory_space<vmem>>, vector<10x16xf32>,
    %245 = vector.extract_strided_slice %242 {offsets = [0, 16], sizes = [10, 16], strides = [1, 1]} : vector<10x32xf32> to vector<10x16xf32>
    %c70_123 = arith.constant 70 : index
    %c16_124 = arith.constant 16 : index
    %246 = vector.load %arg15[%c70_123, %c16_124] : memref<80x32xf32, #tpu.memory_space<vmem>>, vector<10x16xf32>
    tpu.vector_store %arg15[%c70_123, %c16_124], %245 {strides = array<i32>} : memref<80x32xf32, #tpu.memory_space<vmem>>, vector<10x16xf32>,
    %c10_125 = arith.constant 10 : index
    %c0_126 = arith.constant 0 : index
    %247 = vector.load %arg13[%c10_125, %c0_126] : memref<80x128xf32, #tpu.memory_space<vmem>>, vector<10x128xf32>
    %cst_127 = arith.constant dense<0.000000e+00> : vector<10x128xf32>
    %248 = tpu.matmul %242, %223, %cst_127 {dimension_numbers = #tpu.dot_dimension_numbers<[1], [0], [0], [1], [0, 0, 1, 1], [], []>} : vector<10x32xf32>, vector<32x128xf32>, vector<10x128xf32> -> vector<10x128xf32>
    %249 = arith.addf %247, %248 : vector<10x128xf32>
    %250 = vector.extract_strided_slice %249 {offsets = [0, 0], sizes = [10, 96], strides = [1, 1]} : vector<10x128xf32> to vector<10x96xf32>
    %251 = arith.negf %250 : vector<10x96xf32>
    %252 = math.exp %251 : vector<10x96xf32>
    %cst_128 = arith.constant 1.000000e+00 : f32
    %253 = vector.broadcast %cst_128 : f32 to vector<10x96xf32>
    %254 = arith.addf %253, %252 : vector<10x96xf32>
    %255 = arith.divf %253, %254 : vector<10x96xf32>
    %256 = vector.extract_strided_slice %255 {offsets = [0, 0], sizes = [10, 32], strides = [1, 1]} : vector<10x96xf32> to vector<10x32xf32>
    %257 = vector.extract_strided_slice %255 {offsets = [0, 32], sizes = [10, 32], strides = [1, 1]} : vector<10x96xf32> to vector<10x32xf32>
    %258 = vector.extract_strided_slice %255 {offsets = [0, 64], sizes = [10, 32], strides = [1, 1]} : vector<10x96xf32> to vector<10x32xf32>
    %259 = vector.extract_strided_slice %249 {offsets = [0, 96], sizes = [10, 32], strides = [1, 1]} : vector<10x128xf32> to vector<10x32xf32>
    %260 = math.tanh %259 : vector<10x32xf32>
    %261 = arith.mulf %257, %240 : vector<10x32xf32>
    %262 = arith.mulf %256, %260 : vector<10x32xf32>
    %263 = arith.addf %261, %262 : vector<10x32xf32>
    %264 = math.tanh %263 : vector<10x32xf32>
    %265 = arith.mulf %258, %264 : vector<10x32xf32>
    %266 = vector.extract_strided_slice %265 {offsets = [0, 0], sizes = [10, 16], strides = [1, 1]} : vector<10x32xf32> to vector<10x16xf32>
    %c10_129 = arith.constant 10 : index
    %c0_130 = arith.constant 0 : index
    %267 = vector.load %arg15[%c10_129, %c0_130] : memref<80x32xf32, #tpu.memory_space<vmem>>, vector<10x16xf32>
    tpu.vector_store %arg15[%c10_129, %c0_130], %266 {strides = array<i32>} : memref<80x32xf32, #tpu.memory_space<vmem>>, vector<10x16xf32>,
    %268 = vector.extract_strided_slice %265 {offsets = [0, 16], sizes = [10, 16], strides = [1, 1]} : vector<10x32xf32> to vector<10x16xf32>
    %c60_131 = arith.constant 60 : index
    %c16_132 = arith.constant 16 : index
    %269 = vector.load %arg15[%c60_131, %c16_132] : memref<80x32xf32, #tpu.memory_space<vmem>>, vector<10x16xf32>
    tpu.vector_store %arg15[%c60_131, %c16_132], %268 {strides = array<i32>} : memref<80x32xf32, #tpu.memory_space<vmem>>, vector<10x16xf32>,
    %c20_133 = arith.constant 20 : index
    %c0_134 = arith.constant 0 : index
    %270 = vector.load %arg13[%c20_133, %c0_134] : memref<80x128xf32, #tpu.memory_space<vmem>>, vector<10x128xf32>
    %cst_135 = arith.constant dense<0.000000e+00> : vector<10x128xf32>
    %271 = tpu.matmul %265, %223, %cst_135 {dimension_numbers = #tpu.dot_dimension_numbers<[1], [0], [0], [1], [0, 0, 1, 1], [], []>} : vector<10x32xf32>, vector<32x128xf32>, vector<10x128xf32> -> vector<10x128xf32>
    %272 = arith.addf %270, %271 : vector<10x128xf32>
    %273 = vector.extract_strided_slice %272 {offsets = [0, 0], sizes = [10, 96], strides = [1, 1]} : vector<10x128xf32> to vector<10x96xf32>
    %274 = arith.negf %273 : vector<10x96xf32>
    %275 = math.exp %274 : vector<10x96xf32>
    %cst_136 = arith.constant 1.000000e+00 : f32
    %276 = vector.broadcast %cst_136 : f32 to vector<10x96xf32>
    %277 = arith.addf %276, %275 : vector<10x96xf32>
    %278 = arith.divf %276, %277 : vector<10x96xf32>
    %279 = vector.extract_strided_slice %278 {offsets = [0, 0], sizes = [10, 32], strides = [1, 1]} : vector<10x96xf32> to vector<10x32xf32>
    %280 = vector.extract_strided_slice %278 {offsets = [0, 32], sizes = [10, 32], strides = [1, 1]} : vector<10x96xf32> to vector<10x32xf32>
    %281 = vector.extract_strided_slice %278 {offsets = [0, 64], sizes = [10, 32], strides = [1, 1]} : vector<10x96xf32> to vector<10x32xf32>
    %282 = vector.extract_strided_slice %272 {offsets = [0, 96], sizes = [10, 32], strides = [1, 1]} : vector<10x128xf32> to vector<10x32xf32>
    %283 = math.tanh %282 : vector<10x32xf32>
    %284 = arith.mulf %280, %263 : vector<10x32xf32>
    %285 = arith.mulf %279, %283 : vector<10x32xf32>
    %286 = arith.addf %284, %285 : vector<10x32xf32>
    %287 = math.tanh %286 : vector<10x32xf32>
    %288 = arith.mulf %281, %287 : vector<10x32xf32>
    %289 = vector.extract_strided_slice %288 {offsets = [0, 0], sizes = [10, 16], strides = [1, 1]} : vector<10x32xf32> to vector<10x16xf32>
    %c20_137 = arith.constant 20 : index
    %c0_138 = arith.constant 0 : index
    %290 = vector.load %arg15[%c20_137, %c0_138] : memref<80x32xf32, #tpu.memory_space<vmem>>, vector<10x16xf32>
    tpu.vector_store %arg15[%c20_137, %c0_138], %289 {strides = array<i32>} : memref<80x32xf32, #tpu.memory_space<vmem>>, vector<10x16xf32>,
    %291 = vector.extract_strided_slice %288 {offsets = [0, 16], sizes = [10, 16], strides = [1, 1]} : vector<10x32xf32> to vector<10x16xf32>
    %c50_139 = arith.constant 50 : index
    %c16_140 = arith.constant 16 : index
    %292 = vector.load %arg15[%c50_139, %c16_140] : memref<80x32xf32, #tpu.memory_space<vmem>>, vector<10x16xf32>
    tpu.vector_store %arg15[%c50_139, %c16_140], %291 {strides = array<i32>} : memref<80x32xf32, #tpu.memory_space<vmem>>, vector<10x16xf32>,
    %c30_141 = arith.constant 30 : index
    %c0_142 = arith.constant 0 : index
    %293 = vector.load %arg13[%c30_141, %c0_142] : memref<80x128xf32, #tpu.memory_space<vmem>>, vector<10x128xf32>
    %cst_143 = arith.constant dense<0.000000e+00> : vector<10x128xf32>
    %294 = tpu.matmul %288, %223, %cst_143 {dimension_numbers = #tpu.dot_dimension_numbers<[1], [0], [0], [1], [0, 0, 1, 1], [], []>} : vector<10x32xf32>, vector<32x128xf32>, vector<10x128xf32> -> vector<10x128xf32>
    %295 = arith.addf %293, %294 : vector<10x128xf32>
    %296 = vector.extract_strided_slice %295 {offsets = [0, 0], sizes = [10, 96], strides = [1, 1]} : vector<10x128xf32> to vector<10x96xf32>
    %297 = arith.negf %296 : vector<10x96xf32>
    %298 = math.exp %297 : vector<10x96xf32>
    %cst_144 = arith.constant 1.000000e+00 : f32
    %299 = vector.broadcast %cst_144 : f32 to vector<10x96xf32>
    %300 = arith.addf %299, %298 : vector<10x96xf32>
    %301 = arith.divf %299, %300 : vector<10x96xf32>
    %302 = vector.extract_strided_slice %301 {offsets = [0, 0], sizes = [10, 32], strides = [1, 1]} : vector<10x96xf32> to vector<10x32xf32>
    %303 = vector.extract_strided_slice %301 {offsets = [0, 32], sizes = [10, 32], strides = [1, 1]} : vector<10x96xf32> to vector<10x32xf32>
    %304 = vector.extract_strided_slice %301 {offsets = [0, 64], sizes = [10, 32], strides = [1, 1]} : vector<10x96xf32> to vector<10x32xf32>
    %305 = vector.extract_strided_slice %295 {offsets = [0, 96], sizes = [10, 32], strides = [1, 1]} : vector<10x128xf32> to vector<10x32xf32>
    %306 = math.tanh %305 : vector<10x32xf32>
    %307 = arith.mulf %303, %286 : vector<10x32xf32>
    %308 = arith.mulf %302, %306 : vector<10x32xf32>
    %309 = arith.addf %307, %308 : vector<10x32xf32>
    %310 = math.tanh %309 : vector<10x32xf32>
    %311 = arith.mulf %304, %310 : vector<10x32xf32>
    %312 = vector.extract_strided_slice %311 {offsets = [0, 0], sizes = [10, 16], strides = [1, 1]} : vector<10x32xf32> to vector<10x16xf32>
    %c30_145 = arith.constant 30 : index
    %c0_146 = arith.constant 0 : index
    %313 = vector.load %arg15[%c30_145, %c0_146] : memref<80x32xf32, #tpu.memory_space<vmem>>, vector<10x16xf32>
    tpu.vector_store %arg15[%c30_145, %c0_146], %312 {strides = array<i32>} : memref<80x32xf32, #tpu.memory_space<vmem>>, vector<10x16xf32>,
    %314 = vector.extract_strided_slice %311 {offsets = [0, 16], sizes = [10, 16], strides = [1, 1]} : vector<10x32xf32> to vector<10x16xf32>
    %c40_147 = arith.constant 40 : index
    %c16_148 = arith.constant 16 : index
    %315 = vector.load %arg15[%c40_147, %c16_148] : memref<80x32xf32, #tpu.memory_space<vmem>>, vector<10x16xf32>
    tpu.vector_store %arg15[%c40_147, %c16_148], %314 {strides = array<i32>} : memref<80x32xf32, #tpu.memory_space<vmem>>, vector<10x16xf32>,
    %c40_149 = arith.constant 40 : index
    %c0_150 = arith.constant 0 : index
    %316 = vector.load %arg13[%c40_149, %c0_150] : memref<80x128xf32, #tpu.memory_space<vmem>>, vector<10x128xf32>
    %cst_151 = arith.constant dense<0.000000e+00> : vector<10x128xf32>
    %317 = tpu.matmul %311, %223, %cst_151 {dimension_numbers = #tpu.dot_dimension_numbers<[1], [0], [0], [1], [0, 0, 1, 1], [], []>} : vector<10x32xf32>, vector<32x128xf32>, vector<10x128xf32> -> vector<10x128xf32>
    %318 = arith.addf %316, %317 : vector<10x128xf32>
    %319 = vector.extract_strided_slice %318 {offsets = [0, 0], sizes = [10, 96], strides = [1, 1]} : vector<10x128xf32> to vector<10x96xf32>
    %320 = arith.negf %319 : vector<10x96xf32>
    %321 = math.exp %320 : vector<10x96xf32>
    %cst_152 = arith.constant 1.000000e+00 : f32
    %322 = vector.broadcast %cst_152 : f32 to vector<10x96xf32>
    %323 = arith.addf %322, %321 : vector<10x96xf32>
    %324 = arith.divf %322, %323 : vector<10x96xf32>
    %325 = vector.extract_strided_slice %324 {offsets = [0, 0], sizes = [10, 32], strides = [1, 1]} : vector<10x96xf32> to vector<10x32xf32>
    %326 = vector.extract_strided_slice %324 {offsets = [0, 32], sizes = [10, 32], strides = [1, 1]} : vector<10x96xf32> to vector<10x32xf32>
    %327 = vector.extract_strided_slice %324 {offsets = [0, 64], sizes = [10, 32], strides = [1, 1]} : vector<10x96xf32> to vector<10x32xf32>
    %328 = vector.extract_strided_slice %318 {offsets = [0, 96], sizes = [10, 32], strides = [1, 1]} : vector<10x128xf32> to vector<10x32xf32>
    %329 = math.tanh %328 : vector<10x32xf32>
    %330 = arith.mulf %326, %309 : vector<10x32xf32>
    %331 = arith.mulf %325, %329 : vector<10x32xf32>
    %332 = arith.addf %330, %331 : vector<10x32xf32>
    %333 = math.tanh %332 : vector<10x32xf32>
    %334 = arith.mulf %327, %333 : vector<10x32xf32>
    %335 = vector.extract_strided_slice %334 {offsets = [0, 0], sizes = [10, 16], strides = [1, 1]} : vector<10x32xf32> to vector<10x16xf32>
    %c40_153 = arith.constant 40 : index
    %c0_154 = arith.constant 0 : index
    %336 = vector.load %arg15[%c40_153, %c0_154] : memref<80x32xf32, #tpu.memory_space<vmem>>, vector<10x16xf32>
    tpu.vector_store %arg15[%c40_153, %c0_154], %335 {strides = array<i32>} : memref<80x32xf32, #tpu.memory_space<vmem>>, vector<10x16xf32>,
    %337 = vector.extract_strided_slice %334 {offsets = [0, 16], sizes = [10, 16], strides = [1, 1]} : vector<10x32xf32> to vector<10x16xf32>
    %c30_155 = arith.constant 30 : index
    %c16_156 = arith.constant 16 : index
    %338 = vector.load %arg15[%c30_155, %c16_156] : memref<80x32xf32, #tpu.memory_space<vmem>>, vector<10x16xf32>
    tpu.vector_store %arg15[%c30_155, %c16_156], %337 {strides = array<i32>} : memref<80x32xf32, #tpu.memory_space<vmem>>, vector<10x16xf32>,
    %c50_157 = arith.constant 50 : index
    %c0_158 = arith.constant 0 : index
    %339 = vector.load %arg13[%c50_157, %c0_158] : memref<80x128xf32, #tpu.memory_space<vmem>>, vector<10x128xf32>
    %cst_159 = arith.constant dense<0.000000e+00> : vector<10x128xf32>
    %340 = tpu.matmul %334, %223, %cst_159 {dimension_numbers = #tpu.dot_dimension_numbers<[1], [0], [0], [1], [0, 0, 1, 1], [], []>} : vector<10x32xf32>, vector<32x128xf32>, vector<10x128xf32> -> vector<10x128xf32>
    %341 = arith.addf %339, %340 : vector<10x128xf32>
    %342 = vector.extract_strided_slice %341 {offsets = [0, 0], sizes = [10, 96], strides = [1, 1]} : vector<10x128xf32> to vector<10x96xf32>
    %343 = arith.negf %342 : vector<10x96xf32>
    %344 = math.exp %343 : vector<10x96xf32>
    %cst_160 = arith.constant 1.000000e+00 : f32
    %345 = vector.broadcast %cst_160 : f32 to vector<10x96xf32>
    %346 = arith.addf %345, %344 : vector<10x96xf32>
    %347 = arith.divf %345, %346 : vector<10x96xf32>
    %348 = vector.extract_strided_slice %347 {offsets = [0, 0], sizes = [10, 32], strides = [1, 1]} : vector<10x96xf32> to vector<10x32xf32>
    %349 = vector.extract_strided_slice %347 {offsets = [0, 32], sizes = [10, 32], strides = [1, 1]} : vector<10x96xf32> to vector<10x32xf32>
    %350 = vector.extract_strided_slice %347 {offsets = [0, 64], sizes = [10, 32], strides = [1, 1]} : vector<10x96xf32> to vector<10x32xf32>
    %351 = vector.extract_strided_slice %341 {offsets = [0, 96], sizes = [10, 32], strides = [1, 1]} : vector<10x128xf32> to vector<10x32xf32>
    %352 = math.tanh %351 : vector<10x32xf32>
    %353 = arith.mulf %349, %332 : vector<10x32xf32>
    %354 = arith.mulf %348, %352 : vector<10x32xf32>
    %355 = arith.addf %353, %354 : vector<10x32xf32>
    %356 = math.tanh %355 : vector<10x32xf32>
    %357 = arith.mulf %350, %356 : vector<10x32xf32>
    %358 = vector.extract_strided_slice %357 {offsets = [0, 0], sizes = [10, 16], strides = [1, 1]} : vector<10x32xf32> to vector<10x16xf32>
    %c50_161 = arith.constant 50 : index
    %c0_162 = arith.constant 0 : index
    %359 = vector.load %arg15[%c50_161, %c0_162] : memref<80x32xf32, #tpu.memory_space<vmem>>, vector<10x16xf32>
    tpu.vector_store %arg15[%c50_161, %c0_162], %358 {strides = array<i32>} : memref<80x32xf32, #tpu.memory_space<vmem>>, vector<10x16xf32>,
    %360 = vector.extract_strided_slice %357 {offsets = [0, 16], sizes = [10, 16], strides = [1, 1]} : vector<10x32xf32> to vector<10x16xf32>
    %c20_163 = arith.constant 20 : index
    %c16_164 = arith.constant 16 : index
    %361 = vector.load %arg15[%c20_163, %c16_164] : memref<80x32xf32, #tpu.memory_space<vmem>>, vector<10x16xf32>
    tpu.vector_store %arg15[%c20_163, %c16_164], %360 {strides = array<i32>} : memref<80x32xf32, #tpu.memory_space<vmem>>, vector<10x16xf32>,
    %c60_165 = arith.constant 60 : index
    %c0_166 = arith.constant 0 : index
    %362 = vector.load %arg13[%c60_165, %c0_166] : memref<80x128xf32, #tpu.memory_space<vmem>>, vector<10x128xf32>
    %cst_167 = arith.constant dense<0.000000e+00> : vector<10x128xf32>
    %363 = tpu.matmul %357, %223, %cst_167 {dimension_numbers = #tpu.dot_dimension_numbers<[1], [0], [0], [1], [0, 0, 1, 1], [], []>} : vector<10x32xf32>, vector<32x128xf32>, vector<10x128xf32> -> vector<10x128xf32>
    %364 = arith.addf %362, %363 : vector<10x128xf32>
    %365 = vector.extract_strided_slice %364 {offsets = [0, 0], sizes = [10, 96], strides = [1, 1]} : vector<10x128xf32> to vector<10x96xf32>
    %366 = arith.negf %365 : vector<10x96xf32>
    %367 = math.exp %366 : vector<10x96xf32>
    %cst_168 = arith.constant 1.000000e+00 : f32
    %368 = vector.broadcast %cst_168 : f32 to vector<10x96xf32>
    %369 = arith.addf %368, %367 : vector<10x96xf32>
    %370 = arith.divf %368, %369 : vector<10x96xf32>
    %371 = vector.extract_strided_slice %370 {offsets = [0, 0], sizes = [10, 32], strides = [1, 1]} : vector<10x96xf32> to vector<10x32xf32>
    %372 = vector.extract_strided_slice %370 {offsets = [0, 32], sizes = [10, 32], strides = [1, 1]} : vector<10x96xf32> to vector<10x32xf32>
    %373 = vector.extract_strided_slice %370 {offsets = [0, 64], sizes = [10, 32], strides = [1, 1]} : vector<10x96xf32> to vector<10x32xf32>
    %374 = vector.extract_strided_slice %364 {offsets = [0, 96], sizes = [10, 32], strides = [1, 1]} : vector<10x128xf32> to vector<10x32xf32>
    %375 = math.tanh %374 : vector<10x32xf32>
    %376 = arith.mulf %372, %355 : vector<10x32xf32>
    %377 = arith.mulf %371, %375 : vector<10x32xf32>
    %378 = arith.addf %376, %377 : vector<10x32xf32>
    %379 = math.tanh %378 : vector<10x32xf32>
    %380 = arith.mulf %373, %379 : vector<10x32xf32>
    %381 = vector.extract_strided_slice %380 {offsets = [0, 0], sizes = [10, 16], strides = [1, 1]} : vector<10x32xf32> to vector<10x16xf32>
    %c60_169 = arith.constant 60 : index
    %c0_170 = arith.constant 0 : index
    %382 = vector.load %arg15[%c60_169, %c0_170] : memref<80x32xf32, #tpu.memory_space<vmem>>, vector<10x16xf32>
    tpu.vector_store %arg15[%c60_169, %c0_170], %381 {strides = array<i32>} : memref<80x32xf32, #tpu.memory_space<vmem>>, vector<10x16xf32>,
    %383 = vector.extract_strided_slice %380 {offsets = [0, 16], sizes = [10, 16], strides = [1, 1]} : vector<10x32xf32> to vector<10x16xf32>
    %c10_171 = arith.constant 10 : index
    %c16_172 = arith.constant 16 : index
    %384 = vector.load %arg15[%c10_171, %c16_172] : memref<80x32xf32, #tpu.memory_space<vmem>>, vector<10x16xf32>
    tpu.vector_store %arg15[%c10_171, %c16_172], %383 {strides = array<i32>} : memref<80x32xf32, #tpu.memory_space<vmem>>, vector<10x16xf32>,
    %c70_173 = arith.constant 70 : index
    %c0_174 = arith.constant 0 : index
    %385 = vector.load %arg13[%c70_173, %c0_174] : memref<80x128xf32, #tpu.memory_space<vmem>>, vector<10x128xf32>
    %cst_175 = arith.constant dense<0.000000e+00> : vector<10x128xf32>
    %386 = tpu.matmul %380, %223, %cst_175 {dimension_numbers = #tpu.dot_dimension_numbers<[1], [0], [0], [1], [0, 0, 1, 1], [], []>} : vector<10x32xf32>, vector<32x128xf32>, vector<10x128xf32> -> vector<10x128xf32>
    %387 = arith.addf %385, %386 : vector<10x128xf32>
    %388 = vector.extract_strided_slice %387 {offsets = [0, 0], sizes = [10, 96], strides = [1, 1]} : vector<10x128xf32> to vector<10x96xf32>
    %389 = arith.negf %388 : vector<10x96xf32>
    %390 = math.exp %389 : vector<10x96xf32>
    %cst_176 = arith.constant 1.000000e+00 : f32
    %391 = vector.broadcast %cst_176 : f32 to vector<10x96xf32>
    %392 = arith.addf %391, %390 : vector<10x96xf32>
    %393 = arith.divf %391, %392 : vector<10x96xf32>
    %394 = vector.extract_strided_slice %393 {offsets = [0, 0], sizes = [10, 32], strides = [1, 1]} : vector<10x96xf32> to vector<10x32xf32>
    %395 = vector.extract_strided_slice %393 {offsets = [0, 32], sizes = [10, 32], strides = [1, 1]} : vector<10x96xf32> to vector<10x32xf32>
    %396 = vector.extract_strided_slice %393 {offsets = [0, 64], sizes = [10, 32], strides = [1, 1]} : vector<10x96xf32> to vector<10x32xf32>
    %397 = vector.extract_strided_slice %387 {offsets = [0, 96], sizes = [10, 32], strides = [1, 1]} : vector<10x128xf32> to vector<10x32xf32>
    %398 = math.tanh %397 : vector<10x32xf32>
    %399 = arith.mulf %395, %378 : vector<10x32xf32>
    %400 = arith.mulf %394, %398 : vector<10x32xf32>
    %401 = arith.addf %399, %400 : vector<10x32xf32>
    %402 = math.tanh %401 : vector<10x32xf32>
    %403 = arith.mulf %396, %402 : vector<10x32xf32>
    %404 = vector.extract_strided_slice %403 {offsets = [0, 0], sizes = [10, 16], strides = [1, 1]} : vector<10x32xf32> to vector<10x16xf32>
    %c70_177 = arith.constant 70 : index
    %c0_178 = arith.constant 0 : index
    %405 = vector.load %arg15[%c70_177, %c0_178] : memref<80x32xf32, #tpu.memory_space<vmem>>, vector<10x16xf32>
    tpu.vector_store %arg15[%c70_177, %c0_178], %404 {strides = array<i32>} : memref<80x32xf32, #tpu.memory_space<vmem>>, vector<10x16xf32>,
    %406 = vector.extract_strided_slice %403 {offsets = [0, 16], sizes = [10, 16], strides = [1, 1]} : vector<10x32xf32> to vector<10x16xf32>
    %c0_179 = arith.constant 0 : index
    %c16_180 = arith.constant 16 : index
    %407 = vector.load %arg15[%c0_179, %c16_180] : memref<80x32xf32, #tpu.memory_space<vmem>>, vector<10x16xf32>
    tpu.vector_store %arg15[%c0_179, %c16_180], %406 {strides = array<i32>} : memref<80x32xf32, #tpu.memory_space<vmem>>, vector<10x16xf32>,
    %c0_181 = arith.constant 0 : index
    %c0_182 = arith.constant 0 : index
    %408 = vector.load %arg8[%c0_181, %c0_182] : memref<1x10xf32, #tpu.memory_space<vmem>>, vector<1x10xf32>
    %409 = vector.shape_cast %408 : vector<1x10xf32> to vector<1x10xf32>
    %410 = vector.broadcast %409 : vector<1x10xf32> to vector<8x10xf32>
    %c0_183 = arith.constant 0 : index
    %c0_184 = arith.constant 0 : index
    %411 = tpu.strided_load %arg15[%c0_183, %c0_184] {strides = array<i32: 10, 1>} : memref<80x32xf32, #tpu.memory_space<vmem>>, vector<8x32xf32>
    %c0_185 = arith.constant 0 : index
    %c0_186 = arith.constant 0 : index
    %412 = vector.load %arg7[%c0_185, %c0_186] : memref<320x10xf32, #tpu.memory_space<vmem>>, vector<32x10xf32>
    %cst_187 = arith.constant dense<0.000000e+00> : vector<8x10xf32>
    %413 = tpu.matmul %411, %412, %cst_187 {dimension_numbers = #tpu.dot_dimension_numbers<[1], [0], [0], [1], [0, 0, 1, 1], [], []>} : vector<8x32xf32>, vector<32x10xf32>, vector<8x10xf32> -> vector<8x10xf32>
    %414 = arith.addf %410, %413 : vector<8x10xf32>
    %c1_188 = arith.constant 1 : index
    %c0_189 = arith.constant 0 : index
    %415 = tpu.strided_load %arg15[%c1_188, %c0_189] {strides = array<i32: 10, 1>} : memref<80x32xf32, #tpu.memory_space<vmem>>, vector<8x32xf32>
    %c32_190 = arith.constant 32 : index
    %c0_191 = arith.constant 0 : index
    %416 = vector.load %arg7[%c32_190, %c0_191] : memref<320x10xf32, #tpu.memory_space<vmem>>, vector<32x10xf32>
    %cst_192 = arith.constant dense<0.000000e+00> : vector<8x10xf32>
    %417 = tpu.matmul %415, %416, %cst_192 {dimension_numbers = #tpu.dot_dimension_numbers<[1], [0], [0], [1], [0, 0, 1, 1], [], []>} : vector<8x32xf32>, vector<32x10xf32>, vector<8x10xf32> -> vector<8x10xf32>
    %418 = arith.addf %414, %417 : vector<8x10xf32>
    %c2 = arith.constant 2 : index
    %c0_193 = arith.constant 0 : index
    %419 = tpu.strided_load %arg15[%c2, %c0_193] {strides = array<i32: 10, 1>} : memref<80x32xf32, #tpu.memory_space<vmem>>, vector<8x32xf32>
    %c64 = arith.constant 64 : index
    %c0_194 = arith.constant 0 : index
    %420 = vector.load %arg7[%c64, %c0_194] : memref<320x10xf32, #tpu.memory_space<vmem>>, vector<32x10xf32>
    %cst_195 = arith.constant dense<0.000000e+00> : vector<8x10xf32>
    %421 = tpu.matmul %419, %420, %cst_195 {dimension_numbers = #tpu.dot_dimension_numbers<[1], [0], [0], [1], [0, 0, 1, 1], [], []>} : vector<8x32xf32>, vector<32x10xf32>, vector<8x10xf32> -> vector<8x10xf32>
    %422 = arith.addf %418, %421 : vector<8x10xf32>
    %c3 = arith.constant 3 : index
    %c0_196 = arith.constant 0 : index
    %423 = tpu.strided_load %arg15[%c3, %c0_196] {strides = array<i32: 10, 1>} : memref<80x32xf32, #tpu.memory_space<vmem>>, vector<8x32xf32>
    %c96 = arith.constant 96 : index
    %c0_197 = arith.constant 0 : index
    %424 = vector.load %arg7[%c96, %c0_197] : memref<320x10xf32, #tpu.memory_space<vmem>>, vector<32x10xf32>
    %cst_198 = arith.constant dense<0.000000e+00> : vector<8x10xf32>
    %425 = tpu.matmul %423, %424, %cst_198 {dimension_numbers = #tpu.dot_dimension_numbers<[1], [0], [0], [1], [0, 0, 1, 1], [], []>} : vector<8x32xf32>, vector<32x10xf32>, vector<8x10xf32> -> vector<8x10xf32>
    %426 = arith.addf %422, %425 : vector<8x10xf32>
    %c4 = arith.constant 4 : index
    %c0_199 = arith.constant 0 : index
    %427 = tpu.strided_load %arg15[%c4, %c0_199] {strides = array<i32: 10, 1>} : memref<80x32xf32, #tpu.memory_space<vmem>>, vector<8x32xf32>
    %c128 = arith.constant 128 : index
    %c0_200 = arith.constant 0 : index
    %428 = vector.load %arg7[%c128, %c0_200] : memref<320x10xf32, #tpu.memory_space<vmem>>, vector<32x10xf32>
    %cst_201 = arith.constant dense<0.000000e+00> : vector<8x10xf32>
    %429 = tpu.matmul %427, %428, %cst_201 {dimension_numbers = #tpu.dot_dimension_numbers<[1], [0], [0], [1], [0, 0, 1, 1], [], []>} : vector<8x32xf32>, vector<32x10xf32>, vector<8x10xf32> -> vector<8x10xf32>
    %430 = arith.addf %426, %429 : vector<8x10xf32>
    %c5 = arith.constant 5 : index
    %c0_202 = arith.constant 0 : index
    %431 = tpu.strided_load %arg15[%c5, %c0_202] {strides = array<i32: 10, 1>} : memref<80x32xf32, #tpu.memory_space<vmem>>, vector<8x32xf32>
    %c160 = arith.constant 160 : index
    %c0_203 = arith.constant 0 : index
    %432 = vector.load %arg7[%c160, %c0_203] : memref<320x10xf32, #tpu.memory_space<vmem>>, vector<32x10xf32>
    %cst_204 = arith.constant dense<0.000000e+00> : vector<8x10xf32>
    %433 = tpu.matmul %431, %432, %cst_204 {dimension_numbers = #tpu.dot_dimension_numbers<[1], [0], [0], [1], [0, 0, 1, 1], [], []>} : vector<8x32xf32>, vector<32x10xf32>, vector<8x10xf32> -> vector<8x10xf32>
    %434 = arith.addf %430, %433 : vector<8x10xf32>
    %c6 = arith.constant 6 : index
    %c0_205 = arith.constant 0 : index
    %435 = tpu.strided_load %arg15[%c6, %c0_205] {strides = array<i32: 10, 1>} : memref<80x32xf32, #tpu.memory_space<vmem>>, vector<8x32xf32>
    %c192 = arith.constant 192 : index
    %c0_206 = arith.constant 0 : index
    %436 = vector.load %arg7[%c192, %c0_206] : memref<320x10xf32, #tpu.memory_space<vmem>>, vector<32x10xf32>
    %cst_207 = arith.constant dense<0.000000e+00> : vector<8x10xf32>
    %437 = tpu.matmul %435, %436, %cst_207 {dimension_numbers = #tpu.dot_dimension_numbers<[1], [0], [0], [1], [0, 0, 1, 1], [], []>} : vector<8x32xf32>, vector<32x10xf32>, vector<8x10xf32> -> vector<8x10xf32>
    %438 = arith.addf %434, %437 : vector<8x10xf32>
    %c7 = arith.constant 7 : index
    %c0_208 = arith.constant 0 : index
    %439 = tpu.strided_load %arg15[%c7, %c0_208] {strides = array<i32: 10, 1>} : memref<80x32xf32, #tpu.memory_space<vmem>>, vector<8x32xf32>
    %c224 = arith.constant 224 : index
    %c0_209 = arith.constant 0 : index
    %440 = vector.load %arg7[%c224, %c0_209] : memref<320x10xf32, #tpu.memory_space<vmem>>, vector<32x10xf32>
    %cst_210 = arith.constant dense<0.000000e+00> : vector<8x10xf32>
    %441 = tpu.matmul %439, %440, %cst_210 {dimension_numbers = #tpu.dot_dimension_numbers<[1], [0], [0], [1], [0, 0, 1, 1], [], []>} : vector<8x32xf32>, vector<32x10xf32>, vector<8x10xf32> -> vector<8x10xf32>
    %442 = arith.addf %438, %441 : vector<8x10xf32>
    %c8 = arith.constant 8 : index
    %c0_211 = arith.constant 0 : index
    %443 = tpu.strided_load %arg15[%c8, %c0_211] {strides = array<i32: 10, 1>} : memref<80x32xf32, #tpu.memory_space<vmem>>, vector<8x32xf32>
    %c256 = arith.constant 256 : index
    %c0_212 = arith.constant 0 : index
    %444 = vector.load %arg7[%c256, %c0_212] : memref<320x10xf32, #tpu.memory_space<vmem>>, vector<32x10xf32>
    %cst_213 = arith.constant dense<0.000000e+00> : vector<8x10xf32>
    %445 = tpu.matmul %443, %444, %cst_213 {dimension_numbers = #tpu.dot_dimension_numbers<[1], [0], [0], [1], [0, 0, 1, 1], [], []>} : vector<8x32xf32>, vector<32x10xf32>, vector<8x10xf32> -> vector<8x10xf32>
    %446 = arith.addf %442, %445 : vector<8x10xf32>
    %c9 = arith.constant 9 : index
    %c0_214 = arith.constant 0 : index
    %447 = tpu.strided_load %arg15[%c9, %c0_214] {strides = array<i32: 10, 1>} : memref<80x32xf32, #tpu.memory_space<vmem>>, vector<8x32xf32>
    %c288 = arith.constant 288 : index
    %c0_215 = arith.constant 0 : index
    %448 = vector.load %arg7[%c288, %c0_215] : memref<320x10xf32, #tpu.memory_space<vmem>>, vector<32x10xf32>
    %cst_216 = arith.constant dense<0.000000e+00> : vector<8x10xf32>
    %449 = tpu.matmul %447, %448, %cst_216 {dimension_numbers = #tpu.dot_dimension_numbers<[1], [0], [0], [1], [0, 0, 1, 1], [], []>} : vector<8x32xf32>, vector<32x10xf32>, vector<8x10xf32> -> vector<8x10xf32>
    %450 = arith.addf %446, %449 : vector<8x10xf32>
    %c0_217 = arith.constant 0 : index
    %c0_218 = arith.constant 0 : index
    %451 = vector.load %arg11[%c0_217, %c0_218] : memref<8x10xf32, #tpu.memory_space<vmem>>, vector<8x10xf32>
    tpu.vector_store %arg11[%c0_217, %c0_218], %450 {strides = array<i32>} : memref<8x10xf32, #tpu.memory_space<vmem>>, vector<8x10xf32>,
    return
  }
}

</mosaic_0001>

<llo_original>
// kernel: forward.1
$region0: #{forward.1}
  #allocation0 [shape = 'u32[]', space=smem, size = 0x4, offset = 0x4, fixed_abs, tag = 'smem constant byte address 0x4 - core index']
  #allocation1 [shape = 'u32[144,128]{1,0:T(1,128)}', space=vmem, size = 0x12000, scoped, tag = 'internal scratch']
  #allocation2 [shape = 'f32[80,128]{1,0:T(8,128)}', space=vmem, size = 0xa000, scoped, tag = 'scratch operand']
  #allocation3 [shape = 'f32[80,128]{1,0:T(8,128)}', space=vmem, size = 0xa000, scoped, tag = 'scratch operand']
  #allocation4 [shape = 'f32[80,64]{1,0:T(8,128)}', space=vmem, size = 0xa000, scoped, tag = 'scratch operand']
  #allocation5 [shape = 'f32[80,32]{1,0:T(8,128)}', space=vmem, size = 0xa000, scoped, tag = 'scratch operand']
  %s0 = inlined_call_operand.vmem [shape: f32[80,32], index: 0, kind: input, shape index: {}]
  %s1 = inlined_call_operand.vmem [shape: f32[32,128], index: 1, kind: input, shape index: {}]
  %s2 = inlined_call_operand.vmem [shape: f32[32,128], index: 2, kind: input, shape index: {}]
  %s3 = inlined_call_operand.vmem [shape: f32[1,128], index: 3, kind: input, shape index: {}]
  %s4 = inlined_call_operand.vmem [shape: f32[64,128], index: 4, kind: input, shape index: {}]
  %s5 = inlined_call_operand.vmem [shape: f32[32,128], index: 5, kind: input, shape index: {}]
  %s6 = inlined_call_operand.vmem [shape: f32[1,128], index: 6, kind: input, shape index: {}]
  %s7 = inlined_call_operand.vmem [shape: f32[320,10], index: 7, kind: input, shape index: {}]
  %s8 = inlined_call_operand.vmem [shape: f32[1,10], index: 8, kind: input, shape index: {}]
  %s9 = inlined_call_operand.vmem [shape: f32[2,10,32], index: 9, kind: input, shape index: {}]
  %s10 = inlined_call_operand.vmem [shape: f32[2,10,32], index: 10, kind: input, shape index: {}]
  %s11 = inlined_call_operand.hbm [shape: f32[8,10], index: 11, kind: output, shape index: {}]
  %s12 = sld [smem:[#allocation0]]
  $region54: #{forward.1} parent=0
    _
  %s14 = ssub.s32 1, %s12
  %s15 = scalar_select 0, %s14, %s12
  $region1: #{forward.1} parent=0
    #allocation6 [shape = 'u8[4096]{0}', space=vmem, size = 0x1000, scoped, tag = 'output window, operand 0, single buffered']
    #allocation7 [shape = 's32[1]{0}', space=sflag, size = 0x4, scoped, tag = 'scoped memory for forward.1']
    %16 = vsyncpa [#allocation7], 0
    // Predicated region
    $region2: #{forward.1} parent=1 // pred_check
      _
    $region3: #{forward.1} parent=1 // pred_check_branch
      %18 = sbr.rel (0) target = $region5
    $region4: #{forward.1} parent=1 // pred_region
      _
    $region5: #{forward.1} parent=1 // pred_fallthru
      _
    // Predicated region
    $region6: #{forward.1} parent=1 // pred_check
      _
    $region7: #{forward.1} parent=1 // pred_check_branch
      %20 = sbr.rel (0) target = $region9
    $region8: #{forward.1} parent=1 // pred_region
      _
    $region9: #{forward.1} parent=1 // pred_fallthru
      _
    // Predicated region
    $region10: #{forward.1} parent=1 // pred_check
      _
    $region11: #{forward.1} parent=1 // pred_check_branch
      %22 = sbr.rel (0) target = $region13
    $region12: #{forward.1} parent=1 // pred_region
      _
    $region13: #{forward.1} parent=1 // pred_fallthru
      _
    // Predicated region
    $region14: #{forward.1} parent=1 // pred_check
      _
    $region15: #{forward.1} parent=1 // pred_check_branch
      %24 = sbr.rel (0) target = $region17
    $region16: #{forward.1} parent=1 // pred_region
      _
    $region17: #{forward.1} parent=1 // pred_fallthru
      _
    // Predicated region
    $region18: #{forward.1} parent=1 // pred_check
      _
    $region19: #{forward.1} parent=1 // pred_check_branch
      %26 = sbr.rel (0) target = $region21
    $region20: #{forward.1} parent=1 // pred_region
      _
    $region21: #{forward.1} parent=1 // pred_fallthru
      _
    // Predicated region
    $region22: #{forward.1} parent=1 // pred_check
      _
    $region23: #{forward.1} parent=1 // pred_check_branch
      %28 = sbr.rel (0) target = $region25
    $region24: #{forward.1} parent=1 // pred_region
      _
    $region25: #{forward.1} parent=1 // pred_fallthru
      _
    // Predicated region
    $region26: #{forward.1} parent=1 // pred_check
      _
    $region27: #{forward.1} parent=1 // pred_check_branch
      %30 = sbr.rel (0) target = $region29
    $region28: #{forward.1} parent=1 // pred_region
      _
    $region29: #{forward.1} parent=1 // pred_fallthru
      _
    // Predicated region
    $region30: #{forward.1} parent=1 // pred_check
      _
    $region31: #{forward.1} parent=1 // pred_check_branch
      %32 = sbr.rel (0) target = $region33
    $region32: #{forward.1} parent=1 // pred_region
      _
    $region33: #{forward.1} parent=1 // pred_fallthru
      _
    // Predicated region
    $region34: #{forward.1} parent=1 // pred_check
      _
    $region35: #{forward.1} parent=1 // pred_check_branch
      %34 = sbr.rel (0) target = $region37
    $region36: #{forward.1} parent=1 // pred_region
      _
    $region37: #{forward.1} parent=1 // pred_fallthru
      _
    // Predicated region
    $region38: #{forward.1} parent=1 // pred_check
      _
    $region39: #{forward.1} parent=1 // pred_check_branch
      %36 = sbr.rel (0) target = $region41
    $region40: #{forward.1} parent=1 // pred_region
      _
    $region41: #{forward.1} parent=1 // pred_fallthru
      _
    // Predicated region
    $region42: #{forward.1} parent=1 // pred_check
      _
    $region43: #{forward.1} parent=1 // pred_check_branch
      %38 = sbr.rel (0) target = $region45
    $region44: #{forward.1} parent=1 // pred_region
      _
    $region45: #{forward.1} parent=1 // pred_fallthru
      _
    %v39 = vld [vmem:[%s0] sm:$0xff]
    %v40 = vld [vmem:[%s0 + $0x8] sm:$0xff]
    %v41 = vld [vmem:[%s0 + $0x10] sm:$0xff]
    %v42 = vld [vmem:[%s0 + $0x18] sm:$0xff]
    %v43 = vld [vmem:[%s0 + $0x20] sm:$0xff]
    %v44 = vld [vmem:[%s0 + $0x28] sm:$0xff]
    %v45 = vld [vmem:[%s0 + $0x30] sm:$0xff]
    %v46 = vld [vmem:[%s0 + $0x38] sm:$0xff]
    %v47 = vld [vmem:[%s0 + $0x40] sm:$0xff]
    %v48 = vld [vmem:[%s0 + $0x48] sm:$0xff]
    %v49 = vld [vmem:[%s1] sm:$0xff]
    %v50 = vld [vmem:[%s1 + $0x8] sm:$0xff]
    %v51 = vld [vmem:[%s1 + $0x10] sm:$0xff]
    %v52 = vld [vmem:[%s1 + $0x18] sm:$0xff]
    %v53 = vld [vmem:[%s3] sm:$0x1]
    %v55 = vlaneseq
    %v56 = vshrl.u32 %v55, 7
    %v57 = vsub.s32 0, %v56
    %v58 = vrot.slane %v53, %v57
    %vm60 = vcmask 261120
    %v62 = vsel %vm60, %v39, 0
    %v65 = vsel %vm60, %v40, 0
    %v68 = vsel %vm60, %v41, 0
    %v71 = vsel %vm60, %v42, 0
    %v74 = vsel %vm60, %v43, 0
    %v77 = vsel %vm60, %v44, 0
    %v80 = vsel %vm60, %v45, 0
    %v83 = vsel %vm60, %v46, 0
    %v86 = vsel %vm60, %v47, 0
    %v89 = vsel %vm60, %v48, 0
    %91 = vmatprep.subr.mxu0 0.0
    %92 = vmatpush1.msra.mxu0 0.0
    %93 = vmatprep.subr.mxu0 0.0
    %94 = vmatpush1.msra.mxu0 0.0
    %95 = vmatprep.subr.mxu0 0.0
    %96 = vmatpush1.msra.mxu0 0.0
    %97 = vmatprep.subr.mxu0 0.0
    %98 = vmatpush1.msra.mxu0 0.0
    %99 = vmatprep.subr.mxu0 0.0
    %100 = vmatpush1.msra.mxu0 0.0
    %101 = vmatprep.subr.mxu0 0.0
    %102 = vmatpush1.msra.mxu0 0.0
    %103 = vmatprep.subr.mxu0 0.0
    %104 = vmatpush1.msra.mxu0 0.0
    %105 = vmatprep.subr.mxu0 0.0
    %106 = vmatpush1.msra.mxu0 0.0
    %107 = vmatprep.subr.mxu0 0.0
    %108 = vmatpush1.msra.mxu0 0.0
    %109 = vmatprep.subr.mxu0 0.0
    %110 = vmatpush1.msra.mxu0 0.0
    %111 = vmatprep.subr.mxu0 0.0
    %112 = vmatpush1.msra.mxu0 0.0
    %113 = vmatprep.subr.mxu0 0.0
    %114 = vmatpush1.msra.mxu0 0.0
    %115 = vmatprep.subr.mxu0 0.0
    %116 = vmatpush1.msra.mxu0 %v52
    %117 = vmatprep.subr.mxu0 0.0
    %118 = vmatpush1.msra.mxu0 %v51
    %119 = vmatprep.subr.mxu0 0.0
    %120 = vmatpush1.msra.mxu0 %v50
    %121 = vmatprep.subr.mxu0 0.0
    %122 = vmatpush1.msra.mxu0 %v49
    %123 = vmatprep.subr.mxu0 0.0
    %124 = vmatpush2.msra.mxu0 0.0
    %125 = vmatprep.subr.mxu0 0.0
    %126 = vmatpush2.msra.mxu0 0.0
    %127 = vmatprep.subr.mxu0 0.0
    %128 = vmatpush2.msra.mxu0 0.0
    %129 = vmatprep.subr.mxu0 0.0
    %130 = vmatpush2.msra.mxu0 0.0
    %131 = vmatprep.subr.mxu0 0.0
    %132 = vmatpush2.msra.mxu0 0.0
    %133 = vmatprep.subr.mxu0 0.0
    %134 = vmatpush2.msra.mxu0 0.0
    %135 = vmatprep.subr.mxu0 0.0
    %136 = vmatpush2.msra.mxu0 0.0
    %137 = vmatprep.subr.mxu0 0.0
    %138 = vmatpush2.msra.mxu0 0.0
    %139 = vmatprep.subr.mxu0 0.0
    %140 = vmatpush2.msra.mxu0 0.0
    %141 = vmatprep.subr.mxu0 0.0
    %142 = vmatpush2.msra.mxu0 0.0
    %143 = vmatprep.subr.mxu0 0.0
    %144 = vmatpush2.msra.mxu0 0.0
    %145 = vmatprep.subr.mxu0 0.0
    %146 = vmatpush2.msra.mxu0 0.0
    %147 = vmatprep.subr.mxu0 0.0
    %148 = vmatpush2.msra.mxu0 0.0
    %149 = vmatprep.subr.mxu0 0.0
    %150 = vmatpush2.msra.mxu0 0.0
    %151 = vmatprep.subr.mxu0 0.0
    %152 = vmatpush2.msra.mxu0 0.0
    %153 = vmatprep.subr.mxu0 0.0
    %154 = vmatpush2.msra.mxu0 0.0
    %155 = vmatprep.mubr.f32.mxu0 0.0
    %156 = vmatmul.mubr.f32.gmra.mxu0 %v62
    %v157 = vpop.f32.mrf.mxu0
    %v158 = vadd.f32 %v58, %v157
    %v159 = vpop.f32.mrf.mxu0
    %160 = vmatprep.mubr.f32.mxu0 0.0
    %161 = vmatmul.mubr.f32.gmra.mxu0 %v65
    %v162 = vpop.f32.mrf.mxu0
    %v163 = vadd.f32 %v58, %v162
    %v164 = vpop.f32.mrf.mxu0
    %165 = vmatprep.mubr.f32.mxu0 0.0
    %166 = vmatmul.mubr.f32.gmra.mxu0 %v68
    %v167 = vpop.f32.mrf.mxu0
    %v168 = vadd.f32 %v58, %v167
    %v169 = vpop.f32.mrf.mxu0
    %170 = vmatprep.mubr.f32.mxu0 0.0
    %171 = vmatmul.mubr.f32.gmra.mxu0 %v71
    %v172 = vpop.f32.mrf.mxu0
    %v173 = vadd.f32 %v58, %v172
    %v174 = vpop.f32.mrf.mxu0
    %175 = vmatprep.mubr.f32.mxu0 0.0
    %176 = vmatmul.mubr.f32.gmra.mxu0 %v74
    %v177 = vpop.f32.mrf.mxu0
    %v178 = vadd.f32 %v58, %v177
    %v179 = vpop.f32.mrf.mxu0
    %180 = vmatprep.mubr.f32.mxu0 0.0
    %181 = vmatmul.mubr.f32.gmra.mxu0 %v77
    %v182 = vpop.f32.mrf.mxu0
    %v183 = vadd.f32 %v58, %v182
    %v184 = vpop.f32.mrf.mxu0
    %185 = vmatprep.mubr.f32.mxu0 0.0
    %186 = vmatmul.mubr.f32.gmra.mxu0 %v80
    %v187 = vpop.f32.mrf.mxu0
    %v188 = vadd.f32 %v58, %v187
    %v189 = vpop.f32.mrf.mxu0
    %190 = vmatprep.mubr.f32.mxu0 0.0
    %191 = vmatmul.mubr.f32.gmra.mxu0 %v83
    %v192 = vpop.f32.mrf.mxu0
    %v193 = vadd.f32 %v58, %v192
    %v194 = vpop.f32.mrf.mxu0
    %195 = vmatprep.mubr.f32.mxu0 0.0
    %196 = vmatmul.mubr.f32.gmra.mxu0 %v86
    %v197 = vpop.f32.mrf.mxu0
    %v198 = vadd.f32 %v58, %v197
    %v199 = vpop.f32.mrf.mxu0
    %200 = vmatprep.mubr.f32.mxu0 0.0
    %201 = vmatmul.mubr.f32.gmra.mxu0 %v89
    %v202 = vpop.f32.mrf.mxu0
    %v203 = vadd.f32 %v58, %v202
    %v204 = vpop.f32.mrf.mxu0
    %205 = vdwg.mxu0
    %206 = vst [vmem:[#allocation2] sm:$0xff] %v158
    %207 = vst [vmem:[#allocation2 + $0x8] sm:$0xff] %v163
    %208 = vst [vmem:[#allocation2 + $0x10] sm:$0xff] %v168
    %209 = vst [vmem:[#allocation2 + $0x18] sm:$0xff] %v173
    %210 = vst [vmem:[#allocation2 + $0x20] sm:$0xff] %v178
    %211 = vst [vmem:[#allocation2 + $0x28] sm:$0xff] %v183
    %212 = vst [vmem:[#allocation2 + $0x30] sm:$0xff] %v188
    %213 = vst [vmem:[#allocation2 + $0x38] sm:$0xff] %v193
    %214 = vst [vmem:[#allocation2 + $0x40] sm:$0xff] %v198
    %215 = vst [vmem:[#allocation2 + $0x48] sm:$0xff] %v203
    %v216 = vld [vmem:[%s9] sm:$0xff]
    %v217 = vld [vmem:[%s9 + $0x8] sm:$0x3]
    %v218 = vld [vmem:[%s10] sm:$0xff]
    %v219 = vld [vmem:[%s10 + $0x8] sm:$0x3]
    %v220 = vld [vmem:[%s2] sm:$0xff]
    %v221 = vld [vmem:[%s2 + $0x8] sm:$0xff]
    %v222 = vld [vmem:[%s2 + $0x10] sm:$0xff]
    %v223 = vld [vmem:[%s2 + $0x18] sm:$0xff]
    %v224 = vld [vmem:[#allocation2] sm:$0xff]
    %v225 = vld [vmem:[#allocation2 + $0x8] sm:$0x3]
    %v227 = vsel %vm60, %v216, 0
    %v230 = vsel %vm60, %v217, 0
    %232 = vmatprep.subr.mxu0 0.0
    %233 = vmatpush1.msra.mxu0 0.0
    %234 = vmatprep.subr.mxu0 0.0
    %235 = vmatpush1.msra.mxu0 0.0
    %236 = vmatprep.subr.mxu0 0.0
    %237 = vmatpush1.msra.mxu0 0.0
    %238 = vmatprep.subr.mxu0 0.0
    %239 = vmatpush1.msra.mxu0 0.0
    %240 = vmatprep.subr.mxu0 0.0
    %241 = vmatpush1.msra.mxu0 0.0
    %242 = vmatprep.subr.mxu0 0.0
    %243 = vmatpush1.msra.mxu0 0.0
    %244 = vmatprep.subr.mxu0 0.0
    %245 = vmatpush1.msra.mxu0 0.0
    %246 = vmatprep.subr.mxu0 0.0
    %247 = vmatpush1.msra.mxu0 0.0
    %248 = vmatprep.subr.mxu0 0.0
    %249 = vmatpush1.msra.mxu0 0.0
    %250 = vmatprep.subr.mxu0 0.0
    %251 = vmatpush1.msra.mxu0 0.0
    %252 = vmatprep.subr.mxu0 0.0
    %253 = vmatpush1.msra.mxu0 0.0
    %254 = vmatprep.subr.mxu0 0.0
    %255 = vmatpush1.msra.mxu0 0.0
    %256 = vmatprep.subr.mxu0 0.0
    %257 = vmatpush1.msra.mxu0 %v223
    %258 = vmatprep.subr.mxu0 0.0
    %259 = vmatpush1.msra.mxu0 %v222
    %260 = vmatprep.subr.mxu0 0.0
    %261 = vmatpush1.msra.mxu0 %v221
    %262 = vmatprep.subr.mxu0 0.0
    %263 = vmatpush1.msra.mxu0 %v220
    %264 = vmatprep.subr.mxu0 0.0
    %265 = vmatpush2.msra.mxu0 0.0
    %266 = vmatprep.subr.mxu0 0.0
    %267 = vmatpush2.msra.mxu0 0.0
    %268 = vmatprep.subr.mxu0 0.0
    %269 = vmatpush2.msra.mxu0 0.0
    %270 = vmatprep.subr.mxu0 0.0
    %271 = vmatpush2.msra.mxu0 0.0
    %272 = vmatprep.subr.mxu0 0.0
    %273 = vmatpush2.msra.mxu0 0.0
    %274 = vmatprep.subr.mxu0 0.0
    %275 = vmatpush2.msra.mxu0 0.0
    %276 = vmatprep.subr.mxu0 0.0
    %277 = vmatpush2.msra.mxu0 0.0
    %278 = vmatprep.subr.mxu0 0.0
    %279 = vmatpush2.msra.mxu0 0.0
    %280 = vmatprep.subr.mxu0 0.0
    %281 = vmatpush2.msra.mxu0 0.0
    %282 = vmatprep.subr.mxu0 0.0
    %283 = vmatpush2.msra.mxu0 0.0
    %284 = vmatprep.subr.mxu0 0.0
    %285 = vmatpush2.msra.mxu0 0.0
    %286 = vmatprep.subr.mxu0 0.0
    %287 = vmatpush2.msra.mxu0 0.0
    %288 = vmatprep.subr.mxu0 0.0
    %289 = vmatpush2.msra.mxu0 0.0
    %290 = vmatprep.subr.mxu0 0.0
    %291 = vmatpush2.msra.mxu0 0.0
    %292 = vmatprep.subr.mxu0 0.0
    %293 = vmatpush2.msra.mxu0 0.0
    %294 = vmatprep.subr.mxu0 0.0
    %295 = vmatpush2.msra.mxu0 0.0
    %296 = vmatprep.mubr.f32.mxu0 0.0
    %297 = vmatmul.mubr.f32.gmra.mxu0 %v227
    %v298 = vpop.f32.mrf.mxu0
    %v299 = vadd.f32 0.0, %v298
    %v300 = vpop.f32.mrf.mxu0
    %301 = vmatprep.mubr.f32.mxu0 0.0
    %302 = vmatmul.mubr.f32.gmra.mxu0 %v230
    %v303 = vpop.f32.mrf.mxu0
    %v304 = vadd.f32 0.0, %v303
    %v305 = vpop.f32.mrf.mxu0
    %306 = vdwg.mxu0
    %v307 = vadd.f32 %v224, %v299
    %v308 = vadd.f32 %v225, %v304
    %v309 = vxor.u32 %v307, 2147483648
    %v310 = vxor.u32 %v308, 2147483648
    %v311 = vmul.f32 %v309, 1.442695
    %v312 = vpow.pop %v311
    %v313 = vmul.f32 %v310, 1.442695
    %v314 = vpow.pop %v313
    %v315 = vadd.f32 %v312, 1.0
    %v316 = vadd.f32 %v314, 1.0
    %v317 = vrcp.pop %v315
    %v318 = vmul.f32 1.0, %v317
    %v319 = vrcp.pop %v316
    %v320 = vmul.f32 1.0, %v319
    %v321 = vtanh.pop %v307
    %v322 = vtanh.pop %v308
    %325 = vrot.lane.b32.xlu0 %v218, 32
    %v326 = vpop.permute.xlu0 %325
    %327 = vrot.lane.b32.xlu0 %v219, 32
    %v328 = vpop.permute.xlu0 %327
    %v331 = vmul.f32 %v318, %v326
    %v332 = vmul.f32 %v320, %v328
    %335 = vrot.lane.b32.xlu0 %v321, 32
    %v336 = vpop.permute.xlu0 %335
    %337 = vrot.lane.b32.xlu0 %v322, 32
    %v338 = vpop.permute.xlu0 %337
    %v341 = vmul.f32 %v318, %v336
    %v342 = vmul.f32 %v320, %v338
    %345 = vrot.lane.b32.xlu0 %v341, 32
    %v346 = vpop.permute.xlu0 %345
    %347 = vrot.lane.b32.xlu0 %v342, 32
    %v348 = vpop.permute.xlu0 %347
    %v351 = vadd.f32 %v331, %v346
    %v352 = vadd.f32 %v332, %v348
    %v353 = vtanh.pop %v351
    %v354 = vtanh.pop %v352
    %357 = vrot.lane.b32.xlu0 %v353, 32
    %v358 = vpop.permute.xlu0 %357
    %359 = vrot.lane.b32.xlu0 %v354, 32
    %v360 = vpop.permute.xlu0 %359
    %v363 = vmul.f32 %v318, %v358
    %v364 = vmul.f32 %v320, %v360
    %367 = vrot.lane.b32.xlu0 %v363, 64
    %v368 = vpop.permute.xlu0 %367
    %369 = vrot.lane.b32.xlu0 %v364, 64
    %v370 = vpop.permute.xlu0 %369
    %vm373 = vcmask 130048
    %374 = vst.msk [vmem:[#allocation4] sm:$0xff] %vm373, %v368
    %vm375 = vcmask 123904
    %376 = vst.msk [vmem:[#allocation4 + $0x8] sm:$0x3] %vm375, %v370
    %377 = vrot.lane.b32.xlu0 %v363, 96
    %v378 = vpop.permute.xlu0 %377
    %379 = vrot.lane.b32.xlu0 %v364, 96
    %v380 = vpop.permute.xlu0 %379
    %vm383 = vcmask 392448
    %384 = vst.msk [vmem:[#allocation4 + $0x46] sm:$0xff] %vm383, %v378
    %vm385 = vcmask 386304
    %386 = vst.msk [vmem:[#allocation4 + $0x4e] sm:$0x3] %vm385, %v380
    %vm387 = vcmask 261248
    %388 = vst.msk [vmem:[#allocation4 + $0x46] sm:$0xff] %vm387, %v368
    %vm389 = vcmask 255104
    %390 = vst.msk [vmem:[#allocation4 + $0x4e] sm:$0x3] %vm389, %v370
    %vm391 = vcmask 523648
    %392 = vst.msk [vmem:[#allocation4] sm:$0xff] %vm391, %v378
    %vm393 = vcmask 517504
    %394 = vst.msk [vmem:[#allocation4 + $0x8] sm:$0x3] %vm393, %v380
    %v395 = vld [vmem:[#allocation2 + $0xa] sm:$0xff]
    %v396 = vld [vmem:[#allocation2 + $0x12] sm:$0x3]
    %v397 = vsel %vm60, %v368, 0
    %v399 = vsel %vm60, %v370, 0
    %401 = vmatprep.subr.mxu0 0.0
    %402 = vmatpush1.msra.mxu0 0.0
    %403 = vmatprep.subr.mxu0 0.0
    %404 = vmatpush1.msra.mxu0 0.0
    %405 = vmatprep.subr.mxu0 0.0
    %406 = vmatpush1.msra.mxu0 0.0
    %407 = vmatprep.subr.mxu0 0.0
    %408 = vmatpush1.msra.mxu0 0.0
    %409 = vmatprep.subr.mxu0 0.0
    %410 = vmatpush1.msra.mxu0 0.0
    %411 = vmatprep.subr.mxu0 0.0
    %412 = vmatpush1.msra.mxu0 0.0
    %413 = vmatprep.subr.mxu0 0.0
    %414 = vmatpush1.msra.mxu0 0.0
    %415 = vmatprep.subr.mxu0 0.0
    %416 = vmatpush1.msra.mxu0 0.0
    %417 = vmatprep.subr.mxu0 0.0
    %418 = vmatpush1.msra.mxu0 0.0
    %419 = vmatprep.subr.mxu0 0.0
    %420 = vmatpush1.msra.mxu0 0.0
    %421 = vmatprep.subr.mxu0 0.0
    %422 = vmatpush1.msra.mxu0 0.0
    %423 = vmatprep.subr.mxu0 0.0
    %424 = vmatpush1.msra.mxu0 0.0
    %425 = vmatprep.subr.mxu0 0.0
    %426 = vmatpush1.msra.mxu0 %v223
    %427 = vmatprep.subr.mxu0 0.0
    %428 = vmatpush1.msra.mxu0 %v222
    %429 = vmatprep.subr.mxu0 0.0
    %430 = vmatpush1.msra.mxu0 %v221
    %431 = vmatprep.subr.mxu0 0.0
    %432 = vmatpush1.msra.mxu0 %v220
    %433 = vmatprep.subr.mxu0 0.0
    %434 = vmatpush2.msra.mxu0 0.0
    %435 = vmatprep.subr.mxu0 0.0
    %436 = vmatpush2.msra.mxu0 0.0
    %437 = vmatprep.subr.mxu0 0.0
    %438 = vmatpush2.msra.mxu0 0.0
    %439 = vmatprep.subr.mxu0 0.0
    %440 = vmatpush2.msra.mxu0 0.0
    %441 = vmatprep.subr.mxu0 0.0
    %442 = vmatpush2.msra.mxu0 0.0
    %443 = vmatprep.subr.mxu0 0.0
    %444 = vmatpush2.msra.mxu0 0.0
    %445 = vmatprep.subr.mxu0 0.0
    %446 = vmatpush2.msra.mxu0 0.0
    %447 = vmatprep.subr.mxu0 0.0
    %448 = vmatpush2.msra.mxu0 0.0
    %449 = vmatprep.subr.mxu0 0.0
    %450 = vmatpush2.msra.mxu0 0.0
    %451 = vmatprep.subr.mxu0 0.0
    %452 = vmatpush2.msra.mxu0 0.0
    %453 = vmatprep.subr.mxu0 0.0
    %454 = vmatpush2.msra.mxu0 0.0
    %455 = vmatprep.subr.mxu0 0.0
    %456 = vmatpush2.msra.mxu0 0.0
    %457 = vmatprep.subr.mxu0 0.0
    %458 = vmatpush2.msra.mxu0 0.0
    %459 = vmatprep.subr.mxu0 0.0
    %460 = vmatpush2.msra.mxu0 0.0
    %461 = vmatprep.subr.mxu0 0.0
    %462 = vmatpush2.msra.mxu0 0.0
    %463 = vmatprep.subr.mxu0 0.0
    %464 = vmatpush2.msra.mxu0 0.0
    %465 = vmatprep.mubr.f32.mxu0 0.0
    %466 = vmatmul.mubr.f32.gmra.mxu0 %v397
    %v467 = vpop.f32.mrf.mxu0
    %v468 = vadd.f32 0.0, %v467
    %v469 = vpop.f32.mrf.mxu0
    %470 = vmatprep.mubr.f32.mxu0 0.0
    %471 = vmatmul.mubr.f32.gmra.mxu0 %v399
    %v472 = vpop.f32.mrf.mxu0
    %v473 = vadd.f32 0.0, %v472
    %v474 = vpop.f32.mrf.mxu0
    %475 = vdwg.mxu0
    %v476 = vadd.f32 %v395, %v468
    %v477 = vadd.f32 %v396, %v473
    %v478 = vxor.u32 %v476, 2147483648
    %v479 = vxor.u32 %v477, 2147483648
    %v480 = vmul.f32 %v478, 1.442695
    %v481 = vpow.pop %v480
    %v482 = vmul.f32 %v479, 1.442695
    %v483 = vpow.pop %v482
    %v484 = vadd.f32 %v481, 1.0
    %v485 = vadd.f32 %v483, 1.0
    %v486 = vrcp.pop %v484
    %v487 = vmul.f32 1.0, %v486
    %v488 = vrcp.pop %v485
    %v489 = vmul.f32 1.0, %v488
    %v490 = vtanh.pop %v476
    %v491 = vtanh.pop %v477
    %v492 = vmul.f32 %v487, %v351
    %v493 = vmul.f32 %v489, %v352
    %496 = vrot.lane.b32.xlu0 %v490, 32
    %v497 = vpop.permute.xlu0 %496
    %498 = vrot.lane.b32.xlu0 %v491, 32
    %v499 = vpop.permute.xlu0 %498
    %v502 = vmul.f32 %v487, %v497
    %v503 = vmul.f32 %v489, %v499
    %506 = vrot.lane.b32.xlu0 %v502, 32
    %v507 = vpop.permute.xlu0 %506
    %508 = vrot.lane.b32.xlu0 %v503, 32
    %v509 = vpop.permute.xlu0 %508
    %v512 = vadd.f32 %v492, %v507
    %v513 = vadd.f32 %v493, %v509
    %v514 = vtanh.pop %v512
    %v515 = vtanh.pop %v513
    %518 = vrot.lane.b32.xlu0 %v514, 32
    %v519 = vpop.permute.xlu0 %518
    %520 = vrot.lane.b32.xlu0 %v515, 32
    %v521 = vpop.permute.xlu0 %520
    %v524 = vmul.f32 %v487, %v519
    %v525 = vmul.f32 %v489, %v521
    %528 = vrot.lane.b32.xlu0 %v524, 64
    %v529 = vpop.permute.xlu0 %528
    %530 = vrot.lane.b32.xlu0 %v525, 64
    %v531 = vpop.permute.xlu0 %530
    %534 = vst.msk [vmem:[#allocation4 + $0xa] sm:$0xff] %vm373, %v529
    %535 = vst.msk [vmem:[#allocation4 + $0x12] sm:$0x3] %vm375, %v531
    %536 = vrot.lane.b32.xlu0 %v524, 96
    %v537 = vpop.permute.xlu0 %536
    %538 = vrot.lane.b32.xlu0 %v525, 96
    %v539 = vpop.permute.xlu0 %538
    %542 = vst.msk [vmem:[#allocation4 + $0x3c] sm:$0xff] %vm383, %v537
    %543 = vst.msk [vmem:[#allocation4 + $0x44] sm:$0x3] %vm385, %v539
    %544 = vst.msk [vmem:[#allocation4 + $0x3c] sm:$0xff] %vm387, %v529
    %545 = vst.msk [vmem:[#allocation4 + $0x44] sm:$0x3] %vm389, %v531
    %546 = vst.msk [vmem:[#allocation4 + $0xa] sm:$0xff] %vm391, %v537
    %547 = vst.msk [vmem:[#allocation4 + $0x12] sm:$0x3] %vm393, %v539
    %v548 = vld [vmem:[#allocation2 + $0x14] sm:$0xff]
    %v549 = vld [vmem:[#allocation2 + $0x1c] sm:$0x3]
    %v550 = vsel %vm60, %v529, 0
    %v552 = vsel %vm60, %v531, 0
    %554 = vmatprep.subr.mxu0 0.0
    %555 = vmatpush1.msra.mxu0 0.0
    %556 = vmatprep.subr.mxu0 0.0
    %557 = vmatpush1.msra.mxu0 0.0
    %558 = vmatprep.subr.mxu0 0.0
    %559 = vmatpush1.msra.mxu0 0.0
    %560 = vmatprep.subr.mxu0 0.0
    %561 = vmatpush1.msra.mxu0 0.0
    %562 = vmatprep.subr.mxu0 0.0
    %563 = vmatpush1.msra.mxu0 0.0
    %564 = vmatprep.subr.mxu0 0.0
    %565 = vmatpush1.msra.mxu0 0.0
    %566 = vmatprep.subr.mxu0 0.0
    %567 = vmatpush1.msra.mxu0 0.0
    %568 = vmatprep.subr.mxu0 0.0
    %569 = vmatpush1.msra.mxu0 0.0
    %570 = vmatprep.subr.mxu0 0.0
    %571 = vmatpush1.msra.mxu0 0.0
    %572 = vmatprep.subr.mxu0 0.0
    %573 = vmatpush1.msra.mxu0 0.0
    %574 = vmatprep.subr.mxu0 0.0
    %575 = vmatpush1.msra.mxu0 0.0
    %576 = vmatprep.subr.mxu0 0.0
    %577 = vmatpush1.msra.mxu0 0.0
    %578 = vmatprep.subr.mxu0 0.0
    %579 = vmatpush1.msra.mxu0 %v223
    %580 = vmatprep.subr.mxu0 0.0
    %581 = vmatpush1.msra.mxu0 %v222
    %582 = vmatprep.subr.mxu0 0.0
    %583 = vmatpush1.msra.mxu0 %v221
    %584 = vmatprep.subr.mxu0 0.0
    %585 = vmatpush1.msra.mxu0 %v220
    %586 = vmatprep.subr.mxu0 0.0
    %587 = vmatpush2.msra.mxu0 0.0
    %588 = vmatprep.subr.mxu0 0.0
    %589 = vmatpush2.msra.mxu0 0.0
    %590 = vmatprep.subr.mxu0 0.0
    %591 = vmatpush2.msra.mxu0 0.0
    %592 = vmatprep.subr.mxu0 0.0
    %593 = vmatpush2.msra.mxu0 0.0
    %594 = vmatprep.subr.mxu0 0.0
    %595 = vmatpush2.msra.mxu0 0.0
    %596 = vmatprep.subr.mxu0 0.0
    %597 = vmatpush2.msra.mxu0 0.0
    %598 = vmatprep.subr.mxu0 0.0
    %599 = vmatpush2.msra.mxu0 0.0
    %600 = vmatprep.subr.mxu0 0.0
    %601 = vmatpush2.msra.mxu0 0.0
    %602 = vmatprep.subr.mxu0 0.0
    %603 = vmatpush2.msra.mxu0 0.0
    %604 = vmatprep.subr.mxu0 0.0
    %605 = vmatpush2.msra.mxu0 0.0
    %606 = vmatprep.subr.mxu0 0.0
    %607 = vmatpush2.msra.mxu0 0.0
    %608 = vmatprep.subr.mxu0 0.0
    %609 = vmatpush2.msra.mxu0 0.0
    %610 = vmatprep.subr.mxu0 0.0
    %611 = vmatpush2.msra.mxu0 0.0
    %612 = vmatprep.subr.mxu0 0.0
    %613 = vmatpush2.msra.mxu0 0.0
    %614 = vmatprep.subr.mxu0 0.0
    %615 = vmatpush2.msra.mxu0 0.0
    %616 = vmatprep.subr.mxu0 0.0
    %617 = vmatpush2.msra.mxu0 0.0
    %618 = vmatprep.mubr.f32.mxu0 0.0
    %619 = vmatmul.mubr.f32.gmra.mxu0 %v550
    %v620 = vpop.f32.mrf.mxu0
    %v621 = vadd.f32 0.0, %v620
    %v622 = vpop.f32.mrf.mxu0
    %623 = vmatprep.mubr.f32.mxu0 0.0
    %624 = vmatmul.mubr.f32.gmra.mxu0 %v552
    %v625 = vpop.f32.mrf.mxu0
    %v626 = vadd.f32 0.0, %v625
    %v627 = vpop.f32.mrf.mxu0
    %628 = vdwg.mxu0
    %v629 = vadd.f32 %v548, %v621
    %v630 = vadd.f32 %v549, %v626
    %v631 = vxor.u32 %v629, 2147483648
    %v632 = vxor.u32 %v630, 2147483648
    %v633 = vmul.f32 %v631, 1.442695
    %v634 = vpow.pop %v633
    %v635 = vmul.f32 %v632, 1.442695
    %v636 = vpow.pop %v635
    %v637 = vadd.f32 %v634, 1.0
    %v638 = vadd.f32 %v636, 1.0
    %v639 = vrcp.pop %v637
    %v640 = vmul.f32 1.0, %v639
    %v641 = vrcp.pop %v638
    %v642 = vmul.f32 1.0, %v641
    %v643 = vtanh.pop %v629
    %v644 = vtanh.pop %v630
    %v645 = vmul.f32 %v640, %v512
    %v646 = vmul.f32 %v642, %v513
    %649 = vrot.lane.b32.xlu0 %v643, 32
    %v650 = vpop.permute.xlu0 %649
    %651 = vrot.lane.b32.xlu0 %v644, 32
    %v652 = vpop.permute.xlu0 %651
    %v655 = vmul.f32 %v640, %v650
    %v656 = vmul.f32 %v642, %v652
    %659 = vrot.lane.b32.xlu0 %v655, 32
    %v660 = vpop.permute.xlu0 %659
    %661 = vrot.lane.b32.xlu0 %v656, 32
    %v662 = vpop.permute.xlu0 %661
    %v665 = vadd.f32 %v645, %v660
    %v666 = vadd.f32 %v646, %v662
    %v667 = vtanh.pop %v665
    %v668 = vtanh.pop %v666
    %671 = vrot.lane.b32.xlu0 %v667, 32
    %v672 = vpop.permute.xlu0 %671
    %673 = vrot.lane.b32.xlu0 %v668, 32
    %v674 = vpop.permute.xlu0 %673
    %v677 = vmul.f32 %v640, %v672
    %v678 = vmul.f32 %v642, %v674
    %681 = vrot.lane.b32.xlu0 %v677, 64
    %v682 = vpop.permute.xlu0 %681
    %683 = vrot.lane.b32.xlu0 %v678, 64
    %v684 = vpop.permute.xlu0 %683
    %687 = vst.msk [vmem:[#allocation4 + $0x14] sm:$0xff] %vm373, %v682
    %688 = vst.msk [vmem:[#allocation4 + $0x1c] sm:$0x3] %vm375, %v684
    %689 = vrot.lane.b32.xlu0 %v677, 96
    %v690 = vpop.permute.xlu0 %689
    %691 = vrot.lane.b32.xlu0 %v678, 96
    %v692 = vpop.permute.xlu0 %691
    %695 = vst.msk [vmem:[#allocation4 + $0x32] sm:$0xff] %vm383, %v690
    %696 = vst.msk [vmem:[#allocation4 + $0x3a] sm:$0x3] %vm385, %v692
    %697 = vst.msk [vmem:[#allocation4 + $0x32] sm:$0xff] %vm387, %v682
    %698 = vst.msk [vmem:[#allocation4 + $0x3a] sm:$0x3] %vm389, %v684
    %699 = vst.msk [vmem:[#allocation4 + $0x14] sm:$0xff] %vm391, %v690
    %700 = vst.msk [vmem:[#allocation4 + $0x1c] sm:$0x3] %vm393, %v692
    %v701 = vld [vmem:[#allocation2 + $0x1e] sm:$0xff]
    %v702 = vld [vmem:[#allocation2 + $0x26] sm:$0x3]
    %v703 = vsel %vm60, %v682, 0
    %v705 = vsel %vm60, %v684, 0
    %707 = vmatprep.subr.mxu0 0.0
    %708 = vmatpush1.msra.mxu0 0.0
    %709 = vmatprep.subr.mxu0 0.0
    %710 = vmatpush1.msra.mxu0 0.0
    %711 = vmatprep.subr.mxu0 0.0
    %712 = vmatpush1.msra.mxu0 0.0
    %713 = vmatprep.subr.mxu0 0.0
    %714 = vmatpush1.msra.mxu0 0.0
    %715 = vmatprep.subr.mxu0 0.0
    %716 = vmatpush1.msra.mxu0 0.0
    %717 = vmatprep.subr.mxu0 0.0
    %718 = vmatpush1.msra.mxu0 0.0
    %719 = vmatprep.subr.mxu0 0.0
    %720 = vmatpush1.msra.mxu0 0.0
    %721 = vmatprep.subr.mxu0 0.0
    %722 = vmatpush1.msra.mxu0 0.0
    %723 = vmatprep.subr.mxu0 0.0
    %724 = vmatpush1.msra.mxu0 0.0
    %725 = vmatprep.subr.mxu0 0.0
    %726 = vmatpush1.msra.mxu0 0.0
    %727 = vmatprep.subr.mxu0 0.0
    %728 = vmatpush1.msra.mxu0 0.0
    %729 = vmatprep.subr.mxu0 0.0
    %730 = vmatpush1.msra.mxu0 0.0
    %731 = vmatprep.subr.mxu0 0.0
    %732 = vmatpush1.msra.mxu0 %v223
    %733 = vmatprep.subr.mxu0 0.0
    %734 = vmatpush1.msra.mxu0 %v222
    %735 = vmatprep.subr.mxu0 0.0
    %736 = vmatpush1.msra.mxu0 %v221
    %737 = vmatprep.subr.mxu0 0.0
    %738 = vmatpush1.msra.mxu0 %v220
    %739 = vmatprep.subr.mxu0 0.0
    %740 = vmatpush2.msra.mxu0 0.0
    %741 = vmatprep.subr.mxu0 0.0
    %742 = vmatpush2.msra.mxu0 0.0
    %743 = vmatprep.subr.mxu0 0.0
    %744 = vmatpush2.msra.mxu0 0.0
    %745 = vmatprep.subr.mxu0 0.0
    %746 = vmatpush2.msra.mxu0 0.0
    %747 = vmatprep.subr.mxu0 0.0
    %748 = vmatpush2.msra.mxu0 0.0
    %749 = vmatprep.subr.mxu0 0.0
    %750 = vmatpush2.msra.mxu0 0.0
    %751 = vmatprep.subr.mxu0 0.0
    %752 = vmatpush2.msra.mxu0 0.0
    %753 = vmatprep.subr.mxu0 0.0
    %754 = vmatpush2.msra.mxu0 0.0
    %755 = vmatprep.subr.mxu0 0.0
    %756 = vmatpush2.msra.mxu0 0.0
    %757 = vmatprep.subr.mxu0 0.0
    %758 = vmatpush2.msra.mxu0 0.0
    %759 = vmatprep.subr.mxu0 0.0
    %760 = vmatpush2.msra.mxu0 0.0
    %761 = vmatprep.subr.mxu0 0.0
    %762 = vmatpush2.msra.mxu0 0.0
    %763 = vmatprep.subr.mxu0 0.0
    %764 = vmatpush2.msra.mxu0 0.0
    %765 = vmatprep.subr.mxu0 0.0
    %766 = vmatpush2.msra.mxu0 0.0
    %767 = vmatprep.subr.mxu0 0.0
    %768 = vmatpush2.msra.mxu0 0.0
    %769 = vmatprep.subr.mxu0 0.0
    %770 = vmatpush2.msra.mxu0 0.0
    %771 = vmatprep.mubr.f32.mxu0 0.0
    %772 = vmatmul.mubr.f32.gmra.mxu0 %v703
    %v773 = vpop.f32.mrf.mxu0
    %v774 = vadd.f32 0.0, %v773
    %v775 = vpop.f32.mrf.mxu0
    %776 = vmatprep.mubr.f32.mxu0 0.0
    %777 = vmatmul.mubr.f32.gmra.mxu0 %v705
    %v778 = vpop.f32.mrf.mxu0
    %v779 = vadd.f32 0.0, %v778
    %v780 = vpop.f32.mrf.mxu0
    %781 = vdwg.mxu0
    %v782 = vadd.f32 %v701, %v774
    %v783 = vadd.f32 %v702, %v779
    %v784 = vxor.u32 %v782, 2147483648
    %v785 = vxor.u32 %v783, 2147483648
    %v786 = vmul.f32 %v784, 1.442695
    %v787 = vpow.pop %v786
    %v788 = vmul.f32 %v785, 1.442695
    %v789 = vpow.pop %v788
    %v790 = vadd.f32 %v787, 1.0
    %v791 = vadd.f32 %v789, 1.0
    %v792 = vrcp.pop %v790
    %v793 = vmul.f32 1.0, %v792
    %v794 = vrcp.pop %v791
    %v795 = vmul.f32 1.0, %v794
    %v796 = vtanh.pop %v782
    %v797 = vtanh.pop %v783
    %v798 = vmul.f32 %v793, %v665
    %v799 = vmul.f32 %v795, %v666
    %802 = vrot.lane.b32.xlu0 %v796, 32
    %v803 = vpop.permute.xlu0 %802
    %804 = vrot.lane.b32.xlu0 %v797, 32
    %v805 = vpop.permute.xlu0 %804
    %v808 = vmul.f32 %v793, %v803
    %v809 = vmul.f32 %v795, %v805
    %812 = vrot.lane.b32.xlu0 %v808, 32
    %v813 = vpop.permute.xlu0 %812
    %814 = vrot.lane.b32.xlu0 %v809, 32
    %v815 = vpop.permute.xlu0 %814
    %v818 = vadd.f32 %v798, %v813
    %v819 = vadd.f32 %v799, %v815
    %v820 = vtanh.pop %v818
    %v821 = vtanh.pop %v819
    %824 = vrot.lane.b32.xlu0 %v820, 32
    %v825 = vpop.permute.xlu0 %824
    %826 = vrot.lane.b32.xlu0 %v821, 32
    %v827 = vpop.permute.xlu0 %826
    %v830 = vmul.f32 %v793, %v825
    %v831 = vmul.f32 %v795, %v827
    %834 = vrot.lane.b32.xlu0 %v830, 64
    %v835 = vpop.permute.xlu0 %834
    %836 = vrot.lane.b32.xlu0 %v831, 64
    %v837 = vpop.permute.xlu0 %836
    %840 = vst.msk [vmem:[#allocation4 + $0x1e] sm:$0xff] %vm373, %v835
    %841 = vst.msk [vmem:[#allocation4 + $0x26] sm:$0x3] %vm375, %v837
    %842 = vrot.lane.b32.xlu0 %v830, 96
    %v843 = vpop.permute.xlu0 %842
    %844 = vrot.lane.b32.xlu0 %v831, 96
    %v845 = vpop.permute.xlu0 %844
    %848 = vst.msk [vmem:[#allocation4 + $0x28] sm:$0xff] %vm383, %v843
    %849 = vst.msk [vmem:[#allocation4 + $0x30] sm:$0x3] %vm385, %v845
    %850 = vst.msk [vmem:[#allocation4 + $0x28] sm:$0xff] %vm387, %v835
    %851 = vst.msk [vmem:[#allocation4 + $0x30] sm:$0x3] %vm389, %v837
    %852 = vst.msk [vmem:[#allocation4 + $0x1e] sm:$0xff] %vm391, %v843
    %853 = vst.msk [vmem:[#allocation4 + $0x26] sm:$0x3] %vm393, %v845
    %v854 = vld [vmem:[#allocation2 + $0x28] sm:$0xff]
    %v855 = vld [vmem:[#allocation2 + $0x30] sm:$0x3]
    %v856 = vsel %vm60, %v835, 0
    %v858 = vsel %vm60, %v837, 0
    %860 = vmatprep.subr.mxu0 0.0
    %861 = vmatpush1.msra.mxu0 0.0
    %862 = vmatprep.subr.mxu0 0.0
    %863 = vmatpush1.msra.mxu0 0.0
    %864 = vmatprep.subr.mxu0 0.0
    %865 = vmatpush1.msra.mxu0 0.0
    %866 = vmatprep.subr.mxu0 0.0
    %867 = vmatpush1.msra.mxu0 0.0
    %868 = vmatprep.subr.mxu0 0.0
    %869 = vmatpush1.msra.mxu0 0.0
    %870 = vmatprep.subr.mxu0 0.0
    %871 = vmatpush1.msra.mxu0 0.0
    %872 = vmatprep.subr.mxu0 0.0
    %873 = vmatpush1.msra.mxu0 0.0
    %874 = vmatprep.subr.mxu0 0.0
    %875 = vmatpush1.msra.mxu0 0.0
    %876 = vmatprep.subr.mxu0 0.0
    %877 = vmatpush1.msra.mxu0 0.0
    %878 = vmatprep.subr.mxu0 0.0
    %879 = vmatpush1.msra.mxu0 0.0
    %880 = vmatprep.subr.mxu0 0.0
    %881 = vmatpush1.msra.mxu0 0.0
    %882 = vmatprep.subr.mxu0 0.0
    %883 = vmatpush1.msra.mxu0 0.0
    %884 = vmatprep.subr.mxu0 0.0
    %885 = vmatpush1.msra.mxu0 %v223
    %886 = vmatprep.subr.mxu0 0.0
    %887 = vmatpush1.msra.mxu0 %v222
    %888 = vmatprep.subr.mxu0 0.0
    %889 = vmatpush1.msra.mxu0 %v221
    %890 = vmatprep.subr.mxu0 0.0
    %891 = vmatpush1.msra.mxu0 %v220
    %892 = vmatprep.subr.mxu0 0.0
    %893 = vmatpush2.msra.mxu0 0.0
    %894 = vmatprep.subr.mxu0 0.0
    %895 = vmatpush2.msra.mxu0 0.0
    %896 = vmatprep.subr.mxu0 0.0
    %897 = vmatpush2.msra.mxu0 0.0
    %898 = vmatprep.subr.mxu0 0.0
    %899 = vmatpush2.msra.mxu0 0.0
    %900 = vmatprep.subr.mxu0 0.0
    %901 = vmatpush2.msra.mxu0 0.0
    %902 = vmatprep.subr.mxu0 0.0
    %903 = vmatpush2.msra.mxu0 0.0
    %904 = vmatprep.subr.mxu0 0.0
    %905 = vmatpush2.msra.mxu0 0.0
    %906 = vmatprep.subr.mxu0 0.0
    %907 = vmatpush2.msra.mxu0 0.0
    %908 = vmatprep.subr.mxu0 0.0
    %909 = vmatpush2.msra.mxu0 0.0
    %910 = vmatprep.subr.mxu0 0.0
    %911 = vmatpush2.msra.mxu0 0.0
    %912 = vmatprep.subr.mxu0 0.0
    %913 = vmatpush2.msra.mxu0 0.0
    %914 = vmatprep.subr.mxu0 0.0
    %915 = vmatpush2.msra.mxu0 0.0
    %916 = vmatprep.subr.mxu0 0.0
    %917 = vmatpush2.msra.mxu0 0.0
    %918 = vmatprep.subr.mxu0 0.0
    %919 = vmatpush2.msra.mxu0 0.0
    %920 = vmatprep.subr.mxu0 0.0
    %921 = vmatpush2.msra.mxu0 0.0
    %922 = vmatprep.subr.mxu0 0.0
    %923 = vmatpush2.msra.mxu0 0.0
    %924 = vmatprep.mubr.f32.mxu0 0.0
    %925 = vmatmul.mubr.f32.gmra.mxu0 %v856
    %v926 = vpop.f32.mrf.mxu0
    %v927 = vadd.f32 0.0, %v926
    %v928 = vpop.f32.mrf.mxu0
    %929 = vmatprep.mubr.f32.mxu0 0.0
    %930 = vmatmul.mubr.f32.gmra.mxu0 %v858
    %v931 = vpop.f32.mrf.mxu0
    %v932 = vadd.f32 0.0, %v931
    %v933 = vpop.f32.mrf.mxu0
    %934 = vdwg.mxu0
    %v935 = vadd.f32 %v854, %v927
    %v936 = vadd.f32 %v855, %v932
    %v937 = vxor.u32 %v935, 2147483648
    %v938 = vxor.u32 %v936, 2147483648
    %v939 = vmul.f32 %v937, 1.442695
    %v940 = vpow.pop %v939
    %v941 = vmul.f32 %v938, 1.442695
    %v942 = vpow.pop %v941
    %v943 = vadd.f32 %v940, 1.0
    %v944 = vadd.f32 %v942, 1.0
    %v945 = vrcp.pop %v943
    %v946 = vmul.f32 1.0, %v945
    %v947 = vrcp.pop %v944
    %v948 = vmul.f32 1.0, %v947
    %v949 = vtanh.pop %v935
    %v950 = vtanh.pop %v936
    %v951 = vmul.f32 %v946, %v818
    %v952 = vmul.f32 %v948, %v819
    %955 = vrot.lane.b32.xlu0 %v949, 32
    %v956 = vpop.permute.xlu0 %955
    %957 = vrot.lane.b32.xlu0 %v950, 32
    %v958 = vpop.permute.xlu0 %957
    %v961 = vmul.f32 %v946, %v956
    %v962 = vmul.f32 %v948, %v958
    %965 = vrot.lane.b32.xlu0 %v961, 32
    %v966 = vpop.permute.xlu0 %965
    %967 = vrot.lane.b32.xlu0 %v962, 32
    %v968 = vpop.permute.xlu0 %967
    %v971 = vadd.f32 %v951, %v966
    %v972 = vadd.f32 %v952, %v968
    %v973 = vtanh.pop %v971
    %v974 = vtanh.pop %v972
    %977 = vrot.lane.b32.xlu0 %v973, 32
    %v978 = vpop.permute.xlu0 %977
    %979 = vrot.lane.b32.xlu0 %v974, 32
    %v980 = vpop.permute.xlu0 %979
    %v983 = vmul.f32 %v946, %v978
    %v984 = vmul.f32 %v948, %v980
    %987 = vrot.lane.b32.xlu0 %v983, 64
    %v988 = vpop.permute.xlu0 %987
    %989 = vrot.lane.b32.xlu0 %v984, 64
    %v990 = vpop.permute.xlu0 %989
    %993 = vst.msk [vmem:[#allocation4 + $0x28] sm:$0xff] %vm373, %v988
    %994 = vst.msk [vmem:[#allocation4 + $0x30] sm:$0x3] %vm375, %v990
    %995 = vrot.lane.b32.xlu0 %v983, 96
    %v996 = vpop.permute.xlu0 %995
    %997 = vrot.lane.b32.xlu0 %v984, 96
    %v998 = vpop.permute.xlu0 %997
    %1001 = vst.msk [vmem:[#allocation4 + $0x1e] sm:$0xff] %vm383, %v996
    %1002 = vst.msk [vmem:[#allocation4 + $0x26] sm:$0x3] %vm385, %v998
    %1003 = vst.msk [vmem:[#allocation4 + $0x1e] sm:$0xff] %vm387, %v988
    %1004 = vst.msk [vmem:[#allocation4 + $0x26] sm:$0x3] %vm389, %v990
    %1005 = vst.msk [vmem:[#allocation4 + $0x28] sm:$0xff] %vm391, %v996
    %1006 = vst.msk [vmem:[#allocation4 + $0x30] sm:$0x3] %vm393, %v998
    %v1007 = vld [vmem:[#allocation2 + $0x32] sm:$0xff]
    %v1008 = vld [vmem:[#allocation2 + $0x3a] sm:$0x3]
    %v1009 = vsel %vm60, %v988, 0
    %v1011 = vsel %vm60, %v990, 0
    %1013 = vmatprep.subr.mxu0 0.0
    %1014 = vmatpush1.msra.mxu0 0.0
    %1015 = vmatprep.subr.mxu0 0.0
    %1016 = vmatpush1.msra.mxu0 0.0
    %1017 = vmatprep.subr.mxu0 0.0
    %1018 = vmatpush1.msra.mxu0 0.0
    %1019 = vmatprep.subr.mxu0 0.0
    %1020 = vmatpush1.msra.mxu0 0.0
    %1021 = vmatprep.subr.mxu0 0.0
    %1022 = vmatpush1.msra.mxu0 0.0
    %1023 = vmatprep.subr.mxu0 0.0
    %1024 = vmatpush1.msra.mxu0 0.0
    %1025 = vmatprep.subr.mxu0 0.0
    %1026 = vmatpush1.msra.mxu0 0.0
    %1027 = vmatprep.subr.mxu0 0.0
    %1028 = vmatpush1.msra.mxu0 0.0
    %1029 = vmatprep.subr.mxu0 0.0
    %1030 = vmatpush1.msra.mxu0 0.0
    %1031 = vmatprep.subr.mxu0 0.0
    %1032 = vmatpush1.msra.mxu0 0.0
    %1033 = vmatprep.subr.mxu0 0.0
    %1034 = vmatpush1.msra.mxu0 0.0
    %1035 = vmatprep.subr.mxu0 0.0
    %1036 = vmatpush1.msra.mxu0 0.0
    %1037 = vmatprep.subr.mxu0 0.0
    %1038 = vmatpush1.msra.mxu0 %v223
    %1039 = vmatprep.subr.mxu0 0.0
    %1040 = vmatpush1.msra.mxu0 %v222
    %1041 = vmatprep.subr.mxu0 0.0
    %1042 = vmatpush1.msra.mxu0 %v221
    %1043 = vmatprep.subr.mxu0 0.0
    %1044 = vmatpush1.msra.mxu0 %v220
    %1045 = vmatprep.subr.mxu0 0.0
    %1046 = vmatpush2.msra.mxu0 0.0
    %1047 = vmatprep.subr.mxu0 0.0
    %1048 = vmatpush2.msra.mxu0 0.0
    %1049 = vmatprep.subr.mxu0 0.0
    %1050 = vmatpush2.msra.mxu0 0.0
    %1051 = vmatprep.subr.mxu0 0.0
    %1052 = vmatpush2.msra.mxu0 0.0
    %1053 = vmatprep.subr.mxu0 0.0
    %1054 = vmatpush2.msra.mxu0 0.0
    %1055 = vmatprep.subr.mxu0 0.0
    %1056 = vmatpush2.msra.mxu0 0.0
    %1057 = vmatprep.subr.mxu0 0.0
    %1058 = vmatpush2.msra.mxu0 0.0
    %1059 = vmatprep.subr.mxu0 0.0
    %1060 = vmatpush2.msra.mxu0 0.0
    %1061 = vmatprep.subr.mxu0 0.0
    %1062 = vmatpush2.msra.mxu0 0.0
    %1063 = vmatprep.subr.mxu0 0.0
    %1064 = vmatpush2.msra.mxu0 0.0
    %1065 = vmatprep.subr.mxu0 0.0
    %1066 = vmatpush2.msra.mxu0 0.0
    %1067 = vmatprep.subr.mxu0 0.0
    %1068 = vmatpush2.msra.mxu0 0.0
    %1069 = vmatprep.subr.mxu0 0.0
    %1070 = vmatpush2.msra.mxu0 0.0
    %1071 = vmatprep.subr.mxu0 0.0
    %1072 = vmatpush2.msra.mxu0 0.0
    %1073 = vmatprep.subr.mxu0 0.0
    %1074 = vmatpush2.msra.mxu0 0.0
    %1075 = vmatprep.subr.mxu0 0.0
    %1076 = vmatpush2.msra.mxu0 0.0
    %1077 = vmatprep.mubr.f32.mxu0 0.0
    %1078 = vmatmul.mubr.f32.gmra.mxu0 %v1009
    %v1079 = vpop.f32.mrf.mxu0
    %v1080 = vadd.f32 0.0, %v1079
    %v1081 = vpop.f32.mrf.mxu0
    %1082 = vmatprep.mubr.f32.mxu0 0.0
    %1083 = vmatmul.mubr.f32.gmra.mxu0 %v1011
    %v1084 = vpop.f32.mrf.mxu0
    %v1085 = vadd.f32 0.0, %v1084
    %v1086 = vpop.f32.mrf.mxu0
    %1087 = vdwg.mxu0
    %v1088 = vadd.f32 %v1007, %v1080
    %v1089 = vadd.f32 %v1008, %v1085
    %v1090 = vxor.u32 %v1088, 2147483648
    %v1091 = vxor.u32 %v1089, 2147483648
    %v1092 = vmul.f32 %v1090, 1.442695
    %v1093 = vpow.pop %v1092
    %v1094 = vmul.f32 %v1091, 1.442695
    %v1095 = vpow.pop %v1094
    %v1096 = vadd.f32 %v1093, 1.0
    %v1097 = vadd.f32 %v1095, 1.0
    %v1098 = vrcp.pop %v1096
    %v1099 = vmul.f32 1.0, %v1098
    %v1100 = vrcp.pop %v1097
    %v1101 = vmul.f32 1.0, %v1100
    %v1102 = vtanh.pop %v1088
    %v1103 = vtanh.pop %v1089
    %v1104 = vmul.f32 %v1099, %v971
    %v1105 = vmul.f32 %v1101, %v972
    %1108 = vrot.lane.b32.xlu0 %v1102, 32
    %v1109 = vpop.permute.xlu0 %1108
    %1110 = vrot.lane.b32.xlu0 %v1103, 32
    %v1111 = vpop.permute.xlu0 %1110
    %v1114 = vmul.f32 %v1099, %v1109
    %v1115 = vmul.f32 %v1101, %v1111
    %1118 = vrot.lane.b32.xlu0 %v1114, 32
    %v1119 = vpop.permute.xlu0 %1118
    %1120 = vrot.lane.b32.xlu0 %v1115, 32
    %v1121 = vpop.permute.xlu0 %1120
    %v1124 = vadd.f32 %v1104, %v1119
    %v1125 = vadd.f32 %v1105, %v1121
    %v1126 = vtanh.pop %v1124
    %v1127 = vtanh.pop %v1125
    %1130 = vrot.lane.b32.xlu0 %v1126, 32
    %v1131 = vpop.permute.xlu0 %1130
    %1132 = vrot.lane.b32.xlu0 %v1127, 32
    %v1133 = vpop.permute.xlu0 %1132
    %v1136 = vmul.f32 %v1099, %v1131
    %v1137 = vmul.f32 %v1101, %v1133
    %1140 = vrot.lane.b32.xlu0 %v1136, 64
    %v1141 = vpop.permute.xlu0 %1140
    %1142 = vrot.lane.b32.xlu0 %v1137, 64
    %v1143 = vpop.permute.xlu0 %1142
    %1146 = vst.msk [vmem:[#allocation4 + $0x32] sm:$0xff] %vm373, %v1141
    %1147 = vst.msk [vmem:[#allocation4 + $0x3a] sm:$0x3] %vm375, %v1143
    %1148 = vrot.lane.b32.xlu0 %v1136, 96
    %v1149 = vpop.permute.xlu0 %1148
    %1150 = vrot.lane.b32.xlu0 %v1137, 96
    %v1151 = vpop.permute.xlu0 %1150
    %1154 = vst.msk [vmem:[#allocation4 + $0x14] sm:$0xff] %vm383, %v1149
    %1155 = vst.msk [vmem:[#allocation4 + $0x1c] sm:$0x3] %vm385, %v1151
    %1156 = vst.msk [vmem:[#allocation4 + $0x14] sm:$0xff] %vm387, %v1141
    %1157 = vst.msk [vmem:[#allocation4 + $0x1c] sm:$0x3] %vm389, %v1143
    %1158 = vst.msk [vmem:[#allocation4 + $0x32] sm:$0xff] %vm391, %v1149
    %1159 = vst.msk [vmem:[#allocation4 + $0x3a] sm:$0x3] %vm393, %v1151
    %v1160 = vld [vmem:[#allocation2 + $0x3c] sm:$0xff]
    %v1161 = vld [vmem:[#allocation2 + $0x44] sm:$0x3]
    %v1162 = vsel %vm60, %v1141, 0
    %v1164 = vsel %vm60, %v1143, 0
    %1166 = vmatprep.subr.mxu0 0.0
    %1167 = vmatpush1.msra.mxu0 0.0
    %1168 = vmatprep.subr.mxu0 0.0
    %1169 = vmatpush1.msra.mxu0 0.0
    %1170 = vmatprep.subr.mxu0 0.0
    %1171 = vmatpush1.msra.mxu0 0.0
    %1172 = vmatprep.subr.mxu0 0.0
    %1173 = vmatpush1.msra.mxu0 0.0
    %1174 = vmatprep.subr.mxu0 0.0
    %1175 = vmatpush1.msra.mxu0 0.0
    %1176 = vmatprep.subr.mxu0 0.0
    %1177 = vmatpush1.msra.mxu0 0.0
    %1178 = vmatprep.subr.mxu0 0.0
    %1179 = vmatpush1.msra.mxu0 0.0
    %1180 = vmatprep.subr.mxu0 0.0
    %1181 = vmatpush1.msra.mxu0 0.0
    %1182 = vmatprep.subr.mxu0 0.0
    %1183 = vmatpush1.msra.mxu0 0.0
    %1184 = vmatprep.subr.mxu0 0.0
    %1185 = vmatpush1.msra.mxu0 0.0
    %1186 = vmatprep.subr.mxu0 0.0
    %1187 = vmatpush1.msra.mxu0 0.0
    %1188 = vmatprep.subr.mxu0 0.0
    %1189 = vmatpush1.msra.mxu0 0.0
    %1190 = vmatprep.subr.mxu0 0.0
    %1191 = vmatpush1.msra.mxu0 %v223
    %1192 = vmatprep.subr.mxu0 0.0
    %1193 = vmatpush1.msra.mxu0 %v222
    %1194 = vmatprep.subr.mxu0 0.0
    %1195 = vmatpush1.msra.mxu0 %v221
    %1196 = vmatprep.subr.mxu0 0.0
    %1197 = vmatpush1.msra.mxu0 %v220
    %1198 = vmatprep.subr.mxu0 0.0
    %1199 = vmatpush2.msra.mxu0 0.0
    %1200 = vmatprep.subr.mxu0 0.0
    %1201 = vmatpush2.msra.mxu0 0.0
    %1202 = vmatprep.subr.mxu0 0.0
    %1203 = vmatpush2.msra.mxu0 0.0
    %1204 = vmatprep.subr.mxu0 0.0
    %1205 = vmatpush2.msra.mxu0 0.0
    %1206 = vmatprep.subr.mxu0 0.0
    %1207 = vmatpush2.msra.mxu0 0.0
    %1208 = vmatprep.subr.mxu0 0.0
    %1209 = vmatpush2.msra.mxu0 0.0
    %1210 = vmatprep.subr.mxu0 0.0
    %1211 = vmatpush2.msra.mxu0 0.0
    %1212 = vmatprep.subr.mxu0 0.0
    %1213 = vmatpush2.msra.mxu0 0.0
    %1214 = vmatprep.subr.mxu0 0.0
    %1215 = vmatpush2.msra.mxu0 0.0
    %1216 = vmatprep.subr.mxu0 0.0
    %1217 = vmatpush2.msra.mxu0 0.0
    %1218 = vmatprep.subr.mxu0 0.0
    %1219 = vmatpush2.msra.mxu0 0.0
    %1220 = vmatprep.subr.mxu0 0.0
    %1221 = vmatpush2.msra.mxu0 0.0
    %1222 = vmatprep.subr.mxu0 0.0
    %1223 = vmatpush2.msra.mxu0 0.0
    %1224 = vmatprep.subr.mxu0 0.0
    %1225 = vmatpush2.msra.mxu0 0.0
    %1226 = vmatprep.subr.mxu0 0.0
    %1227 = vmatpush2.msra.mxu0 0.0
    %1228 = vmatprep.subr.mxu0 0.0
    %1229 = vmatpush2.msra.mxu0 0.0
    %1230 = vmatprep.mubr.f32.mxu0 0.0
    %1231 = vmatmul.mubr.f32.gmra.mxu0 %v1162
    %v1232 = vpop.f32.mrf.mxu0
    %v1233 = vadd.f32 0.0, %v1232
    %v1234 = vpop.f32.mrf.mxu0
    %1235 = vmatprep.mubr.f32.mxu0 0.0
    %1236 = vmatmul.mubr.f32.gmra.mxu0 %v1164
    %v1237 = vpop.f32.mrf.mxu0
    %v1238 = vadd.f32 0.0, %v1237
    %v1239 = vpop.f32.mrf.mxu0
    %1240 = vdwg.mxu0
    %v1241 = vadd.f32 %v1160, %v1233
    %v1242 = vadd.f32 %v1161, %v1238
    %v1243 = vxor.u32 %v1241, 2147483648
    %v1244 = vxor.u32 %v1242, 2147483648
    %v1245 = vmul.f32 %v1243, 1.442695
    %v1246 = vpow.pop %v1245
    %v1247 = vmul.f32 %v1244, 1.442695
    %v1248 = vpow.pop %v1247
    %v1249 = vadd.f32 %v1246, 1.0
    %v1250 = vadd.f32 %v1248, 1.0
    %v1251 = vrcp.pop %v1249
    %v1252 = vmul.f32 1.0, %v1251
    %v1253 = vrcp.pop %v1250
    %v1254 = vmul.f32 1.0, %v1253
    %v1255 = vtanh.pop %v1241
    %v1256 = vtanh.pop %v1242
    %v1257 = vmul.f32 %v1252, %v1124
    %v1258 = vmul.f32 %v1254, %v1125
    %1261 = vrot.lane.b32.xlu0 %v1255, 32
    %v1262 = vpop.permute.xlu0 %1261
    %1263 = vrot.lane.b32.xlu0 %v1256, 32
    %v1264 = vpop.permute.xlu0 %1263
    %v1267 = vmul.f32 %v1252, %v1262
    %v1268 = vmul.f32 %v1254, %v1264
    %1271 = vrot.lane.b32.xlu0 %v1267, 32
    %v1272 = vpop.permute.xlu0 %1271
    %1273 = vrot.lane.b32.xlu0 %v1268, 32
    %v1274 = vpop.permute.xlu0 %1273
    %v1277 = vadd.f32 %v1257, %v1272
    %v1278 = vadd.f32 %v1258, %v1274
    %v1279 = vtanh.pop %v1277
    %v1280 = vtanh.pop %v1278
    %1283 = vrot.lane.b32.xlu0 %v1279, 32
    %v1284 = vpop.permute.xlu0 %1283
    %1285 = vrot.lane.b32.xlu0 %v1280, 32
    %v1286 = vpop.permute.xlu0 %1285
    %v1289 = vmul.f32 %v1252, %v1284
    %v1290 = vmul.f32 %v1254, %v1286
    %1293 = vrot.lane.b32.xlu0 %v1289, 64
    %v1294 = vpop.permute.xlu0 %1293
    %1295 = vrot.lane.b32.xlu0 %v1290, 64
    %v1296 = vpop.permute.xlu0 %1295
    %1299 = vst.msk [vmem:[#allocation4 + $0x3c] sm:$0xff] %vm373, %v1294
    %1300 = vst.msk [vmem:[#allocation4 + $0x44] sm:$0x3] %vm375, %v1296
    %1301 = vrot.lane.b32.xlu0 %v1289, 96
    %v1302 = vpop.permute.xlu0 %1301
    %1303 = vrot.lane.b32.xlu0 %v1290, 96
    %v1304 = vpop.permute.xlu0 %1303
    %1307 = vst.msk [vmem:[#allocation4 + $0xa] sm:$0xff] %vm383, %v1302
    %1308 = vst.msk [vmem:[#allocation4 + $0x12] sm:$0x3] %vm385, %v1304
    %1309 = vst.msk [vmem:[#allocation4 + $0xa] sm:$0xff] %vm387, %v1294
    %1310 = vst.msk [vmem:[#allocation4 + $0x12] sm:$0x3] %vm389, %v1296
    %1311 = vst.msk [vmem:[#allocation4 + $0x3c] sm:$0xff] %vm391, %v1302
    %1312 = vst.msk [vmem:[#allocation4 + $0x44] sm:$0x3] %vm393, %v1304
    %v1313 = vld [vmem:[#allocation2 + $0x46] sm:$0xff]
    %v1314 = vld [vmem:[#allocation2 + $0x4e] sm:$0x3]
    %v1315 = vsel %vm60, %v1294, 0
    %v1317 = vsel %vm60, %v1296, 0
    %1319 = vmatprep.subr.mxu0 0.0
    %1320 = vmatpush1.msra.mxu0 0.0
    %1321 = vmatprep.subr.mxu0 0.0
    %1322 = vmatpush1.msra.mxu0 0.0
    %1323 = vmatprep.subr.mxu0 0.0
    %1324 = vmatpush1.msra.mxu0 0.0
    %1325 = vmatprep.subr.mxu0 0.0
    %1326 = vmatpush1.msra.mxu0 0.0
    %1327 = vmatprep.subr.mxu0 0.0
    %1328 = vmatpush1.msra.mxu0 0.0
    %1329 = vmatprep.subr.mxu0 0.0
    %1330 = vmatpush1.msra.mxu0 0.0
    %1331 = vmatprep.subr.mxu0 0.0
    %1332 = vmatpush1.msra.mxu0 0.0
    %1333 = vmatprep.subr.mxu0 0.0
    %1334 = vmatpush1.msra.mxu0 0.0
    %1335 = vmatprep.subr.mxu0 0.0
    %1336 = vmatpush1.msra.mxu0 0.0
    %1337 = vmatprep.subr.mxu0 0.0
    %1338 = vmatpush1.msra.mxu0 0.0
    %1339 = vmatprep.subr.mxu0 0.0
    %1340 = vmatpush1.msra.mxu0 0.0
    %1341 = vmatprep.subr.mxu0 0.0
    %1342 = vmatpush1.msra.mxu0 0.0
    %1343 = vmatprep.subr.mxu0 0.0
    %1344 = vmatpush1.msra.mxu0 %v223
    %1345 = vmatprep.subr.mxu0 0.0
    %1346 = vmatpush1.msra.mxu0 %v222
    %1347 = vmatprep.subr.mxu0 0.0
    %1348 = vmatpush1.msra.mxu0 %v221
    %1349 = vmatprep.subr.mxu0 0.0
    %1350 = vmatpush1.msra.mxu0 %v220
    %1351 = vmatprep.subr.mxu0 0.0
    %1352 = vmatpush2.msra.mxu0 0.0
    %1353 = vmatprep.subr.mxu0 0.0
    %1354 = vmatpush2.msra.mxu0 0.0
    %1355 = vmatprep.subr.mxu0 0.0
    %1356 = vmatpush2.msra.mxu0 0.0
    %1357 = vmatprep.subr.mxu0 0.0
    %1358 = vmatpush2.msra.mxu0 0.0
    %1359 = vmatprep.subr.mxu0 0.0
    %1360 = vmatpush2.msra.mxu0 0.0
    %1361 = vmatprep.subr.mxu0 0.0
    %1362 = vmatpush2.msra.mxu0 0.0
    %1363 = vmatprep.subr.mxu0 0.0
    %1364 = vmatpush2.msra.mxu0 0.0
    %1365 = vmatprep.subr.mxu0 0.0
    %1366 = vmatpush2.msra.mxu0 0.0
    %1367 = vmatprep.subr.mxu0 0.0
    %1368 = vmatpush2.msra.mxu0 0.0
    %1369 = vmatprep.subr.mxu0 0.0
    %1370 = vmatpush2.msra.mxu0 0.0
    %1371 = vmatprep.subr.mxu0 0.0
    %1372 = vmatpush2.msra.mxu0 0.0
    %1373 = vmatprep.subr.mxu0 0.0
    %1374 = vmatpush2.msra.mxu0 0.0
    %1375 = vmatprep.subr.mxu0 0.0
    %1376 = vmatpush2.msra.mxu0 0.0
    %1377 = vmatprep.subr.mxu0 0.0
    %1378 = vmatpush2.msra.mxu0 0.0
    %1379 = vmatprep.subr.mxu0 0.0
    %1380 = vmatpush2.msra.mxu0 0.0
    %1381 = vmatprep.subr.mxu0 0.0
    %1382 = vmatpush2.msra.mxu0 0.0
    %1383 = vmatprep.mubr.f32.mxu0 0.0
    %1384 = vmatmul.mubr.f32.gmra.mxu0 %v1315
    %v1385 = vpop.f32.mrf.mxu0
    %v1386 = vadd.f32 0.0, %v1385
    %v1387 = vpop.f32.mrf.mxu0
    %1388 = vmatprep.mubr.f32.mxu0 0.0
    %1389 = vmatmul.mubr.f32.gmra.mxu0 %v1317
    %v1390 = vpop.f32.mrf.mxu0
    %v1391 = vadd.f32 0.0, %v1390
    %v1392 = vpop.f32.mrf.mxu0
    %1393 = vdwg.mxu0
    %v1394 = vadd.f32 %v1313, %v1386
    %v1395 = vadd.f32 %v1314, %v1391
    %v1396 = vxor.u32 %v1394, 2147483648
    %v1397 = vxor.u32 %v1395, 2147483648
    %v1398 = vmul.f32 %v1396, 1.442695
    %v1399 = vpow.pop %v1398
    %v1400 = vmul.f32 %v1397, 1.442695
    %v1401 = vpow.pop %v1400
    %v1402 = vadd.f32 %v1399, 1.0
    %v1403 = vadd.f32 %v1401, 1.0
    %v1404 = vrcp.pop %v1402
    %v1405 = vmul.f32 1.0, %v1404
    %v1406 = vrcp.pop %v1403
    %v1407 = vmul.f32 1.0, %v1406
    %v1408 = vtanh.pop %v1394
    %v1409 = vtanh.pop %v1395
    %v1410 = vmul.f32 %v1405, %v1277
    %v1411 = vmul.f32 %v1407, %v1278
    %1414 = vrot.lane.b32.xlu0 %v1408, 32
    %v1415 = vpop.permute.xlu0 %1414
    %1416 = vrot.lane.b32.xlu0 %v1409, 32
    %v1417 = vpop.permute.xlu0 %1416
    %v1420 = vmul.f32 %v1405, %v1415
    %v1421 = vmul.f32 %v1407, %v1417
    %1424 = vrot.lane.b32.xlu0 %v1420, 32
    %v1425 = vpop.permute.xlu0 %1424
    %1426 = vrot.lane.b32.xlu0 %v1421, 32
    %v1427 = vpop.permute.xlu0 %1426
    %v1430 = vadd.f32 %v1410, %v1425
    %v1431 = vadd.f32 %v1411, %v1427
    %v1432 = vtanh.pop %v1430
    %v1433 = vtanh.pop %v1431
    %1436 = vrot.lane.b32.xlu0 %v1432, 32
    %v1437 = vpop.permute.xlu0 %1436
    %1438 = vrot.lane.b32.xlu0 %v1433, 32
    %v1439 = vpop.permute.xlu0 %1438
    %v1442 = vmul.f32 %v1405, %v1437
    %v1443 = vmul.f32 %v1407, %v1439
    %1446 = vrot.lane.b32.xlu0 %v1442, 64
    %v1447 = vpop.permute.xlu0 %1446
    %1448 = vrot.lane.b32.xlu0 %v1443, 64
    %v1449 = vpop.permute.xlu0 %1448
    %1452 = vst.msk [vmem:[#allocation4 + $0x46] sm:$0xff] %vm373, %v1447
    %1453 = vst.msk [vmem:[#allocation4 + $0x4e] sm:$0x3] %vm375, %v1449
    %1454 = vrot.lane.b32.xlu0 %v1442, 96
    %v1455 = vpop.permute.xlu0 %1454
    %1456 = vrot.lane.b32.xlu0 %v1443, 96
    %v1457 = vpop.permute.xlu0 %1456
    %1460 = vst.msk [vmem:[#allocation4] sm:$0xff] %vm383, %v1455
    %1461 = vst.msk [vmem:[#allocation4 + $0x8] sm:$0x3] %vm385, %v1457
    %1462 = vst.msk [vmem:[#allocation4] sm:$0xff] %vm387, %v1447
    %1463 = vst.msk [vmem:[#allocation4 + $0x8] sm:$0x3] %vm389, %v1449
    %1464 = vst.msk [vmem:[#allocation4 + $0x46] sm:$0xff] %vm391, %v1455
    %1465 = vst.msk [vmem:[#allocation4 + $0x4e] sm:$0x3] %vm393, %v1457
    %v1466 = vld [vmem:[#allocation4] sm:$0xff]
    %v1467 = vld [vmem:[#allocation4 + $0x8] sm:$0xff]
    %v1468 = vld [vmem:[#allocation4 + $0x10] sm:$0xff]
    %v1469 = vld [vmem:[#allocation4 + $0x18] sm:$0xff]
    %v1470 = vld [vmem:[#allocation4 + $0x20] sm:$0xff]
    %v1471 = vld [vmem:[#allocation4 + $0x28] sm:$0xff]
    %v1472 = vld [vmem:[#allocation4 + $0x30] sm:$0xff]
    %v1473 = vld [vmem:[#allocation4 + $0x38] sm:$0xff]
    %v1474 = vld [vmem:[#allocation4 + $0x40] sm:$0xff]
    %v1475 = vld [vmem:[#allocation4 + $0x48] sm:$0xff]
    %v1476 = vld [vmem:[%s4] sm:$0xff]
    %v1477 = vld [vmem:[%s4 + $0x8] sm:$0xff]
    %v1478 = vld [vmem:[%s4 + $0x10] sm:$0xff]
    %v1479 = vld [vmem:[%s4 + $0x18] sm:$0xff]
    %v1480 = vld [vmem:[%s4 + $0x20] sm:$0xff]
    %v1481 = vld [vmem:[%s4 + $0x28] sm:$0xff]
    %v1482 = vld [vmem:[%s4 + $0x30] sm:$0xff]
    %v1483 = vld [vmem:[%s4 + $0x38] sm:$0xff]
    %v1484 = vld [vmem:[%s6] sm:$0x1]
    %v1486 = vlaneseq
    %v1487 = vshrl.u32 %v1486, 7
    %v1488 = vsub.s32 0, %v1487
    %v1489 = vrot.slane %v1484, %v1488
    %vm1491 = vcmask 523264
    %v1493 = vsel %vm1491, %v1466, 0
    %v1496 = vsel %vm1491, %v1467, 0
    %v1499 = vsel %vm1491, %v1468, 0
    %v1502 = vsel %vm1491, %v1469, 0
    %v1505 = vsel %vm1491, %v1470, 0
    %v1508 = vsel %vm1491, %v1471, 0
    %v1511 = vsel %vm1491, %v1472, 0
    %v1514 = vsel %vm1491, %v1473, 0
    %v1517 = vsel %vm1491, %v1474, 0
    %v1520 = vsel %vm1491, %v1475, 0
    %1522 = vmatprep.subr.mxu0 0.0
    %1523 = vmatpush1.msra.mxu0 0.0
    %1524 = vmatprep.subr.mxu0 0.0
    %1525 = vmatpush1.msra.mxu0 0.0
    %1526 = vmatprep.subr.mxu0 0.0
    %1527 = vmatpush1.msra.mxu0 0.0
    %1528 = vmatprep.subr.mxu0 0.0
    %1529 = vmatpush1.msra.mxu0 0.0
    %1530 = vmatprep.subr.mxu0 0.0
    %1531 = vmatpush1.msra.mxu0 0.0
    %1532 = vmatprep.subr.mxu0 0.0
    %1533 = vmatpush1.msra.mxu0 0.0
    %1534 = vmatprep.subr.mxu0 0.0
    %1535 = vmatpush1.msra.mxu0 0.0
    %1536 = vmatprep.subr.mxu0 0.0
    %1537 = vmatpush1.msra.mxu0 0.0
    %1538 = vmatprep.subr.mxu0 0.0
    %1539 = vmatpush1.msra.mxu0 %v1483
    %1540 = vmatprep.subr.mxu0 0.0
    %1541 = vmatpush1.msra.mxu0 %v1482
    %1542 = vmatprep.subr.mxu0 0.0
    %1543 = vmatpush1.msra.mxu0 %v1481
    %1544 = vmatprep.subr.mxu0 0.0
    %1545 = vmatpush1.msra.mxu0 %v1480
    %1546 = vmatprep.subr.mxu0 0.0
    %1547 = vmatpush1.msra.mxu0 %v1479
    %1548 = vmatprep.subr.mxu0 0.0
    %1549 = vmatpush1.msra.mxu0 %v1478
    %1550 = vmatprep.subr.mxu0 0.0
    %1551 = vmatpush1.msra.mxu0 %v1477
    %1552 = vmatprep.subr.mxu0 0.0
    %1553 = vmatpush1.msra.mxu0 %v1476
    %1554 = vmatprep.subr.mxu0 0.0
    %1555 = vmatpush2.msra.mxu0 0.0
    %1556 = vmatprep.subr.mxu0 0.0
    %1557 = vmatpush2.msra.mxu0 0.0
    %1558 = vmatprep.subr.mxu0 0.0
    %1559 = vmatpush2.msra.mxu0 0.0
    %1560 = vmatprep.subr.mxu0 0.0
    %1561 = vmatpush2.msra.mxu0 0.0
    %1562 = vmatprep.subr.mxu0 0.0
    %1563 = vmatpush2.msra.mxu0 0.0
    %1564 = vmatprep.subr.mxu0 0.0
    %1565 = vmatpush2.msra.mxu0 0.0
    %1566 = vmatprep.subr.mxu0 0.0
    %1567 = vmatpush2.msra.mxu0 0.0
    %1568 = vmatprep.subr.mxu0 0.0
    %1569 = vmatpush2.msra.mxu0 0.0
    %1570 = vmatprep.subr.mxu0 0.0
    %1571 = vmatpush2.msra.mxu0 0.0
    %1572 = vmatprep.subr.mxu0 0.0
    %1573 = vmatpush2.msra.mxu0 0.0
    %1574 = vmatprep.subr.mxu0 0.0
    %1575 = vmatpush2.msra.mxu0 0.0
    %1576 = vmatprep.subr.mxu0 0.0
    %1577 = vmatpush2.msra.mxu0 0.0
    %1578 = vmatprep.subr.mxu0 0.0
    %1579 = vmatpush2.msra.mxu0 0.0
    %1580 = vmatprep.subr.mxu0 0.0
    %1581 = vmatpush2.msra.mxu0 0.0
    %1582 = vmatprep.subr.mxu0 0.0
    %1583 = vmatpush2.msra.mxu0 0.0
    %1584 = vmatprep.subr.mxu0 0.0
    %1585 = vmatpush2.msra.mxu0 0.0
    %1586 = vmatprep.mubr.f32.mxu0 0.0
    %1587 = vmatmul.mubr.f32.gmra.mxu0 %v1493
    %v1588 = vpop.f32.mrf.mxu0
    %v1589 = vadd.f32 %v1489, %v1588
    %v1590 = vpop.f32.mrf.mxu0
    %1591 = vmatprep.mubr.f32.mxu0 0.0
    %1592 = vmatmul.mubr.f32.gmra.mxu0 %v1496
    %v1593 = vpop.f32.mrf.mxu0
    %v1594 = vadd.f32 %v1489, %v1593
    %v1595 = vpop.f32.mrf.mxu0
    %1596 = vmatprep.mubr.f32.mxu0 0.0
    %1597 = vmatmul.mubr.f32.gmra.mxu0 %v1499
    %v1598 = vpop.f32.mrf.mxu0
    %v1599 = vadd.f32 %v1489, %v1598
    %v1600 = vpop.f32.mrf.mxu0
    %1601 = vmatprep.mubr.f32.mxu0 0.0
    %1602 = vmatmul.mubr.f32.gmra.mxu0 %v1502
    %v1603 = vpop.f32.mrf.mxu0
    %v1604 = vadd.f32 %v1489, %v1603
    %v1605 = vpop.f32.mrf.mxu0
    %1606 = vmatprep.mubr.f32.mxu0 0.0
    %1607 = vmatmul.mubr.f32.gmra.mxu0 %v1505
    %v1608 = vpop.f32.mrf.mxu0
    %v1609 = vadd.f32 %v1489, %v1608
    %v1610 = vpop.f32.mrf.mxu0
    %1611 = vmatprep.mubr.f32.mxu0 0.0
    %1612 = vmatmul.mubr.f32.gmra.mxu0 %v1508
    %v1613 = vpop.f32.mrf.mxu0
    %v1614 = vadd.f32 %v1489, %v1613
    %v1615 = vpop.f32.mrf.mxu0
    %1616 = vmatprep.mubr.f32.mxu0 0.0
    %1617 = vmatmul.mubr.f32.gmra.mxu0 %v1511
    %v1618 = vpop.f32.mrf.mxu0
    %v1619 = vadd.f32 %v1489, %v1618
    %v1620 = vpop.f32.mrf.mxu0
    %1621 = vmatprep.mubr.f32.mxu0 0.0
    %1622 = vmatmul.mubr.f32.gmra.mxu0 %v1514
    %v1623 = vpop.f32.mrf.mxu0
    %v1624 = vadd.f32 %v1489, %v1623
    %v1625 = vpop.f32.mrf.mxu0
    %1626 = vmatprep.mubr.f32.mxu0 0.0
    %1627 = vmatmul.mubr.f32.gmra.mxu0 %v1517
    %v1628 = vpop.f32.mrf.mxu0
    %v1629 = vadd.f32 %v1489, %v1628
    %v1630 = vpop.f32.mrf.mxu0
    %1631 = vmatprep.mubr.f32.mxu0 0.0
    %1632 = vmatmul.mubr.f32.gmra.mxu0 %v1520
    %v1633 = vpop.f32.mrf.mxu0
    %v1634 = vadd.f32 %v1489, %v1633
    %v1635 = vpop.f32.mrf.mxu0
    %1636 = vdwg.mxu0
    %1637 = vst [vmem:[#allocation3] sm:$0xff] %v1589
    %1638 = vst [vmem:[#allocation3 + $0x8] sm:$0xff] %v1594
    %1639 = vst [vmem:[#allocation3 + $0x10] sm:$0xff] %v1599
    %1640 = vst [vmem:[#allocation3 + $0x18] sm:$0xff] %v1604
    %1641 = vst [vmem:[#allocation3 + $0x20] sm:$0xff] %v1609
    %1642 = vst [vmem:[#allocation3 + $0x28] sm:$0xff] %v1614
    %1643 = vst [vmem:[#allocation3 + $0x30] sm:$0xff] %v1619
    %1644 = vst [vmem:[#allocation3 + $0x38] sm:$0xff] %v1624
    %1645 = vst [vmem:[#allocation3 + $0x40] sm:$0xff] %v1629
    %1646 = vst [vmem:[#allocation3 + $0x48] sm:$0xff] %v1634
    %s1647 = scalar_lea.vmem %s9, 16
    %v1648 = vld [vmem:[%s1647] sm:$0xff]
    %v1649 = vld [vmem:[%s1647 + $0x8] sm:$0x3]
    %s1650 = scalar_lea.vmem %s10, 16
    %v1651 = vld [vmem:[%s1650] sm:$0xff]
    %v1652 = vld [vmem:[%s1650 + $0x8] sm:$0x3]
    %v1653 = vld [vmem:[%s5] sm:$0xff]
    %v1654 = vld [vmem:[%s5 + $0x8] sm:$0xff]
    %v1655 = vld [vmem:[%s5 + $0x10] sm:$0xff]
    %v1656 = vld [vmem:[%s5 + $0x18] sm:$0xff]
    %v1657 = vld [vmem:[#allocation3] sm:$0xff]
    %v1658 = vld [vmem:[#allocation3 + $0x8] sm:$0x3]
    %v1660 = vsel %vm60, %v1648, 0
    %v1663 = vsel %vm60, %v1649, 0
    %1665 = vmatprep.subr.mxu0 0.0
    %1666 = vmatpush1.msra.mxu0 0.0
    %1667 = vmatprep.subr.mxu0 0.0
    %1668 = vmatpush1.msra.mxu0 0.0
    %1669 = vmatprep.subr.mxu0 0.0
    %1670 = vmatpush1.msra.mxu0 0.0
    %1671 = vmatprep.subr.mxu0 0.0
    %1672 = vmatpush1.msra.mxu0 0.0
    %1673 = vmatprep.subr.mxu0 0.0
    %1674 = vmatpush1.msra.mxu0 0.0
    %1675 = vmatprep.subr.mxu0 0.0
    %1676 = vmatpush1.msra.mxu0 0.0
    %1677 = vmatprep.subr.mxu0 0.0
    %1678 = vmatpush1.msra.mxu0 0.0
    %1679 = vmatprep.subr.mxu0 0.0
    %1680 = vmatpush1.msra.mxu0 0.0
    %1681 = vmatprep.subr.mxu0 0.0
    %1682 = vmatpush1.msra.mxu0 0.0
    %1683 = vmatprep.subr.mxu0 0.0
    %1684 = vmatpush1.msra.mxu0 0.0
    %1685 = vmatprep.subr.mxu0 0.0
    %1686 = vmatpush1.msra.mxu0 0.0
    %1687 = vmatprep.subr.mxu0 0.0
    %1688 = vmatpush1.msra.mxu0 0.0
    %1689 = vmatprep.subr.mxu0 0.0
    %1690 = vmatpush1.msra.mxu0 %v1656
    %1691 = vmatprep.subr.mxu0 0.0
    %1692 = vmatpush1.msra.mxu0 %v1655
    %1693 = vmatprep.subr.mxu0 0.0
    %1694 = vmatpush1.msra.mxu0 %v1654
    %1695 = vmatprep.subr.mxu0 0.0
    %1696 = vmatpush1.msra.mxu0 %v1653
    %1697 = vmatprep.subr.mxu0 0.0
    %1698 = vmatpush2.msra.mxu0 0.0
    %1699 = vmatprep.subr.mxu0 0.0
    %1700 = vmatpush2.msra.mxu0 0.0
    %1701 = vmatprep.subr.mxu0 0.0
    %1702 = vmatpush2.msra.mxu0 0.0
    %1703 = vmatprep.subr.mxu0 0.0
    %1704 = vmatpush2.msra.mxu0 0.0
    %1705 = vmatprep.subr.mxu0 0.0
    %1706 = vmatpush2.msra.mxu0 0.0
    %1707 = vmatprep.subr.mxu0 0.0
    %1708 = vmatpush2.msra.mxu0 0.0
    %1709 = vmatprep.subr.mxu0 0.0
    %1710 = vmatpush2.msra.mxu0 0.0
    %1711 = vmatprep.subr.mxu0 0.0
    %1712 = vmatpush2.msra.mxu0 0.0
    %1713 = vmatprep.subr.mxu0 0.0
    %1714 = vmatpush2.msra.mxu0 0.0
    %1715 = vmatprep.subr.mxu0 0.0
    %1716 = vmatpush2.msra.mxu0 0.0
    %1717 = vmatprep.subr.mxu0 0.0
    %1718 = vmatpush2.msra.mxu0 0.0
    %1719 = vmatprep.subr.mxu0 0.0
    %1720 = vmatpush2.msra.mxu0 0.0
    %1721 = vmatprep.subr.mxu0 0.0
    %1722 = vmatpush2.msra.mxu0 0.0
    %1723 = vmatprep.subr.mxu0 0.0
    %1724 = vmatpush2.msra.mxu0 0.0
    %1725 = vmatprep.subr.mxu0 0.0
    %1726 = vmatpush2.msra.mxu0 0.0
    %1727 = vmatprep.subr.mxu0 0.0
    %1728 = vmatpush2.msra.mxu0 0.0
    %1729 = vmatprep.mubr.f32.mxu0 0.0
    %1730 = vmatmul.mubr.f32.gmra.mxu0 %v1660
    %v1731 = vpop.f32.mrf.mxu0
    %v1732 = vadd.f32 0.0, %v1731
    %v1733 = vpop.f32.mrf.mxu0
    %1734 = vmatprep.mubr.f32.mxu0 0.0
    %1735 = vmatmul.mubr.f32.gmra.mxu0 %v1663
    %v1736 = vpop.f32.mrf.mxu0
    %v1737 = vadd.f32 0.0, %v1736
    %v1738 = vpop.f32.mrf.mxu0
    %1739 = vdwg.mxu0
    %v1740 = vadd.f32 %v1657, %v1732
    %v1741 = vadd.f32 %v1658, %v1737
    %v1742 = vxor.u32 %v1740, 2147483648
    %v1743 = vxor.u32 %v1741, 2147483648
    %v1744 = vmul.f32 %v1742, 1.442695
    %v1745 = vpow.pop %v1744
    %v1746 = vmul.f32 %v1743, 1.442695
    %v1747 = vpow.pop %v1746
    %v1748 = vadd.f32 %v1745, 1.0
    %v1749 = vadd.f32 %v1747, 1.0
    %v1750 = vrcp.pop %v1748
    %v1751 = vmul.f32 1.0, %v1750
    %v1752 = vrcp.pop %v1749
    %v1753 = vmul.f32 1.0, %v1752
    %v1754 = vtanh.pop %v1740
    %v1755 = vtanh.pop %v1741
    %1758 = vrot.lane.b32.xlu0 %v1651, 32
    %v1759 = vpop.permute.xlu0 %1758
    %1760 = vrot.lane.b32.xlu0 %v1652, 32
    %v1761 = vpop.permute.xlu0 %1760
    %v1764 = vmul.f32 %v1751, %v1759
    %v1765 = vmul.f32 %v1753, %v1761
    %1768 = vrot.lane.b32.xlu0 %v1754, 32
    %v1769 = vpop.permute.xlu0 %1768
    %1770 = vrot.lane.b32.xlu0 %v1755, 32
    %v1771 = vpop.permute.xlu0 %1770
    %v1774 = vmul.f32 %v1751, %v1769
    %v1775 = vmul.f32 %v1753, %v1771
    %1778 = vrot.lane.b32.xlu0 %v1774, 32
    %v1779 = vpop.permute.xlu0 %1778
    %1780 = vrot.lane.b32.xlu0 %v1775, 32
    %v1781 = vpop.permute.xlu0 %1780
    %v1784 = vadd.f32 %v1764, %v1779
    %v1785 = vadd.f32 %v1765, %v1781
    %v1786 = vtanh.pop %v1784
    %v1787 = vtanh.pop %v1785
    %1790 = vrot.lane.b32.xlu0 %v1786, 32
    %v1791 = vpop.permute.xlu0 %1790
    %1792 = vrot.lane.b32.xlu0 %v1787, 32
    %v1793 = vpop.permute.xlu0 %1792
    %v1796 = vmul.f32 %v1751, %v1791
    %v1797 = vmul.f32 %v1753, %v1793
    %1800 = vrot.lane.b32.xlu0 %v1796, 64
    %v1801 = vpop.permute.xlu0 %1800
    %1802 = vrot.lane.b32.xlu0 %v1797, 64
    %v1803 = vpop.permute.xlu0 %1802
    %1806 = vst.msk [vmem:[#allocation5] sm:$0xff] %vm373, %v1801
    %1807 = vst.msk [vmem:[#allocation5 + $0x8] sm:$0x3] %vm375, %v1803
    %1808 = vst.msk [vmem:[#allocation5 + $0x46] sm:$0xff] %vm387, %v1801
    %1809 = vst.msk [vmem:[#allocation5 + $0x4e] sm:$0x3] %vm389, %v1803
    %v1810 = vld [vmem:[#allocation3 + $0xa] sm:$0xff]
    %v1811 = vld [vmem:[#allocation3 + $0x12] sm:$0x3]
    %v1812 = vsel %vm60, %v1801, 0
    %v1814 = vsel %vm60, %v1803, 0
    %1816 = vmatprep.subr.mxu0 0.0
    %1817 = vmatpush1.msra.mxu0 0.0
    %1818 = vmatprep.subr.mxu0 0.0
    %1819 = vmatpush1.msra.mxu0 0.0
    %1820 = vmatprep.subr.mxu0 0.0
    %1821 = vmatpush1.msra.mxu0 0.0
    %1822 = vmatprep.subr.mxu0 0.0
    %1823 = vmatpush1.msra.mxu0 0.0
    %1824 = vmatprep.subr.mxu0 0.0
    %1825 = vmatpush1.msra.mxu0 0.0
    %1826 = vmatprep.subr.mxu0 0.0
    %1827 = vmatpush1.msra.mxu0 0.0
    %1828 = vmatprep.subr.mxu0 0.0
    %1829 = vmatpush1.msra.mxu0 0.0
    %1830 = vmatprep.subr.mxu0 0.0
    %1831 = vmatpush1.msra.mxu0 0.0
    %1832 = vmatprep.subr.mxu0 0.0
    %1833 = vmatpush1.msra.mxu0 0.0
    %1834 = vmatprep.subr.mxu0 0.0
    %1835 = vmatpush1.msra.mxu0 0.0
    %1836 = vmatprep.subr.mxu0 0.0
    %1837 = vmatpush1.msra.mxu0 0.0
    %1838 = vmatprep.subr.mxu0 0.0
    %1839 = vmatpush1.msra.mxu0 0.0
    %1840 = vmatprep.subr.mxu0 0.0
    %1841 = vmatpush1.msra.mxu0 %v1656
    %1842 = vmatprep.subr.mxu0 0.0
    %1843 = vmatpush1.msra.mxu0 %v1655
    %1844 = vmatprep.subr.mxu0 0.0
    %1845 = vmatpush1.msra.mxu0 %v1654
    %1846 = vmatprep.subr.mxu0 0.0
    %1847 = vmatpush1.msra.mxu0 %v1653
    %1848 = vmatprep.subr.mxu0 0.0
    %1849 = vmatpush2.msra.mxu0 0.0
    %1850 = vmatprep.subr.mxu0 0.0
    %1851 = vmatpush2.msra.mxu0 0.0
    %1852 = vmatprep.subr.mxu0 0.0
    %1853 = vmatpush2.msra.mxu0 0.0
    %1854 = vmatprep.subr.mxu0 0.0
    %1855 = vmatpush2.msra.mxu0 0.0
    %1856 = vmatprep.subr.mxu0 0.0
    %1857 = vmatpush2.msra.mxu0 0.0
    %1858 = vmatprep.subr.mxu0 0.0
    %1859 = vmatpush2.msra.mxu0 0.0
    %1860 = vmatprep.subr.mxu0 0.0
    %1861 = vmatpush2.msra.mxu0 0.0
    %1862 = vmatprep.subr.mxu0 0.0
    %1863 = vmatpush2.msra.mxu0 0.0
    %1864 = vmatprep.subr.mxu0 0.0
    %1865 = vmatpush2.msra.mxu0 0.0
    %1866 = vmatprep.subr.mxu0 0.0
    %1867 = vmatpush2.msra.mxu0 0.0
    %1868 = vmatprep.subr.mxu0 0.0
    %1869 = vmatpush2.msra.mxu0 0.0
    %1870 = vmatprep.subr.mxu0 0.0
    %1871 = vmatpush2.msra.mxu0 0.0
    %1872 = vmatprep.subr.mxu0 0.0
    %1873 = vmatpush2.msra.mxu0 0.0
    %1874 = vmatprep.subr.mxu0 0.0
    %1875 = vmatpush2.msra.mxu0 0.0
    %1876 = vmatprep.subr.mxu0 0.0
    %1877 = vmatpush2.msra.mxu0 0.0
    %1878 = vmatprep.subr.mxu0 0.0
    %1879 = vmatpush2.msra.mxu0 0.0
    %1880 = vmatprep.mubr.f32.mxu0 0.0
    %1881 = vmatmul.mubr.f32.gmra.mxu0 %v1812
    %v1882 = vpop.f32.mrf.mxu0
    %v1883 = vadd.f32 0.0, %v1882
    %v1884 = vpop.f32.mrf.mxu0
    %1885 = vmatprep.mubr.f32.mxu0 0.0
    %1886 = vmatmul.mubr.f32.gmra.mxu0 %v1814
    %v1887 = vpop.f32.mrf.mxu0
    %v1888 = vadd.f32 0.0, %v1887
    %v1889 = vpop.f32.mrf.mxu0
    %1890 = vdwg.mxu0
    %v1891 = vadd.f32 %v1810, %v1883
    %v1892 = vadd.f32 %v1811, %v1888
    %v1893 = vxor.u32 %v1891, 2147483648
    %v1894 = vxor.u32 %v1892, 2147483648
    %v1895 = vmul.f32 %v1893, 1.442695
    %v1896 = vpow.pop %v1895
    %v1897 = vmul.f32 %v1894, 1.442695
    %v1898 = vpow.pop %v1897
    %v1899 = vadd.f32 %v1896, 1.0
    %v1900 = vadd.f32 %v1898, 1.0
    %v1901 = vrcp.pop %v1899
    %v1902 = vmul.f32 1.0, %v1901
    %v1903 = vrcp.pop %v1900
    %v1904 = vmul.f32 1.0, %v1903
    %v1905 = vtanh.pop %v1891
    %v1906 = vtanh.pop %v1892
    %v1907 = vmul.f32 %v1902, %v1784
    %v1908 = vmul.f32 %v1904, %v1785
    %1911 = vrot.lane.b32.xlu0 %v1905, 32
    %v1912 = vpop.permute.xlu0 %1911
    %1913 = vrot.lane.b32.xlu0 %v1906, 32
    %v1914 = vpop.permute.xlu0 %1913
    %v1917 = vmul.f32 %v1902, %v1912
    %v1918 = vmul.f32 %v1904, %v1914
    %1921 = vrot.lane.b32.xlu0 %v1917, 32
    %v1922 = vpop.permute.xlu0 %1921
    %1923 = vrot.lane.b32.xlu0 %v1918, 32
    %v1924 = vpop.permute.xlu0 %1923
    %v1927 = vadd.f32 %v1907, %v1922
    %v1928 = vadd.f32 %v1908, %v1924
    %v1929 = vtanh.pop %v1927
    %v1930 = vtanh.pop %v1928
    %1933 = vrot.lane.b32.xlu0 %v1929, 32
    %v1934 = vpop.permute.xlu0 %1933
    %1935 = vrot.lane.b32.xlu0 %v1930, 32
    %v1936 = vpop.permute.xlu0 %1935
    %v1939 = vmul.f32 %v1902, %v1934
    %v1940 = vmul.f32 %v1904, %v1936
    %1943 = vrot.lane.b32.xlu0 %v1939, 64
    %v1944 = vpop.permute.xlu0 %1943
    %1945 = vrot.lane.b32.xlu0 %v1940, 64
    %v1946 = vpop.permute.xlu0 %1945
    %1949 = vst.msk [vmem:[#allocation5 + $0xa] sm:$0xff] %vm373, %v1944
    %1950 = vst.msk [vmem:[#allocation5 + $0x12] sm:$0x3] %vm375, %v1946
    %1951 = vst.msk [vmem:[#allocation5 + $0x3c] sm:$0xff] %vm387, %v1944
    %1952 = vst.msk [vmem:[#allocation5 + $0x44] sm:$0x3] %vm389, %v1946
    %v1953 = vld [vmem:[#allocation3 + $0x14] sm:$0xff]
    %v1954 = vld [vmem:[#allocation3 + $0x1c] sm:$0x3]
    %v1955 = vsel %vm60, %v1944, 0
    %v1957 = vsel %vm60, %v1946, 0
    %1959 = vmatprep.subr.mxu0 0.0
    %1960 = vmatpush1.msra.mxu0 0.0
    %1961 = vmatprep.subr.mxu0 0.0
    %1962 = vmatpush1.msra.mxu0 0.0
    %1963 = vmatprep.subr.mxu0 0.0
    %1964 = vmatpush1.msra.mxu0 0.0
    %1965 = vmatprep.subr.mxu0 0.0
    %1966 = vmatpush1.msra.mxu0 0.0
    %1967 = vmatprep.subr.mxu0 0.0
    %1968 = vmatpush1.msra.mxu0 0.0
    %1969 = vmatprep.subr.mxu0 0.0
    %1970 = vmatpush1.msra.mxu0 0.0
    %1971 = vmatprep.subr.mxu0 0.0
    %1972 = vmatpush1.msra.mxu0 0.0
    %1973 = vmatprep.subr.mxu0 0.0
    %1974 = vmatpush1.msra.mxu0 0.0
    %1975 = vmatprep.subr.mxu0 0.0
    %1976 = vmatpush1.msra.mxu0 0.0
    %1977 = vmatprep.subr.mxu0 0.0
    %1978 = vmatpush1.msra.mxu0 0.0
    %1979 = vmatprep.subr.mxu0 0.0
    %1980 = vmatpush1.msra.mxu0 0.0
    %1981 = vmatprep.subr.mxu0 0.0
    %1982 = vmatpush1.msra.mxu0 0.0
    %1983 = vmatprep.subr.mxu0 0.0
    %1984 = vmatpush1.msra.mxu0 %v1656
    %1985 = vmatprep.subr.mxu0 0.0
    %1986 = vmatpush1.msra.mxu0 %v1655
    %1987 = vmatprep.subr.mxu0 0.0
    %1988 = vmatpush1.msra.mxu0 %v1654
    %1989 = vmatprep.subr.mxu0 0.0
    %1990 = vmatpush1.msra.mxu0 %v1653
    %1991 = vmatprep.subr.mxu0 0.0
    %1992 = vmatpush2.msra.mxu0 0.0
    %1993 = vmatprep.subr.mxu0 0.0
    %1994 = vmatpush2.msra.mxu0 0.0
    %1995 = vmatprep.subr.mxu0 0.0
    %1996 = vmatpush2.msra.mxu0 0.0
    %1997 = vmatprep.subr.mxu0 0.0
    %1998 = vmatpush2.msra.mxu0 0.0
    %1999 = vmatprep.subr.mxu0 0.0
    %2000 = vmatpush2.msra.mxu0 0.0
    %2001 = vmatprep.subr.mxu0 0.0
    %2002 = vmatpush2.msra.mxu0 0.0
    %2003 = vmatprep.subr.mxu0 0.0
    %2004 = vmatpush2.msra.mxu0 0.0
    %2005 = vmatprep.subr.mxu0 0.0
    %2006 = vmatpush2.msra.mxu0 0.0
    %2007 = vmatprep.subr.mxu0 0.0
    %2008 = vmatpush2.msra.mxu0 0.0
    %2009 = vmatprep.subr.mxu0 0.0
    %2010 = vmatpush2.msra.mxu0 0.0
    %2011 = vmatprep.subr.mxu0 0.0
    %2012 = vmatpush2.msra.mxu0 0.0
    %2013 = vmatprep.subr.mxu0 0.0
    %2014 = vmatpush2.msra.mxu0 0.0
    %2015 = vmatprep.subr.mxu0 0.0
    %2016 = vmatpush2.msra.mxu0 0.0
    %2017 = vmatprep.subr.mxu0 0.0
    %2018 = vmatpush2.msra.mxu0 0.0
    %2019 = vmatprep.subr.mxu0 0.0
    %2020 = vmatpush2.msra.mxu0 0.0
    %2021 = vmatprep.subr.mxu0 0.0
    %2022 = vmatpush2.msra.mxu0 0.0
    %2023 = vmatprep.mubr.f32.mxu0 0.0
    %2024 = vmatmul.mubr.f32.gmra.mxu0 %v1955
    %v2025 = vpop.f32.mrf.mxu0
    %v2026 = vadd.f32 0.0, %v2025
    %v2027 = vpop.f32.mrf.mxu0
    %2028 = vmatprep.mubr.f32.mxu0 0.0
    %2029 = vmatmul.mubr.f32.gmra.mxu0 %v1957
    %v2030 = vpop.f32.mrf.mxu0
    %v2031 = vadd.f32 0.0, %v2030
    %v2032 = vpop.f32.mrf.mxu0
    %2033 = vdwg.mxu0
    %v2034 = vadd.f32 %v1953, %v2026
    %v2035 = vadd.f32 %v1954, %v2031
    %v2036 = vxor.u32 %v2034, 2147483648
    %v2037 = vxor.u32 %v2035, 2147483648
    %v2038 = vmul.f32 %v2036, 1.442695
    %v2039 = vpow.pop %v2038
    %v2040 = vmul.f32 %v2037, 1.442695
    %v2041 = vpow.pop %v2040
    %v2042 = vadd.f32 %v2039, 1.0
    %v2043 = vadd.f32 %v2041, 1.0
    %v2044 = vrcp.pop %v2042
    %v2045 = vmul.f32 1.0, %v2044
    %v2046 = vrcp.pop %v2043
    %v2047 = vmul.f32 1.0, %v2046
    %v2048 = vtanh.pop %v2034
    %v2049 = vtanh.pop %v2035
    %v2050 = vmul.f32 %v2045, %v1927
    %v2051 = vmul.f32 %v2047, %v1928
    %2054 = vrot.lane.b32.xlu0 %v2048, 32
    %v2055 = vpop.permute.xlu0 %2054
    %2056 = vrot.lane.b32.xlu0 %v2049, 32
    %v2057 = vpop.permute.xlu0 %2056
    %v2060 = vmul.f32 %v2045, %v2055
    %v2061 = vmul.f32 %v2047, %v2057
    %2064 = vrot.lane.b32.xlu0 %v2060, 32
    %v2065 = vpop.permute.xlu0 %2064
    %2066 = vrot.lane.b32.xlu0 %v2061, 32
    %v2067 = vpop.permute.xlu0 %2066
    %v2070 = vadd.f32 %v2050, %v2065
    %v2071 = vadd.f32 %v2051, %v2067
    %v2072 = vtanh.pop %v2070
    %v2073 = vtanh.pop %v2071
    %2076 = vrot.lane.b32.xlu0 %v2072, 32
    %v2077 = vpop.permute.xlu0 %2076
    %2078 = vrot.lane.b32.xlu0 %v2073, 32
    %v2079 = vpop.permute.xlu0 %2078
    %v2082 = vmul.f32 %v2045, %v2077
    %v2083 = vmul.f32 %v2047, %v2079
    %2086 = vrot.lane.b32.xlu0 %v2082, 64
    %v2087 = vpop.permute.xlu0 %2086
    %2088 = vrot.lane.b32.xlu0 %v2083, 64
    %v2089 = vpop.permute.xlu0 %2088
    %2092 = vst.msk [vmem:[#allocation5 + $0x14] sm:$0xff] %vm373, %v2087
    %2093 = vst.msk [vmem:[#allocation5 + $0x1c] sm:$0x3] %vm375, %v2089
    %2094 = vst.msk [vmem:[#allocation5 + $0x32] sm:$0xff] %vm387, %v2087
    %2095 = vst.msk [vmem:[#allocation5 + $0x3a] sm:$0x3] %vm389, %v2089
    %v2096 = vld [vmem:[#allocation3 + $0x1e] sm:$0xff]
    %v2097 = vld [vmem:[#allocation3 + $0x26] sm:$0x3]
    %v2098 = vsel %vm60, %v2087, 0
    %v2100 = vsel %vm60, %v2089, 0
    %2102 = vmatprep.subr.mxu0 0.0
    %2103 = vmatpush1.msra.mxu0 0.0
    %2104 = vmatprep.subr.mxu0 0.0
    %2105 = vmatpush1.msra.mxu0 0.0
    %2106 = vmatprep.subr.mxu0 0.0
    %2107 = vmatpush1.msra.mxu0 0.0
    %2108 = vmatprep.subr.mxu0 0.0
    %2109 = vmatpush1.msra.mxu0 0.0
    %2110 = vmatprep.subr.mxu0 0.0
    %2111 = vmatpush1.msra.mxu0 0.0
    %2112 = vmatprep.subr.mxu0 0.0
    %2113 = vmatpush1.msra.mxu0 0.0
    %2114 = vmatprep.subr.mxu0 0.0
    %2115 = vmatpush1.msra.mxu0 0.0
    %2116 = vmatprep.subr.mxu0 0.0
    %2117 = vmatpush1.msra.mxu0 0.0
    %2118 = vmatprep.subr.mxu0 0.0
    %2119 = vmatpush1.msra.mxu0 0.0
    %2120 = vmatprep.subr.mxu0 0.0
    %2121 = vmatpush1.msra.mxu0 0.0
    %2122 = vmatprep.subr.mxu0 0.0
    %2123 = vmatpush1.msra.mxu0 0.0
    %2124 = vmatprep.subr.mxu0 0.0
    %2125 = vmatpush1.msra.mxu0 0.0
    %2126 = vmatprep.subr.mxu0 0.0
    %2127 = vmatpush1.msra.mxu0 %v1656
    %2128 = vmatprep.subr.mxu0 0.0
    %2129 = vmatpush1.msra.mxu0 %v1655
    %2130 = vmatprep.subr.mxu0 0.0
    %2131 = vmatpush1.msra.mxu0 %v1654
    %2132 = vmatprep.subr.mxu0 0.0
    %2133 = vmatpush1.msra.mxu0 %v1653
    %2134 = vmatprep.subr.mxu0 0.0
    %2135 = vmatpush2.msra.mxu0 0.0
    %2136 = vmatprep.subr.mxu0 0.0
    %2137 = vmatpush2.msra.mxu0 0.0
    %2138 = vmatprep.subr.mxu0 0.0
    %2139 = vmatpush2.msra.mxu0 0.0
    %2140 = vmatprep.subr.mxu0 0.0
    %2141 = vmatpush2.msra.mxu0 0.0
    %2142 = vmatprep.subr.mxu0 0.0
    %2143 = vmatpush2.msra.mxu0 0.0
    %2144 = vmatprep.subr.mxu0 0.0
    %2145 = vmatpush2.msra.mxu0 0.0
    %2146 = vmatprep.subr.mxu0 0.0
    %2147 = vmatpush2.msra.mxu0 0.0
    %2148 = vmatprep.subr.mxu0 0.0
    %2149 = vmatpush2.msra.mxu0 0.0
    %2150 = vmatprep.subr.mxu0 0.0
    %2151 = vmatpush2.msra.mxu0 0.0
    %2152 = vmatprep.subr.mxu0 0.0
    %2153 = vmatpush2.msra.mxu0 0.0
    %2154 = vmatprep.subr.mxu0 0.0
    %2155 = vmatpush2.msra.mxu0 0.0
    %2156 = vmatprep.subr.mxu0 0.0
    %2157 = vmatpush2.msra.mxu0 0.0
    %2158 = vmatprep.subr.mxu0 0.0
    %2159 = vmatpush2.msra.mxu0 0.0
    %2160 = vmatprep.subr.mxu0 0.0
    %2161 = vmatpush2.msra.mxu0 0.0
    %2162 = vmatprep.subr.mxu0 0.0
    %2163 = vmatpush2.msra.mxu0 0.0
    %2164 = vmatprep.subr.mxu0 0.0
    %2165 = vmatpush2.msra.mxu0 0.0
    %2166 = vmatprep.mubr.f32.mxu0 0.0
    %2167 = vmatmul.mubr.f32.gmra.mxu0 %v2098
    %v2168 = vpop.f32.mrf.mxu0
    %v2169 = vadd.f32 0.0, %v2168
    %v2170 = vpop.f32.mrf.mxu0
    %2171 = vmatprep.mubr.f32.mxu0 0.0
    %2172 = vmatmul.mubr.f32.gmra.mxu0 %v2100
    %v2173 = vpop.f32.mrf.mxu0
    %v2174 = vadd.f32 0.0, %v2173
    %v2175 = vpop.f32.mrf.mxu0
    %2176 = vdwg.mxu0
    %v2177 = vadd.f32 %v2096, %v2169
    %v2178 = vadd.f32 %v2097, %v2174
    %v2179 = vxor.u32 %v2177, 2147483648
    %v2180 = vxor.u32 %v2178, 2147483648
    %v2181 = vmul.f32 %v2179, 1.442695
    %v2182 = vpow.pop %v2181
    %v2183 = vmul.f32 %v2180, 1.442695
    %v2184 = vpow.pop %v2183
    %v2185 = vadd.f32 %v2182, 1.0
    %v2186 = vadd.f32 %v2184, 1.0
    %v2187 = vrcp.pop %v2185
    %v2188 = vmul.f32 1.0, %v2187
    %v2189 = vrcp.pop %v2186
    %v2190 = vmul.f32 1.0, %v2189
    %v2191 = vtanh.pop %v2177
    %v2192 = vtanh.pop %v2178
    %v2193 = vmul.f32 %v2188, %v2070
    %v2194 = vmul.f32 %v2190, %v2071
    %2197 = vrot.lane.b32.xlu0 %v2191, 32
    %v2198 = vpop.permute.xlu0 %2197
    %2199 = vrot.lane.b32.xlu0 %v2192, 32
    %v2200 = vpop.permute.xlu0 %2199
    %v2203 = vmul.f32 %v2188, %v2198
    %v2204 = vmul.f32 %v2190, %v2200
    %2207 = vrot.lane.b32.xlu0 %v2203, 32
    %v2208 = vpop.permute.xlu0 %2207
    %2209 = vrot.lane.b32.xlu0 %v2204, 32
    %v2210 = vpop.permute.xlu0 %2209
    %v2213 = vadd.f32 %v2193, %v2208
    %v2214 = vadd.f32 %v2194, %v2210
    %v2215 = vtanh.pop %v2213
    %v2216 = vtanh.pop %v2214
    %2219 = vrot.lane.b32.xlu0 %v2215, 32
    %v2220 = vpop.permute.xlu0 %2219
    %2221 = vrot.lane.b32.xlu0 %v2216, 32
    %v2222 = vpop.permute.xlu0 %2221
    %v2225 = vmul.f32 %v2188, %v2220
    %v2226 = vmul.f32 %v2190, %v2222
    %2229 = vrot.lane.b32.xlu0 %v2225, 64
    %v2230 = vpop.permute.xlu0 %2229
    %2231 = vrot.lane.b32.xlu0 %v2226, 64
    %v2232 = vpop.permute.xlu0 %2231
    %2235 = vst.msk [vmem:[#allocation5 + $0x1e] sm:$0xff] %vm373, %v2230
    %2236 = vst.msk [vmem:[#allocation5 + $0x26] sm:$0x3] %vm375, %v2232
    %2237 = vst.msk [vmem:[#allocation5 + $0x28] sm:$0xff] %vm387, %v2230
    %2238 = vst.msk [vmem:[#allocation5 + $0x30] sm:$0x3] %vm389, %v2232
    %v2239 = vld [vmem:[#allocation3 + $0x28] sm:$0xff]
    %v2240 = vld [vmem:[#allocation3 + $0x30] sm:$0x3]
    %v2241 = vsel %vm60, %v2230, 0
    %v2243 = vsel %vm60, %v2232, 0
    %2245 = vmatprep.subr.mxu0 0.0
    %2246 = vmatpush1.msra.mxu0 0.0
    %2247 = vmatprep.subr.mxu0 0.0
    %2248 = vmatpush1.msra.mxu0 0.0
    %2249 = vmatprep.subr.mxu0 0.0
    %2250 = vmatpush1.msra.mxu0 0.0
    %2251 = vmatprep.subr.mxu0 0.0
    %2252 = vmatpush1.msra.mxu0 0.0
    %2253 = vmatprep.subr.mxu0 0.0
    %2254 = vmatpush1.msra.mxu0 0.0
    %2255 = vmatprep.subr.mxu0 0.0
    %2256 = vmatpush1.msra.mxu0 0.0
    %2257 = vmatprep.subr.mxu0 0.0
    %2258 = vmatpush1.msra.mxu0 0.0
    %2259 = vmatprep.subr.mxu0 0.0
    %2260 = vmatpush1.msra.mxu0 0.0
    %2261 = vmatprep.subr.mxu0 0.0
    %2262 = vmatpush1.msra.mxu0 0.0
    %2263 = vmatprep.subr.mxu0 0.0
    %2264 = vmatpush1.msra.mxu0 0.0
    %2265 = vmatprep.subr.mxu0 0.0
    %2266 = vmatpush1.msra.mxu0 0.0
    %2267 = vmatprep.subr.mxu0 0.0
    %2268 = vmatpush1.msra.mxu0 0.0
    %2269 = vmatprep.subr.mxu0 0.0
    %2270 = vmatpush1.msra.mxu0 %v1656
    %2271 = vmatprep.subr.mxu0 0.0
    %2272 = vmatpush1.msra.mxu0 %v1655
    %2273 = vmatprep.subr.mxu0 0.0
    %2274 = vmatpush1.msra.mxu0 %v1654
    %2275 = vmatprep.subr.mxu0 0.0
    %2276 = vmatpush1.msra.mxu0 %v1653
    %2277 = vmatprep.subr.mxu0 0.0
    %2278 = vmatpush2.msra.mxu0 0.0
    %2279 = vmatprep.subr.mxu0 0.0
    %2280 = vmatpush2.msra.mxu0 0.0
    %2281 = vmatprep.subr.mxu0 0.0
    %2282 = vmatpush2.msra.mxu0 0.0
    %2283 = vmatprep.subr.mxu0 0.0
    %2284 = vmatpush2.msra.mxu0 0.0
    %2285 = vmatprep.subr.mxu0 0.0
    %2286 = vmatpush2.msra.mxu0 0.0
    %2287 = vmatprep.subr.mxu0 0.0
    %2288 = vmatpush2.msra.mxu0 0.0
    %2289 = vmatprep.subr.mxu0 0.0
    %2290 = vmatpush2.msra.mxu0 0.0
    %2291 = vmatprep.subr.mxu0 0.0
    %2292 = vmatpush2.msra.mxu0 0.0
    %2293 = vmatprep.subr.mxu0 0.0
    %2294 = vmatpush2.msra.mxu0 0.0
    %2295 = vmatprep.subr.mxu0 0.0
    %2296 = vmatpush2.msra.mxu0 0.0
    %2297 = vmatprep.subr.mxu0 0.0
    %2298 = vmatpush2.msra.mxu0 0.0
    %2299 = vmatprep.subr.mxu0 0.0
    %2300 = vmatpush2.msra.mxu0 0.0
    %2301 = vmatprep.subr.mxu0 0.0
    %2302 = vmatpush2.msra.mxu0 0.0
    %2303 = vmatprep.subr.mxu0 0.0
    %2304 = vmatpush2.msra.mxu0 0.0
    %2305 = vmatprep.subr.mxu0 0.0
    %2306 = vmatpush2.msra.mxu0 0.0
    %2307 = vmatprep.subr.mxu0 0.0
    %2308 = vmatpush2.msra.mxu0 0.0
    %2309 = vmatprep.mubr.f32.mxu0 0.0
    %2310 = vmatmul.mubr.f32.gmra.mxu0 %v2241
    %v2311 = vpop.f32.mrf.mxu0
    %v2312 = vadd.f32 0.0, %v2311
    %v2313 = vpop.f32.mrf.mxu0
    %2314 = vmatprep.mubr.f32.mxu0 0.0
    %2315 = vmatmul.mubr.f32.gmra.mxu0 %v2243
    %v2316 = vpop.f32.mrf.mxu0
    %v2317 = vadd.f32 0.0, %v2316
    %v2318 = vpop.f32.mrf.mxu0
    %2319 = vdwg.mxu0
    %v2320 = vadd.f32 %v2239, %v2312
    %v2321 = vadd.f32 %v2240, %v2317
    %v2322 = vxor.u32 %v2320, 2147483648
    %v2323 = vxor.u32 %v2321, 2147483648
    %v2324 = vmul.f32 %v2322, 1.442695
    %v2325 = vpow.pop %v2324
    %v2326 = vmul.f32 %v2323, 1.442695
    %v2327 = vpow.pop %v2326
    %v2328 = vadd.f32 %v2325, 1.0
    %v2329 = vadd.f32 %v2327, 1.0
    %v2330 = vrcp.pop %v2328
    %v2331 = vmul.f32 1.0, %v2330
    %v2332 = vrcp.pop %v2329
    %v2333 = vmul.f32 1.0, %v2332
    %v2334 = vtanh.pop %v2320
    %v2335 = vtanh.pop %v2321
    %v2336 = vmul.f32 %v2331, %v2213
    %v2337 = vmul.f32 %v2333, %v2214
    %2340 = vrot.lane.b32.xlu0 %v2334, 32
    %v2341 = vpop.permute.xlu0 %2340
    %2342 = vrot.lane.b32.xlu0 %v2335, 32
    %v2343 = vpop.permute.xlu0 %2342
    %v2346 = vmul.f32 %v2331, %v2341
    %v2347 = vmul.f32 %v2333, %v2343
    %2350 = vrot.lane.b32.xlu0 %v2346, 32
    %v2351 = vpop.permute.xlu0 %2350
    %2352 = vrot.lane.b32.xlu0 %v2347, 32
    %v2353 = vpop.permute.xlu0 %2352
    %v2356 = vadd.f32 %v2336, %v2351
    %v2357 = vadd.f32 %v2337, %v2353
    %v2358 = vtanh.pop %v2356
    %v2359 = vtanh.pop %v2357
    %2362 = vrot.lane.b32.xlu0 %v2358, 32
    %v2363 = vpop.permute.xlu0 %2362
    %2364 = vrot.lane.b32.xlu0 %v2359, 32
    %v2365 = vpop.permute.xlu0 %2364
    %v2368 = vmul.f32 %v2331, %v2363
    %v2369 = vmul.f32 %v2333, %v2365
    %2372 = vrot.lane.b32.xlu0 %v2368, 64
    %v2373 = vpop.permute.xlu0 %2372
    %2374 = vrot.lane.b32.xlu0 %v2369, 64
    %v2375 = vpop.permute.xlu0 %2374
    %2378 = vst.msk [vmem:[#allocation5 + $0x28] sm:$0xff] %vm373, %v2373
    %2379 = vst.msk [vmem:[#allocation5 + $0x30] sm:$0x3] %vm375, %v2375
    %2380 = vst.msk [vmem:[#allocation5 + $0x1e] sm:$0xff] %vm387, %v2373
    %2381 = vst.msk [vmem:[#allocation5 + $0x26] sm:$0x3] %vm389, %v2375
    %v2382 = vld [vmem:[#allocation3 + $0x32] sm:$0xff]
    %v2383 = vld [vmem:[#allocation3 + $0x3a] sm:$0x3]
    %v2384 = vsel %vm60, %v2373, 0
    %v2386 = vsel %vm60, %v2375, 0
    %2388 = vmatprep.subr.mxu0 0.0
    %2389 = vmatpush1.msra.mxu0 0.0
    %2390 = vmatprep.subr.mxu0 0.0
    %2391 = vmatpush1.msra.mxu0 0.0
    %2392 = vmatprep.subr.mxu0 0.0
    %2393 = vmatpush1.msra.mxu0 0.0
    %2394 = vmatprep.subr.mxu0 0.0
    %2395 = vmatpush1.msra.mxu0 0.0
    %2396 = vmatprep.subr.mxu0 0.0
    %2397 = vmatpush1.msra.mxu0 0.0
    %2398 = vmatprep.subr.mxu0 0.0
    %2399 = vmatpush1.msra.mxu0 0.0
    %2400 = vmatprep.subr.mxu0 0.0
    %2401 = vmatpush1.msra.mxu0 0.0
    %2402 = vmatprep.subr.mxu0 0.0
    %2403 = vmatpush1.msra.mxu0 0.0
    %2404 = vmatprep.subr.mxu0 0.0
    %2405 = vmatpush1.msra.mxu0 0.0
    %2406 = vmatprep.subr.mxu0 0.0
    %2407 = vmatpush1.msra.mxu0 0.0
    %2408 = vmatprep.subr.mxu0 0.0
    %2409 = vmatpush1.msra.mxu0 0.0
    %2410 = vmatprep.subr.mxu0 0.0
    %2411 = vmatpush1.msra.mxu0 0.0
    %2412 = vmatprep.subr.mxu0 0.0
    %2413 = vmatpush1.msra.mxu0 %v1656
    %2414 = vmatprep.subr.mxu0 0.0
    %2415 = vmatpush1.msra.mxu0 %v1655
    %2416 = vmatprep.subr.mxu0 0.0
    %2417 = vmatpush1.msra.mxu0 %v1654
    %2418 = vmatprep.subr.mxu0 0.0
    %2419 = vmatpush1.msra.mxu0 %v1653
    %2420 = vmatprep.subr.mxu0 0.0
    %2421 = vmatpush2.msra.mxu0 0.0
    %2422 = vmatprep.subr.mxu0 0.0
    %2423 = vmatpush2.msra.mxu0 0.0
    %2424 = vmatprep.subr.mxu0 0.0
    %2425 = vmatpush2.msra.mxu0 0.0
    %2426 = vmatprep.subr.mxu0 0.0
    %2427 = vmatpush2.msra.mxu0 0.0
    %2428 = vmatprep.subr.mxu0 0.0
    %2429 = vmatpush2.msra.mxu0 0.0
    %2430 = vmatprep.subr.mxu0 0.0
    %2431 = vmatpush2.msra.mxu0 0.0
    %2432 = vmatprep.subr.mxu0 0.0
    %2433 = vmatpush2.msra.mxu0 0.0
    %2434 = vmatprep.subr.mxu0 0.0
    %2435 = vmatpush2.msra.mxu0 0.0
    %2436 = vmatprep.subr.mxu0 0.0
    %2437 = vmatpush2.msra.mxu0 0.0
    %2438 = vmatprep.subr.mxu0 0.0
    %2439 = vmatpush2.msra.mxu0 0.0
    %2440 = vmatprep.subr.mxu0 0.0
    %2441 = vmatpush2.msra.mxu0 0.0
    %2442 = vmatprep.subr.mxu0 0.0
    %2443 = vmatpush2.msra.mxu0 0.0
    %2444 = vmatprep.subr.mxu0 0.0
    %2445 = vmatpush2.msra.mxu0 0.0
    %2446 = vmatprep.subr.mxu0 0.0
    %2447 = vmatpush2.msra.mxu0 0.0
    %2448 = vmatprep.subr.mxu0 0.0
    %2449 = vmatpush2.msra.mxu0 0.0
    %2450 = vmatprep.subr.mxu0 0.0
    %2451 = vmatpush2.msra.mxu0 0.0
    %2452 = vmatprep.mubr.f32.mxu0 0.0
    %2453 = vmatmul.mubr.f32.gmra.mxu0 %v2384
    %v2454 = vpop.f32.mrf.mxu0
    %v2455 = vadd.f32 0.0, %v2454
    %v2456 = vpop.f32.mrf.mxu0
    %2457 = vmatprep.mubr.f32.mxu0 0.0
    %2458 = vmatmul.mubr.f32.gmra.mxu0 %v2386
    %v2459 = vpop.f32.mrf.mxu0
    %v2460 = vadd.f32 0.0, %v2459
    %v2461 = vpop.f32.mrf.mxu0
    %2462 = vdwg.mxu0
    %v2463 = vadd.f32 %v2382, %v2455
    %v2464 = vadd.f32 %v2383, %v2460
    %v2465 = vxor.u32 %v2463, 2147483648
    %v2466 = vxor.u32 %v2464, 2147483648
    %v2467 = vmul.f32 %v2465, 1.442695
    %v2468 = vpow.pop %v2467
    %v2469 = vmul.f32 %v2466, 1.442695
    %v2470 = vpow.pop %v2469
    %v2471 = vadd.f32 %v2468, 1.0
    %v2472 = vadd.f32 %v2470, 1.0
    %v2473 = vrcp.pop %v2471
    %v2474 = vmul.f32 1.0, %v2473
    %v2475 = vrcp.pop %v2472
    %v2476 = vmul.f32 1.0, %v2475
    %v2477 = vtanh.pop %v2463
    %v2478 = vtanh.pop %v2464
    %v2479 = vmul.f32 %v2474, %v2356
    %v2480 = vmul.f32 %v2476, %v2357
    %2483 = vrot.lane.b32.xlu0 %v2477, 32
    %v2484 = vpop.permute.xlu0 %2483
    %2485 = vrot.lane.b32.xlu0 %v2478, 32
    %v2486 = vpop.permute.xlu0 %2485
    %v2489 = vmul.f32 %v2474, %v2484
    %v2490 = vmul.f32 %v2476, %v2486
    %2493 = vrot.lane.b32.xlu0 %v2489, 32
    %v2494 = vpop.permute.xlu0 %2493
    %2495 = vrot.lane.b32.xlu0 %v2490, 32
    %v2496 = vpop.permute.xlu0 %2495
    %v2499 = vadd.f32 %v2479, %v2494
    %v2500 = vadd.f32 %v2480, %v2496
    %v2501 = vtanh.pop %v2499
    %v2502 = vtanh.pop %v2500
    %2505 = vrot.lane.b32.xlu0 %v2501, 32
    %v2506 = vpop.permute.xlu0 %2505
    %2507 = vrot.lane.b32.xlu0 %v2502, 32
    %v2508 = vpop.permute.xlu0 %2507
    %v2511 = vmul.f32 %v2474, %v2506
    %v2512 = vmul.f32 %v2476, %v2508
    %2515 = vrot.lane.b32.xlu0 %v2511, 64
    %v2516 = vpop.permute.xlu0 %2515
    %2517 = vrot.lane.b32.xlu0 %v2512, 64
    %v2518 = vpop.permute.xlu0 %2517
    %2521 = vst.msk [vmem:[#allocation5 + $0x32] sm:$0xff] %vm373, %v2516
    %2522 = vst.msk [vmem:[#allocation5 + $0x3a] sm:$0x3] %vm375, %v2518
    %2523 = vst.msk [vmem:[#allocation5 + $0x14] sm:$0xff] %vm387, %v2516
    %2524 = vst.msk [vmem:[#allocation5 + $0x1c] sm:$0x3] %vm389, %v2518
    %v2525 = vld [vmem:[#allocation3 + $0x3c] sm:$0xff]
    %v2526 = vld [vmem:[#allocation3 + $0x44] sm:$0x3]
    %v2527 = vsel %vm60, %v2516, 0
    %v2529 = vsel %vm60, %v2518, 0
    %2531 = vmatprep.subr.mxu0 0.0
    %2532 = vmatpush1.msra.mxu0 0.0
    %2533 = vmatprep.subr.mxu0 0.0
    %2534 = vmatpush1.msra.mxu0 0.0
    %2535 = vmatprep.subr.mxu0 0.0
    %2536 = vmatpush1.msra.mxu0 0.0
    %2537 = vmatprep.subr.mxu0 0.0
    %2538 = vmatpush1.msra.mxu0 0.0
    %2539 = vmatprep.subr.mxu0 0.0
    %2540 = vmatpush1.msra.mxu0 0.0
    %2541 = vmatprep.subr.mxu0 0.0
    %2542 = vmatpush1.msra.mxu0 0.0
    %2543 = vmatprep.subr.mxu0 0.0
    %2544 = vmatpush1.msra.mxu0 0.0
    %2545 = vmatprep.subr.mxu0 0.0
    %2546 = vmatpush1.msra.mxu0 0.0
    %2547 = vmatprep.subr.mxu0 0.0
    %2548 = vmatpush1.msra.mxu0 0.0
    %2549 = vmatprep.subr.mxu0 0.0
    %2550 = vmatpush1.msra.mxu0 0.0
    %2551 = vmatprep.subr.mxu0 0.0
    %2552 = vmatpush1.msra.mxu0 0.0
    %2553 = vmatprep.subr.mxu0 0.0
    %2554 = vmatpush1.msra.mxu0 0.0
    %2555 = vmatprep.subr.mxu0 0.0
    %2556 = vmatpush1.msra.mxu0 %v1656
    %2557 = vmatprep.subr.mxu0 0.0
    %2558 = vmatpush1.msra.mxu0 %v1655
    %2559 = vmatprep.subr.mxu0 0.0
    %2560 = vmatpush1.msra.mxu0 %v1654
    %2561 = vmatprep.subr.mxu0 0.0
    %2562 = vmatpush1.msra.mxu0 %v1653
    %2563 = vmatprep.subr.mxu0 0.0
    %2564 = vmatpush2.msra.mxu0 0.0
    %2565 = vmatprep.subr.mxu0 0.0
    %2566 = vmatpush2.msra.mxu0 0.0
    %2567 = vmatprep.subr.mxu0 0.0
    %2568 = vmatpush2.msra.mxu0 0.0
    %2569 = vmatprep.subr.mxu0 0.0
    %2570 = vmatpush2.msra.mxu0 0.0
    %2571 = vmatprep.subr.mxu0 0.0
    %2572 = vmatpush2.msra.mxu0 0.0
    %2573 = vmatprep.subr.mxu0 0.0
    %2574 = vmatpush2.msra.mxu0 0.0
    %2575 = vmatprep.subr.mxu0 0.0
    %2576 = vmatpush2.msra.mxu0 0.0
    %2577 = vmatprep.subr.mxu0 0.0
    %2578 = vmatpush2.msra.mxu0 0.0
    %2579 = vmatprep.subr.mxu0 0.0
    %2580 = vmatpush2.msra.mxu0 0.0
    %2581 = vmatprep.subr.mxu0 0.0
    %2582 = vmatpush2.msra.mxu0 0.0
    %2583 = vmatprep.subr.mxu0 0.0
    %2584 = vmatpush2.msra.mxu0 0.0
    %2585 = vmatprep.subr.mxu0 0.0
    %2586 = vmatpush2.msra.mxu0 0.0
    %2587 = vmatprep.subr.mxu0 0.0
    %2588 = vmatpush2.msra.mxu0 0.0
    %2589 = vmatprep.subr.mxu0 0.0
    %2590 = vmatpush2.msra.mxu0 0.0
    %2591 = vmatprep.subr.mxu0 0.0
    %2592 = vmatpush2.msra.mxu0 0.0
    %2593 = vmatprep.subr.mxu0 0.0
    %2594 = vmatpush2.msra.mxu0 0.0
    %2595 = vmatprep.mubr.f32.mxu0 0.0
    %2596 = vmatmul.mubr.f32.gmra.mxu0 %v2527
    %v2597 = vpop.f32.mrf.mxu0
    %v2598 = vadd.f32 0.0, %v2597
    %v2599 = vpop.f32.mrf.mxu0
    %2600 = vmatprep.mubr.f32.mxu0 0.0
    %2601 = vmatmul.mubr.f32.gmra.mxu0 %v2529
    %v2602 = vpop.f32.mrf.mxu0
    %v2603 = vadd.f32 0.0, %v2602
    %v2604 = vpop.f32.mrf.mxu0
    %2605 = vdwg.mxu0
    %v2606 = vadd.f32 %v2525, %v2598
    %v2607 = vadd.f32 %v2526, %v2603
    %v2608 = vxor.u32 %v2606, 2147483648
    %v2609 = vxor.u32 %v2607, 2147483648
    %v2610 = vmul.f32 %v2608, 1.442695
    %v2611 = vpow.pop %v2610
    %v2612 = vmul.f32 %v2609, 1.442695
    %v2613 = vpow.pop %v2612
    %v2614 = vadd.f32 %v2611, 1.0
    %v2615 = vadd.f32 %v2613, 1.0
    %v2616 = vrcp.pop %v2614
    %v2617 = vmul.f32 1.0, %v2616
    %v2618 = vrcp.pop %v2615
    %v2619 = vmul.f32 1.0, %v2618
    %v2620 = vtanh.pop %v2606
    %v2621 = vtanh.pop %v2607
    %v2622 = vmul.f32 %v2617, %v2499
    %v2623 = vmul.f32 %v2619, %v2500
    %2626 = vrot.lane.b32.xlu0 %v2620, 32
    %v2627 = vpop.permute.xlu0 %2626
    %2628 = vrot.lane.b32.xlu0 %v2621, 32
    %v2629 = vpop.permute.xlu0 %2628
    %v2632 = vmul.f32 %v2617, %v2627
    %v2633 = vmul.f32 %v2619, %v2629
    %2636 = vrot.lane.b32.xlu0 %v2632, 32
    %v2637 = vpop.permute.xlu0 %2636
    %2638 = vrot.lane.b32.xlu0 %v2633, 32
    %v2639 = vpop.permute.xlu0 %2638
    %v2642 = vadd.f32 %v2622, %v2637
    %v2643 = vadd.f32 %v2623, %v2639
    %v2644 = vtanh.pop %v2642
    %v2645 = vtanh.pop %v2643
    %2648 = vrot.lane.b32.xlu0 %v2644, 32
    %v2649 = vpop.permute.xlu0 %2648
    %2650 = vrot.lane.b32.xlu0 %v2645, 32
    %v2651 = vpop.permute.xlu0 %2650
    %v2654 = vmul.f32 %v2617, %v2649
    %v2655 = vmul.f32 %v2619, %v2651
    %2658 = vrot.lane.b32.xlu0 %v2654, 64
    %v2659 = vpop.permute.xlu0 %2658
    %2660 = vrot.lane.b32.xlu0 %v2655, 64
    %v2661 = vpop.permute.xlu0 %2660
    %2664 = vst.msk [vmem:[#allocation5 + $0x3c] sm:$0xff] %vm373, %v2659
    %2665 = vst.msk [vmem:[#allocation5 + $0x44] sm:$0x3] %vm375, %v2661
    %2666 = vst.msk [vmem:[#allocation5 + $0xa] sm:$0xff] %vm387, %v2659
    %2667 = vst.msk [vmem:[#allocation5 + $0x12] sm:$0x3] %vm389, %v2661
    %v2668 = vld [vmem:[#allocation3 + $0x46] sm:$0xff]
    %v2669 = vld [vmem:[#allocation3 + $0x4e] sm:$0x3]
    %v2670 = vsel %vm60, %v2659, 0
    %v2672 = vsel %vm60, %v2661, 0
    %2674 = vmatprep.subr.mxu0 0.0
    %2675 = vmatpush1.msra.mxu0 0.0
    %2676 = vmatprep.subr.mxu0 0.0
    %2677 = vmatpush1.msra.mxu0 0.0
    %2678 = vmatprep.subr.mxu0 0.0
    %2679 = vmatpush1.msra.mxu0 0.0
    %2680 = vmatprep.subr.mxu0 0.0
    %2681 = vmatpush1.msra.mxu0 0.0
    %2682 = vmatprep.subr.mxu0 0.0
    %2683 = vmatpush1.msra.mxu0 0.0
    %2684 = vmatprep.subr.mxu0 0.0
    %2685 = vmatpush1.msra.mxu0 0.0
    %2686 = vmatprep.subr.mxu0 0.0
    %2687 = vmatpush1.msra.mxu0 0.0
    %2688 = vmatprep.subr.mxu0 0.0
    %2689 = vmatpush1.msra.mxu0 0.0
    %2690 = vmatprep.subr.mxu0 0.0
    %2691 = vmatpush1.msra.mxu0 0.0
    %2692 = vmatprep.subr.mxu0 0.0
    %2693 = vmatpush1.msra.mxu0 0.0
    %2694 = vmatprep.subr.mxu0 0.0
    %2695 = vmatpush1.msra.mxu0 0.0
    %2696 = vmatprep.subr.mxu0 0.0
    %2697 = vmatpush1.msra.mxu0 0.0
    %2698 = vmatprep.subr.mxu0 0.0
    %2699 = vmatpush1.msra.mxu0 %v1656
    %2700 = vmatprep.subr.mxu0 0.0
    %2701 = vmatpush1.msra.mxu0 %v1655
    %2702 = vmatprep.subr.mxu0 0.0
    %2703 = vmatpush1.msra.mxu0 %v1654
    %2704 = vmatprep.subr.mxu0 0.0
    %2705 = vmatpush1.msra.mxu0 %v1653
    %2706 = vmatprep.subr.mxu0 0.0
    %2707 = vmatpush2.msra.mxu0 0.0
    %2708 = vmatprep.subr.mxu0 0.0
    %2709 = vmatpush2.msra.mxu0 0.0
    %2710 = vmatprep.subr.mxu0 0.0
    %2711 = vmatpush2.msra.mxu0 0.0
    %2712 = vmatprep.subr.mxu0 0.0
    %2713 = vmatpush2.msra.mxu0 0.0
    %2714 = vmatprep.subr.mxu0 0.0
    %2715 = vmatpush2.msra.mxu0 0.0
    %2716 = vmatprep.subr.mxu0 0.0
    %2717 = vmatpush2.msra.mxu0 0.0
    %2718 = vmatprep.subr.mxu0 0.0
    %2719 = vmatpush2.msra.mxu0 0.0
    %2720 = vmatprep.subr.mxu0 0.0
    %2721 = vmatpush2.msra.mxu0 0.0
    %2722 = vmatprep.subr.mxu0 0.0
    %2723 = vmatpush2.msra.mxu0 0.0
    %2724 = vmatprep.subr.mxu0 0.0
    %2725 = vmatpush2.msra.mxu0 0.0
    %2726 = vmatprep.subr.mxu0 0.0
    %2727 = vmatpush2.msra.mxu0 0.0
    %2728 = vmatprep.subr.mxu0 0.0
    %2729 = vmatpush2.msra.mxu0 0.0
    %2730 = vmatprep.subr.mxu0 0.0
    %2731 = vmatpush2.msra.mxu0 0.0
    %2732 = vmatprep.subr.mxu0 0.0
    %2733 = vmatpush2.msra.mxu0 0.0
    %2734 = vmatprep.subr.mxu0 0.0
    %2735 = vmatpush2.msra.mxu0 0.0
    %2736 = vmatprep.subr.mxu0 0.0
    %2737 = vmatpush2.msra.mxu0 0.0
    %2738 = vmatprep.mubr.f32.mxu0 0.0
    %2739 = vmatmul.mubr.f32.gmra.mxu0 %v2670
    %v2740 = vpop.f32.mrf.mxu0
    %v2741 = vadd.f32 0.0, %v2740
    %v2742 = vpop.f32.mrf.mxu0
    %2743 = vmatprep.mubr.f32.mxu0 0.0
    %2744 = vmatmul.mubr.f32.gmra.mxu0 %v2672
    %v2745 = vpop.f32.mrf.mxu0
    %v2746 = vadd.f32 0.0, %v2745
    %v2747 = vpop.f32.mrf.mxu0
    %2748 = vdwg.mxu0
    %v2749 = vadd.f32 %v2668, %v2741
    %v2750 = vadd.f32 %v2669, %v2746
    %v2751 = vxor.u32 %v2749, 2147483648
    %v2752 = vxor.u32 %v2750, 2147483648
    %v2753 = vmul.f32 %v2751, 1.442695
    %v2754 = vpow.pop %v2753
    %v2755 = vmul.f32 %v2752, 1.442695
    %v2756 = vpow.pop %v2755
    %v2757 = vadd.f32 %v2754, 1.0
    %v2758 = vadd.f32 %v2756, 1.0
    %v2759 = vrcp.pop %v2757
    %v2760 = vmul.f32 1.0, %v2759
    %v2761 = vrcp.pop %v2758
    %v2762 = vmul.f32 1.0, %v2761
    %v2763 = vtanh.pop %v2749
    %v2764 = vtanh.pop %v2750
    %v2765 = vmul.f32 %v2760, %v2642
    %v2766 = vmul.f32 %v2762, %v2643
    %2769 = vrot.lane.b32.xlu0 %v2763, 32
    %v2770 = vpop.permute.xlu0 %2769
    %2771 = vrot.lane.b32.xlu0 %v2764, 32
    %v2772 = vpop.permute.xlu0 %2771
    %v2775 = vmul.f32 %v2760, %v2770
    %v2776 = vmul.f32 %v2762, %v2772
    %2779 = vrot.lane.b32.xlu0 %v2775, 32
    %v2780 = vpop.permute.xlu0 %2779
    %2781 = vrot.lane.b32.xlu0 %v2776, 32
    %v2782 = vpop.permute.xlu0 %2781
    %v2785 = vadd.f32 %v2765, %v2780
    %v2786 = vadd.f32 %v2766, %v2782
    %v2787 = vtanh.pop %v2785
    %v2788 = vtanh.pop %v2786
    %2791 = vrot.lane.b32.xlu0 %v2787, 32
    %v2792 = vpop.permute.xlu0 %2791
    %2793 = vrot.lane.b32.xlu0 %v2788, 32
    %v2794 = vpop.permute.xlu0 %2793
    %v2797 = vmul.f32 %v2760, %v2792
    %v2798 = vmul.f32 %v2762, %v2794
    %2801 = vrot.lane.b32.xlu0 %v2797, 64
    %v2802 = vpop.permute.xlu0 %2801
    %2803 = vrot.lane.b32.xlu0 %v2798, 64
    %v2804 = vpop.permute.xlu0 %2803
    %2807 = vst.msk [vmem:[#allocation5 + $0x46] sm:$0xff] %vm373, %v2802
    %2808 = vst.msk [vmem:[#allocation5 + $0x4e] sm:$0x3] %vm375, %v2804
    %2809 = vst.msk [vmem:[#allocation5] sm:$0xff] %vm387, %v2802
    %2810 = vst.msk [vmem:[#allocation5 + $0x8] sm:$0x3] %vm389, %v2804
    %v2811 = vld [vmem:[%s8] sm:$0x1]
    %v2813 = vlaneseq
    %v2814 = vshrl.u32 %v2813, 7
    %v2815 = vsub.s32 0, %v2814
    %v2816 = vrot.slane %v2811, %v2815
    %v2818 = vld [vmem:[#allocation5] ss:$10 sm:$0xff]
    %v2819 = vld [vmem:[%s7] sm:$0xff]
    %v2820 = vld [vmem:[%s7 + $0x8] sm:$0xff]
    %v2821 = vld [vmem:[%s7 + $0x10] sm:$0xff]
    %v2822 = vld [vmem:[%s7 + $0x18] sm:$0xff]
    %v2824 = vsel %vm60, %v2818, 0
    %2826 = vmatprep.subr.mxu0 0.0
    %2827 = vmatpush1.msra.mxu0 0.0
    %2828 = vmatprep.subr.mxu0 0.0
    %2829 = vmatpush1.msra.mxu0 0.0
    %2830 = vmatprep.subr.mxu0 0.0
    %2831 = vmatpush1.msra.mxu0 0.0
    %2832 = vmatprep.subr.mxu0 0.0
    %2833 = vmatpush1.msra.mxu0 0.0
    %2834 = vmatprep.subr.mxu0 0.0
    %2835 = vmatpush1.msra.mxu0 0.0
    %2836 = vmatprep.subr.mxu0 0.0
    %2837 = vmatpush1.msra.mxu0 0.0
    %2838 = vmatprep.subr.mxu0 0.0
    %2839 = vmatpush1.msra.mxu0 0.0
    %2840 = vmatprep.subr.mxu0 0.0
    %2841 = vmatpush1.msra.mxu0 0.0
    %2842 = vmatprep.subr.mxu0 0.0
    %2843 = vmatpush1.msra.mxu0 0.0
    %2844 = vmatprep.subr.mxu0 0.0
    %2845 = vmatpush1.msra.mxu0 0.0
    %2846 = vmatprep.subr.mxu0 0.0
    %2847 = vmatpush1.msra.mxu0 0.0
    %2848 = vmatprep.subr.mxu0 0.0
    %2849 = vmatpush1.msra.mxu0 0.0
    %2850 = vmatprep.subr.mxu0 0.0
    %2851 = vmatpush1.msra.mxu0 %v2822
    %2852 = vmatprep.subr.mxu0 0.0
    %2853 = vmatpush1.msra.mxu0 %v2821
    %2854 = vmatprep.subr.mxu0 0.0
    %2855 = vmatpush1.msra.mxu0 %v2820
    %2856 = vmatprep.subr.mxu0 0.0
    %2857 = vmatpush1.msra.mxu0 %v2819
    %2858 = vmatprep.subr.mxu0 0.0
    %2859 = vmatpush2.msra.mxu0 0.0
    %2860 = vmatprep.subr.mxu0 0.0
    %2861 = vmatpush2.msra.mxu0 0.0
    %2862 = vmatprep.subr.mxu0 0.0
    %2863 = vmatpush2.msra.mxu0 0.0
    %2864 = vmatprep.subr.mxu0 0.0
    %2865 = vmatpush2.msra.mxu0 0.0
    %2866 = vmatprep.subr.mxu0 0.0
    %2867 = vmatpush2.msra.mxu0 0.0
    %2868 = vmatprep.subr.mxu0 0.0
    %2869 = vmatpush2.msra.mxu0 0.0
    %2870 = vmatprep.subr.mxu0 0.0
    %2871 = vmatpush2.msra.mxu0 0.0
    %2872 = vmatprep.subr.mxu0 0.0
    %2873 = vmatpush2.msra.mxu0 0.0
    %2874 = vmatprep.subr.mxu0 0.0
    %2875 = vmatpush2.msra.mxu0 0.0
    %2876 = vmatprep.subr.mxu0 0.0
    %2877 = vmatpush2.msra.mxu0 0.0
    %2878 = vmatprep.subr.mxu0 0.0
    %2879 = vmatpush2.msra.mxu0 0.0
    %2880 = vmatprep.subr.mxu0 0.0
    %2881 = vmatpush2.msra.mxu0 0.0
    %2882 = vmatprep.subr.mxu0 0.0
    %2883 = vmatpush2.msra.mxu0 0.0
    %2884 = vmatprep.subr.mxu0 0.0
    %2885 = vmatpush2.msra.mxu0 0.0
    %2886 = vmatprep.subr.mxu0 0.0
    %2887 = vmatpush2.msra.mxu0 0.0
    %2888 = vmatprep.subr.mxu0 0.0
    %2889 = vmatpush2.msra.mxu0 0.0
    %2890 = vmatprep.mubr.f32.mxu0 0.0
    %2891 = vmatmul.mubr.f32.gmra.mxu0 %v2824
    %v2892 = vpop.f32.mrf.mxu0
    %v2893 = vadd.f32 0.0, %v2892
    %v2894 = vpop.f32.mrf.mxu0
    %2895 = vdwg.mxu0
    %v2896 = vadd.f32 %v2816, %v2893
    %s2897 = scalar_lea.vmem [#allocation5], 1
    %v2898 = vld [vmem:[%s2897] ss:$10 sm:$0xff]
    %v2899 = vld [vmem:[%s7 + $0x20] sm:$0xff]
    %v2900 = vld [vmem:[%s7 + $0x28] sm:$0xff]
    %v2901 = vld [vmem:[%s7 + $0x30] sm:$0xff]
    %v2902 = vld [vmem:[%s7 + $0x38] sm:$0xff]
    %v2904 = vsel %vm60, %v2898, 0
    %2906 = vmatprep.subr.mxu0 0.0
    %2907 = vmatpush1.msra.mxu0 0.0
    %2908 = vmatprep.subr.mxu0 0.0
    %2909 = vmatpush1.msra.mxu0 0.0
    %2910 = vmatprep.subr.mxu0 0.0
    %2911 = vmatpush1.msra.mxu0 0.0
    %2912 = vmatprep.subr.mxu0 0.0
    %2913 = vmatpush1.msra.mxu0 0.0
    %2914 = vmatprep.subr.mxu0 0.0
    %2915 = vmatpush1.msra.mxu0 0.0
    %2916 = vmatprep.subr.mxu0 0.0
    %2917 = vmatpush1.msra.mxu0 0.0
    %2918 = vmatprep.subr.mxu0 0.0
    %2919 = vmatpush1.msra.mxu0 0.0
    %2920 = vmatprep.subr.mxu0 0.0
    %2921 = vmatpush1.msra.mxu0 0.0
    %2922 = vmatprep.subr.mxu0 0.0
    %2923 = vmatpush1.msra.mxu0 0.0
    %2924 = vmatprep.subr.mxu0 0.0
    %2925 = vmatpush1.msra.mxu0 0.0
    %2926 = vmatprep.subr.mxu0 0.0
    %2927 = vmatpush1.msra.mxu0 0.0
    %2928 = vmatprep.subr.mxu0 0.0
    %2929 = vmatpush1.msra.mxu0 0.0
    %2930 = vmatprep.subr.mxu0 0.0
    %2931 = vmatpush1.msra.mxu0 %v2902
    %2932 = vmatprep.subr.mxu0 0.0
    %2933 = vmatpush1.msra.mxu0 %v2901
    %2934 = vmatprep.subr.mxu0 0.0
    %2935 = vmatpush1.msra.mxu0 %v2900
    %2936 = vmatprep.subr.mxu0 0.0
    %2937 = vmatpush1.msra.mxu0 %v2899
    %2938 = vmatprep.subr.mxu0 0.0
    %2939 = vmatpush2.msra.mxu0 0.0
    %2940 = vmatprep.subr.mxu0 0.0
    %2941 = vmatpush2.msra.mxu0 0.0
    %2942 = vmatprep.subr.mxu0 0.0
    %2943 = vmatpush2.msra.mxu0 0.0
    %2944 = vmatprep.subr.mxu0 0.0
    %2945 = vmatpush2.msra.mxu0 0.0
    %2946 = vmatprep.subr.mxu0 0.0
    %2947 = vmatpush2.msra.mxu0 0.0
    %2948 = vmatprep.subr.mxu0 0.0
    %2949 = vmatpush2.msra.mxu0 0.0
    %2950 = vmatprep.subr.mxu0 0.0
    %2951 = vmatpush2.msra.mxu0 0.0
    %2952 = vmatprep.subr.mxu0 0.0
    %2953 = vmatpush2.msra.mxu0 0.0
    %2954 = vmatprep.subr.mxu0 0.0
    %2955 = vmatpush2.msra.mxu0 0.0
    %2956 = vmatprep.subr.mxu0 0.0
    %2957 = vmatpush2.msra.mxu0 0.0
    %2958 = vmatprep.subr.mxu0 0.0
    %2959 = vmatpush2.msra.mxu0 0.0
    %2960 = vmatprep.subr.mxu0 0.0
    %2961 = vmatpush2.msra.mxu0 0.0
    %2962 = vmatprep.subr.mxu0 0.0
    %2963 = vmatpush2.msra.mxu0 0.0
    %2964 = vmatprep.subr.mxu0 0.0
    %2965 = vmatpush2.msra.mxu0 0.0
    %2966 = vmatprep.subr.mxu0 0.0
    %2967 = vmatpush2.msra.mxu0 0.0
    %2968 = vmatprep.subr.mxu0 0.0
    %2969 = vmatpush2.msra.mxu0 0.0
    %2970 = vmatprep.mubr.f32.mxu0 0.0
    %2971 = vmatmul.mubr.f32.gmra.mxu0 %v2904
    %v2972 = vpop.f32.mrf.mxu0
    %v2973 = vadd.f32 0.0, %v2972
    %v2974 = vpop.f32.mrf.mxu0
    %2975 = vdwg.mxu0
    %v2976 = vadd.f32 %v2896, %v2973
    %s2977 = scalar_lea.vmem [#allocation5], 2
    %v2978 = vld [vmem:[%s2977] ss:$10 sm:$0xff]
    %v2979 = vld [vmem:[%s7 + $0x40] sm:$0xff]
    %v2980 = vld [vmem:[%s7 + $0x48] sm:$0xff]
    %v2981 = vld [vmem:[%s7 + $0x50] sm:$0xff]
    %v2982 = vld [vmem:[%s7 + $0x58] sm:$0xff]
    %v2984 = vsel %vm60, %v2978, 0
    %2986 = vmatprep.subr.mxu0 0.0
    %2987 = vmatpush1.msra.mxu0 0.0
    %2988 = vmatprep.subr.mxu0 0.0
    %2989 = vmatpush1.msra.mxu0 0.0
    %2990 = vmatprep.subr.mxu0 0.0
    %2991 = vmatpush1.msra.mxu0 0.0
    %2992 = vmatprep.subr.mxu0 0.0
    %2993 = vmatpush1.msra.mxu0 0.0
    %2994 = vmatprep.subr.mxu0 0.0
    %2995 = vmatpush1.msra.mxu0 0.0
    %2996 = vmatprep.subr.mxu0 0.0
    %2997 = vmatpush1.msra.mxu0 0.0
    %2998 = vmatprep.subr.mxu0 0.0
    %2999 = vmatpush1.msra.mxu0 0.0
    %3000 = vmatprep.subr.mxu0 0.0
    %3001 = vmatpush1.msra.mxu0 0.0
    %3002 = vmatprep.subr.mxu0 0.0
    %3003 = vmatpush1.msra.mxu0 0.0
    %3004 = vmatprep.subr.mxu0 0.0
    %3005 = vmatpush1.msra.mxu0 0.0
    %3006 = vmatprep.subr.mxu0 0.0
    %3007 = vmatpush1.msra.mxu0 0.0
    %3008 = vmatprep.subr.mxu0 0.0
    %3009 = vmatpush1.msra.mxu0 0.0
    %3010 = vmatprep.subr.mxu0 0.0
    %3011 = vmatpush1.msra.mxu0 %v2982
    %3012 = vmatprep.subr.mxu0 0.0
    %3013 = vmatpush1.msra.mxu0 %v2981
    %3014 = vmatprep.subr.mxu0 0.0
    %3015 = vmatpush1.msra.mxu0 %v2980
    %3016 = vmatprep.subr.mxu0 0.0
    %3017 = vmatpush1.msra.mxu0 %v2979
    %3018 = vmatprep.subr.mxu0 0.0
    %3019 = vmatpush2.msra.mxu0 0.0
    %3020 = vmatprep.subr.mxu0 0.0
    %3021 = vmatpush2.msra.mxu0 0.0
    %3022 = vmatprep.subr.mxu0 0.0
    %3023 = vmatpush2.msra.mxu0 0.0
    %3024 = vmatprep.subr.mxu0 0.0
    %3025 = vmatpush2.msra.mxu0 0.0
    %3026 = vmatprep.subr.mxu0 0.0
    %3027 = vmatpush2.msra.mxu0 0.0
    %3028 = vmatprep.subr.mxu0 0.0
    %3029 = vmatpush2.msra.mxu0 0.0
    %3030 = vmatprep.subr.mxu0 0.0
    %3031 = vmatpush2.msra.mxu0 0.0
    %3032 = vmatprep.subr.mxu0 0.0
    %3033 = vmatpush2.msra.mxu0 0.0
    %3034 = vmatprep.subr.mxu0 0.0
    %3035 = vmatpush2.msra.mxu0 0.0
    %3036 = vmatprep.subr.mxu0 0.0
    %3037 = vmatpush2.msra.mxu0 0.0
    %3038 = vmatprep.subr.mxu0 0.0
    %3039 = vmatpush2.msra.mxu0 0.0
    %3040 = vmatprep.subr.mxu0 0.0
    %3041 = vmatpush2.msra.mxu0 0.0
    %3042 = vmatprep.subr.mxu0 0.0
    %3043 = vmatpush2.msra.mxu0 0.0
    %3044 = vmatprep.subr.mxu0 0.0
    %3045 = vmatpush2.msra.mxu0 0.0
    %3046 = vmatprep.subr.mxu0 0.0
    %3047 = vmatpush2.msra.mxu0 0.0
    %3048 = vmatprep.subr.mxu0 0.0
    %3049 = vmatpush2.msra.mxu0 0.0
    %3050 = vmatprep.mubr.f32.mxu0 0.0
    %3051 = vmatmul.mubr.f32.gmra.mxu0 %v2984
    %v3052 = vpop.f32.mrf.mxu0
    %v3053 = vadd.f32 0.0, %v3052
    %v3054 = vpop.f32.mrf.mxu0
    %3055 = vdwg.mxu0
    %v3056 = vadd.f32 %v2976, %v3053
    %s3057 = scalar_lea.vmem [#allocation5], 3
    %v3058 = vld [vmem:[%s3057] ss:$10 sm:$0xff]
    %v3059 = vld [vmem:[%s7 + $0x60] sm:$0xff]
    %v3060 = vld [vmem:[%s7 + $0x68] sm:$0xff]
    %v3061 = vld [vmem:[%s7 + $0x70] sm:$0xff]
    %v3062 = vld [vmem:[%s7 + $0x78] sm:$0xff]
    %v3064 = vsel %vm60, %v3058, 0
    %3066 = vmatprep.subr.mxu0 0.0
    %3067 = vmatpush1.msra.mxu0 0.0
    %3068 = vmatprep.subr.mxu0 0.0
    %3069 = vmatpush1.msra.mxu0 0.0
    %3070 = vmatprep.subr.mxu0 0.0
    %3071 = vmatpush1.msra.mxu0 0.0
    %3072 = vmatprep.subr.mxu0 0.0
    %3073 = vmatpush1.msra.mxu0 0.0
    %3074 = vmatprep.subr.mxu0 0.0
    %3075 = vmatpush1.msra.mxu0 0.0
    %3076 = vmatprep.subr.mxu0 0.0
    %3077 = vmatpush1.msra.mxu0 0.0
    %3078 = vmatprep.subr.mxu0 0.0
    %3079 = vmatpush1.msra.mxu0 0.0
    %3080 = vmatprep.subr.mxu0 0.0
    %3081 = vmatpush1.msra.mxu0 0.0
    %3082 = vmatprep.subr.mxu0 0.0
    %3083 = vmatpush1.msra.mxu0 0.0
    %3084 = vmatprep.subr.mxu0 0.0
    %3085 = vmatpush1.msra.mxu0 0.0
    %3086 = vmatprep.subr.mxu0 0.0
    %3087 = vmatpush1.msra.mxu0 0.0
    %3088 = vmatprep.subr.mxu0 0.0
    %3089 = vmatpush1.msra.mxu0 0.0
    %3090 = vmatprep.subr.mxu0 0.0
    %3091 = vmatpush1.msra.mxu0 %v3062
    %3092 = vmatprep.subr.mxu0 0.0
    %3093 = vmatpush1.msra.mxu0 %v3061
    %3094 = vmatprep.subr.mxu0 0.0
    %3095 = vmatpush1.msra.mxu0 %v3060
    %3096 = vmatprep.subr.mxu0 0.0
    %3097 = vmatpush1.msra.mxu0 %v3059
    %3098 = vmatprep.subr.mxu0 0.0
    %3099 = vmatpush2.msra.mxu0 0.0
    %3100 = vmatprep.subr.mxu0 0.0
    %3101 = vmatpush2.msra.mxu0 0.0
    %3102 = vmatprep.subr.mxu0 0.0
    %3103 = vmatpush2.msra.mxu0 0.0
    %3104 = vmatprep.subr.mxu0 0.0
    %3105 = vmatpush2.msra.mxu0 0.0
    %3106 = vmatprep.subr.mxu0 0.0
    %3107 = vmatpush2.msra.mxu0 0.0
    %3108 = vmatprep.subr.mxu0 0.0
    %3109 = vmatpush2.msra.mxu0 0.0
    %3110 = vmatprep.subr.mxu0 0.0
    %3111 = vmatpush2.msra.mxu0 0.0
    %3112 = vmatprep.subr.mxu0 0.0
    %3113 = vmatpush2.msra.mxu0 0.0
    %3114 = vmatprep.subr.mxu0 0.0
    %3115 = vmatpush2.msra.mxu0 0.0
    %3116 = vmatprep.subr.mxu0 0.0
    %3117 = vmatpush2.msra.mxu0 0.0
    %3118 = vmatprep.subr.mxu0 0.0
    %3119 = vmatpush2.msra.mxu0 0.0
    %3120 = vmatprep.subr.mxu0 0.0
    %3121 = vmatpush2.msra.mxu0 0.0
    %3122 = vmatprep.subr.mxu0 0.0
    %3123 = vmatpush2.msra.mxu0 0.0
    %3124 = vmatprep.subr.mxu0 0.0
    %3125 = vmatpush2.msra.mxu0 0.0
    %3126 = vmatprep.subr.mxu0 0.0
    %3127 = vmatpush2.msra.mxu0 0.0
    %3128 = vmatprep.subr.mxu0 0.0
    %3129 = vmatpush2.msra.mxu0 0.0
    %3130 = vmatprep.mubr.f32.mxu0 0.0
    %3131 = vmatmul.mubr.f32.gmra.mxu0 %v3064
    %v3132 = vpop.f32.mrf.mxu0
    %v3133 = vadd.f32 0.0, %v3132
    %v3134 = vpop.f32.mrf.mxu0
    %3135 = vdwg.mxu0
    %v3136 = vadd.f32 %v3056, %v3133
    %s3137 = scalar_lea.vmem [#allocation5], 4
    %v3138 = vld [vmem:[%s3137] ss:$10 sm:$0xff]
    %v3139 = vld [vmem:[%s7 + $0x80] sm:$0xff]
    %v3140 = vld [vmem:[%s7 + $0x88] sm:$0xff]
    %v3141 = vld [vmem:[%s7 + $0x90] sm:$0xff]
    %v3142 = vld [vmem:[%s7 + $0x98] sm:$0xff]
    %v3144 = vsel %vm60, %v3138, 0
    %3146 = vmatprep.subr.mxu0 0.0
    %3147 = vmatpush1.msra.mxu0 0.0
    %3148 = vmatprep.subr.mxu0 0.0
    %3149 = vmatpush1.msra.mxu0 0.0
    %3150 = vmatprep.subr.mxu0 0.0
    %3151 = vmatpush1.msra.mxu0 0.0
    %3152 = vmatprep.subr.mxu0 0.0
    %3153 = vmatpush1.msra.mxu0 0.0
    %3154 = vmatprep.subr.mxu0 0.0
    %3155 = vmatpush1.msra.mxu0 0.0
    %3156 = vmatprep.subr.mxu0 0.0
    %3157 = vmatpush1.msra.mxu0 0.0
    %3158 = vmatprep.subr.mxu0 0.0
    %3159 = vmatpush1.msra.mxu0 0.0
    %3160 = vmatprep.subr.mxu0 0.0
    %3161 = vmatpush1.msra.mxu0 0.0
    %3162 = vmatprep.subr.mxu0 0.0
    %3163 = vmatpush1.msra.mxu0 0.0
    %3164 = vmatprep.subr.mxu0 0.0
    %3165 = vmatpush1.msra.mxu0 0.0
    %3166 = vmatprep.subr.mxu0 0.0
    %3167 = vmatpush1.msra.mxu0 0.0
    %3168 = vmatprep.subr.mxu0 0.0
    %3169 = vmatpush1.msra.mxu0 0.0
    %3170 = vmatprep.subr.mxu0 0.0
    %3171 = vmatpush1.msra.mxu0 %v3142
    %3172 = vmatprep.subr.mxu0 0.0
    %3173 = vmatpush1.msra.mxu0 %v3141
    %3174 = vmatprep.subr.mxu0 0.0
    %3175 = vmatpush1.msra.mxu0 %v3140
    %3176 = vmatprep.subr.mxu0 0.0
    %3177 = vmatpush1.msra.mxu0 %v3139
    %3178 = vmatprep.subr.mxu0 0.0
    %3179 = vmatpush2.msra.mxu0 0.0
    %3180 = vmatprep.subr.mxu0 0.0
    %3181 = vmatpush2.msra.mxu0 0.0
    %3182 = vmatprep.subr.mxu0 0.0
    %3183 = vmatpush2.msra.mxu0 0.0
    %3184 = vmatprep.subr.mxu0 0.0
    %3185 = vmatpush2.msra.mxu0 0.0
    %3186 = vmatprep.subr.mxu0 0.0
    %3187 = vmatpush2.msra.mxu0 0.0
    %3188 = vmatprep.subr.mxu0 0.0
    %3189 = vmatpush2.msra.mxu0 0.0
    %3190 = vmatprep.subr.mxu0 0.0
    %3191 = vmatpush2.msra.mxu0 0.0
    %3192 = vmatprep.subr.mxu0 0.0
    %3193 = vmatpush2.msra.mxu0 0.0
    %3194 = vmatprep.subr.mxu0 0.0
    %3195 = vmatpush2.msra.mxu0 0.0
    %3196 = vmatprep.subr.mxu0 0.0
    %3197 = vmatpush2.msra.mxu0 0.0
    %3198 = vmatprep.subr.mxu0 0.0
    %3199 = vmatpush2.msra.mxu0 0.0
    %3200 = vmatprep.subr.mxu0 0.0
    %3201 = vmatpush2.msra.mxu0 0.0
    %3202 = vmatprep.subr.mxu0 0.0
    %3203 = vmatpush2.msra.mxu0 0.0
    %3204 = vmatprep.subr.mxu0 0.0
    %3205 = vmatpush2.msra.mxu0 0.0
    %3206 = vmatprep.subr.mxu0 0.0
    %3207 = vmatpush2.msra.mxu0 0.0
    %3208 = vmatprep.subr.mxu0 0.0
    %3209 = vmatpush2.msra.mxu0 0.0
    %3210 = vmatprep.mubr.f32.mxu0 0.0
    %3211 = vmatmul.mubr.f32.gmra.mxu0 %v3144
    %v3212 = vpop.f32.mrf.mxu0
    %v3213 = vadd.f32 0.0, %v3212
    %v3214 = vpop.f32.mrf.mxu0
    %3215 = vdwg.mxu0
    %v3216 = vadd.f32 %v3136, %v3213
    %s3217 = scalar_lea.vmem [#allocation5], 5
    %v3218 = vld [vmem:[%s3217] ss:$10 sm:$0xff]
    %v3219 = vld [vmem:[%s7 + $0xa0] sm:$0xff]
    %v3220 = vld [vmem:[%s7 + $0xa8] sm:$0xff]
    %v3221 = vld [vmem:[%s7 + $0xb0] sm:$0xff]
    %v3222 = vld [vmem:[%s7 + $0xb8] sm:$0xff]
    %v3224 = vsel %vm60, %v3218, 0
    %3226 = vmatprep.subr.mxu0 0.0
    %3227 = vmatpush1.msra.mxu0 0.0
    %3228 = vmatprep.subr.mxu0 0.0
    %3229 = vmatpush1.msra.mxu0 0.0
    %3230 = vmatprep.subr.mxu0 0.0
    %3231 = vmatpush1.msra.mxu0 0.0
    %3232 = vmatprep.subr.mxu0 0.0
    %3233 = vmatpush1.msra.mxu0 0.0
    %3234 = vmatprep.subr.mxu0 0.0
    %3235 = vmatpush1.msra.mxu0 0.0
    %3236 = vmatprep.subr.mxu0 0.0
    %3237 = vmatpush1.msra.mxu0 0.0
    %3238 = vmatprep.subr.mxu0 0.0
    %3239 = vmatpush1.msra.mxu0 0.0
    %3240 = vmatprep.subr.mxu0 0.0
    %3241 = vmatpush1.msra.mxu0 0.0
    %3242 = vmatprep.subr.mxu0 0.0
    %3243 = vmatpush1.msra.mxu0 0.0
    %3244 = vmatprep.subr.mxu0 0.0
    %3245 = vmatpush1.msra.mxu0 0.0
    %3246 = vmatprep.subr.mxu0 0.0
    %3247 = vmatpush1.msra.mxu0 0.0
    %3248 = vmatprep.subr.mxu0 0.0
    %3249 = vmatpush1.msra.mxu0 0.0
    %3250 = vmatprep.subr.mxu0 0.0
    %3251 = vmatpush1.msra.mxu0 %v3222
    %3252 = vmatprep.subr.mxu0 0.0
    %3253 = vmatpush1.msra.mxu0 %v3221
    %3254 = vmatprep.subr.mxu0 0.0
    %3255 = vmatpush1.msra.mxu0 %v3220
    %3256 = vmatprep.subr.mxu0 0.0
    %3257 = vmatpush1.msra.mxu0 %v3219
    %3258 = vmatprep.subr.mxu0 0.0
    %3259 = vmatpush2.msra.mxu0 0.0
    %3260 = vmatprep.subr.mxu0 0.0
    %3261 = vmatpush2.msra.mxu0 0.0
    %3262 = vmatprep.subr.mxu0 0.0
    %3263 = vmatpush2.msra.mxu0 0.0
    %3264 = vmatprep.subr.mxu0 0.0
    %3265 = vmatpush2.msra.mxu0 0.0
    %3266 = vmatprep.subr.mxu0 0.0
    %3267 = vmatpush2.msra.mxu0 0.0
    %3268 = vmatprep.subr.mxu0 0.0
    %3269 = vmatpush2.msra.mxu0 0.0
    %3270 = vmatprep.subr.mxu0 0.0
    %3271 = vmatpush2.msra.mxu0 0.0
    %3272 = vmatprep.subr.mxu0 0.0
    %3273 = vmatpush2.msra.mxu0 0.0
    %3274 = vmatprep.subr.mxu0 0.0
    %3275 = vmatpush2.msra.mxu0 0.0
    %3276 = vmatprep.subr.mxu0 0.0
    %3277 = vmatpush2.msra.mxu0 0.0
    %3278 = vmatprep.subr.mxu0 0.0
    %3279 = vmatpush2.msra.mxu0 0.0
    %3280 = vmatprep.subr.mxu0 0.0
    %3281 = vmatpush2.msra.mxu0 0.0
    %3282 = vmatprep.subr.mxu0 0.0
    %3283 = vmatpush2.msra.mxu0 0.0
    %3284 = vmatprep.subr.mxu0 0.0
    %3285 = vmatpush2.msra.mxu0 0.0
    %3286 = vmatprep.subr.mxu0 0.0
    %3287 = vmatpush2.msra.mxu0 0.0
    %3288 = vmatprep.subr.mxu0 0.0
    %3289 = vmatpush2.msra.mxu0 0.0
    %3290 = vmatprep.mubr.f32.mxu0 0.0
    %3291 = vmatmul.mubr.f32.gmra.mxu0 %v3224
    %v3292 = vpop.f32.mrf.mxu0
    %v3293 = vadd.f32 0.0, %v3292
    %v3294 = vpop.f32.mrf.mxu0
    %3295 = vdwg.mxu0
    %v3296 = vadd.f32 %v3216, %v3293
    %s3297 = scalar_lea.vmem [#allocation5], 6
    %v3298 = vld [vmem:[%s3297] ss:$10 sm:$0xff]
    %v3299 = vld [vmem:[%s7 + $0xc0] sm:$0xff]
    %v3300 = vld [vmem:[%s7 + $0xc8] sm:$0xff]
    %v3301 = vld [vmem:[%s7 + $0xd0] sm:$0xff]
    %v3302 = vld [vmem:[%s7 + $0xd8] sm:$0xff]
    %v3304 = vsel %vm60, %v3298, 0
    %3306 = vmatprep.subr.mxu0 0.0
    %3307 = vmatpush1.msra.mxu0 0.0
    %3308 = vmatprep.subr.mxu0 0.0
    %3309 = vmatpush1.msra.mxu0 0.0
    %3310 = vmatprep.subr.mxu0 0.0
    %3311 = vmatpush1.msra.mxu0 0.0
    %3312 = vmatprep.subr.mxu0 0.0
    %3313 = vmatpush1.msra.mxu0 0.0
    %3314 = vmatprep.subr.mxu0 0.0
    %3315 = vmatpush1.msra.mxu0 0.0
    %3316 = vmatprep.subr.mxu0 0.0
    %3317 = vmatpush1.msra.mxu0 0.0
    %3318 = vmatprep.subr.mxu0 0.0
    %3319 = vmatpush1.msra.mxu0 0.0
    %3320 = vmatprep.subr.mxu0 0.0
    %3321 = vmatpush1.msra.mxu0 0.0
    %3322 = vmatprep.subr.mxu0 0.0
    %3323 = vmatpush1.msra.mxu0 0.0
    %3324 = vmatprep.subr.mxu0 0.0
    %3325 = vmatpush1.msra.mxu0 0.0
    %3326 = vmatprep.subr.mxu0 0.0
    %3327 = vmatpush1.msra.mxu0 0.0
    %3328 = vmatprep.subr.mxu0 0.0
    %3329 = vmatpush1.msra.mxu0 0.0
    %3330 = vmatprep.subr.mxu0 0.0
    %3331 = vmatpush1.msra.mxu0 %v3302
    %3332 = vmatprep.subr.mxu0 0.0
    %3333 = vmatpush1.msra.mxu0 %v3301
    %3334 = vmatprep.subr.mxu0 0.0
    %3335 = vmatpush1.msra.mxu0 %v3300
    %3336 = vmatprep.subr.mxu0 0.0
    %3337 = vmatpush1.msra.mxu0 %v3299
    %3338 = vmatprep.subr.mxu0 0.0
    %3339 = vmatpush2.msra.mxu0 0.0
    %3340 = vmatprep.subr.mxu0 0.0
    %3341 = vmatpush2.msra.mxu0 0.0
    %3342 = vmatprep.subr.mxu0 0.0
    %3343 = vmatpush2.msra.mxu0 0.0
    %3344 = vmatprep.subr.mxu0 0.0
    %3345 = vmatpush2.msra.mxu0 0.0
    %3346 = vmatprep.subr.mxu0 0.0
    %3347 = vmatpush2.msra.mxu0 0.0
    %3348 = vmatprep.subr.mxu0 0.0
    %3349 = vmatpush2.msra.mxu0 0.0
    %3350 = vmatprep.subr.mxu0 0.0
    %3351 = vmatpush2.msra.mxu0 0.0
    %3352 = vmatprep.subr.mxu0 0.0
    %3353 = vmatpush2.msra.mxu0 0.0
    %3354 = vmatprep.subr.mxu0 0.0
    %3355 = vmatpush2.msra.mxu0 0.0
    %3356 = vmatprep.subr.mxu0 0.0
    %3357 = vmatpush2.msra.mxu0 0.0
    %3358 = vmatprep.subr.mxu0 0.0
    %3359 = vmatpush2.msra.mxu0 0.0
    %3360 = vmatprep.subr.mxu0 0.0
    %3361 = vmatpush2.msra.mxu0 0.0
    %3362 = vmatprep.subr.mxu0 0.0
    %3363 = vmatpush2.msra.mxu0 0.0
    %3364 = vmatprep.subr.mxu0 0.0
    %3365 = vmatpush2.msra.mxu0 0.0
    %3366 = vmatprep.subr.mxu0 0.0
    %3367 = vmatpush2.msra.mxu0 0.0
    %3368 = vmatprep.subr.mxu0 0.0
    %3369 = vmatpush2.msra.mxu0 0.0
    %3370 = vmatprep.mubr.f32.mxu0 0.0
    %3371 = vmatmul.mubr.f32.gmra.mxu0 %v3304
    %v3372 = vpop.f32.mrf.mxu0
    %v3373 = vadd.f32 0.0, %v3372
    %v3374 = vpop.f32.mrf.mxu0
    %3375 = vdwg.mxu0
    %v3376 = vadd.f32 %v3296, %v3373
    %s3377 = scalar_lea.vmem [#allocation5], 7
    %v3378 = vld [vmem:[%s3377] ss:$10 sm:$0xff]
    %v3379 = vld [vmem:[%s7 + $0xe0] sm:$0xff]
    %v3380 = vld [vmem:[%s7 + $0xe8] sm:$0xff]
    %v3381 = vld [vmem:[%s7 + $0xf0] sm:$0xff]
    %v3382 = vld [vmem:[%s7 + $0xf8] sm:$0xff]
    %v3384 = vsel %vm60, %v3378, 0
    %3386 = vmatprep.subr.mxu0 0.0
    %3387 = vmatpush1.msra.mxu0 0.0
    %3388 = vmatprep.subr.mxu0 0.0
    %3389 = vmatpush1.msra.mxu0 0.0
    %3390 = vmatprep.subr.mxu0 0.0
    %3391 = vmatpush1.msra.mxu0 0.0
    %3392 = vmatprep.subr.mxu0 0.0
    %3393 = vmatpush1.msra.mxu0 0.0
    %3394 = vmatprep.subr.mxu0 0.0
    %3395 = vmatpush1.msra.mxu0 0.0
    %3396 = vmatprep.subr.mxu0 0.0
    %3397 = vmatpush1.msra.mxu0 0.0
    %3398 = vmatprep.subr.mxu0 0.0
    %3399 = vmatpush1.msra.mxu0 0.0
    %3400 = vmatprep.subr.mxu0 0.0
    %3401 = vmatpush1.msra.mxu0 0.0
    %3402 = vmatprep.subr.mxu0 0.0
    %3403 = vmatpush1.msra.mxu0 0.0
    %3404 = vmatprep.subr.mxu0 0.0
    %3405 = vmatpush1.msra.mxu0 0.0
    %3406 = vmatprep.subr.mxu0 0.0
    %3407 = vmatpush1.msra.mxu0 0.0
    %3408 = vmatprep.subr.mxu0 0.0
    %3409 = vmatpush1.msra.mxu0 0.0
    %3410 = vmatprep.subr.mxu0 0.0
    %3411 = vmatpush1.msra.mxu0 %v3382
    %3412 = vmatprep.subr.mxu0 0.0
    %3413 = vmatpush1.msra.mxu0 %v3381
    %3414 = vmatprep.subr.mxu0 0.0
    %3415 = vmatpush1.msra.mxu0 %v3380
    %3416 = vmatprep.subr.mxu0 0.0
    %3417 = vmatpush1.msra.mxu0 %v3379
    %3418 = vmatprep.subr.mxu0 0.0
    %3419 = vmatpush2.msra.mxu0 0.0
    %3420 = vmatprep.subr.mxu0 0.0
    %3421 = vmatpush2.msra.mxu0 0.0
    %3422 = vmatprep.subr.mxu0 0.0
    %3423 = vmatpush2.msra.mxu0 0.0
    %3424 = vmatprep.subr.mxu0 0.0
    %3425 = vmatpush2.msra.mxu0 0.0
    %3426 = vmatprep.subr.mxu0 0.0
    %3427 = vmatpush2.msra.mxu0 0.0
    %3428 = vmatprep.subr.mxu0 0.0
    %3429 = vmatpush2.msra.mxu0 0.0
    %3430 = vmatprep.subr.mxu0 0.0
    %3431 = vmatpush2.msra.mxu0 0.0
    %3432 = vmatprep.subr.mxu0 0.0
    %3433 = vmatpush2.msra.mxu0 0.0
    %3434 = vmatprep.subr.mxu0 0.0
    %3435 = vmatpush2.msra.mxu0 0.0
    %3436 = vmatprep.subr.mxu0 0.0
    %3437 = vmatpush2.msra.mxu0 0.0
    %3438 = vmatprep.subr.mxu0 0.0
    %3439 = vmatpush2.msra.mxu0 0.0
    %3440 = vmatprep.subr.mxu0 0.0
    %3441 = vmatpush2.msra.mxu0 0.0
    %3442 = vmatprep.subr.mxu0 0.0
    %3443 = vmatpush2.msra.mxu0 0.0
    %3444 = vmatprep.subr.mxu0 0.0
    %3445 = vmatpush2.msra.mxu0 0.0
    %3446 = vmatprep.subr.mxu0 0.0
    %3447 = vmatpush2.msra.mxu0 0.0
    %3448 = vmatprep.subr.mxu0 0.0
    %3449 = vmatpush2.msra.mxu0 0.0
    %3450 = vmatprep.mubr.f32.mxu0 0.0
    %3451 = vmatmul.mubr.f32.gmra.mxu0 %v3384
    %v3452 = vpop.f32.mrf.mxu0
    %v3453 = vadd.f32 0.0, %v3452
    %v3454 = vpop.f32.mrf.mxu0
    %3455 = vdwg.mxu0
    %v3456 = vadd.f32 %v3376, %v3453
    %s3457 = scalar_lea.vmem [#allocation5], 8
    %v3458 = vld [vmem:[%s3457] ss:$10 sm:$0xff]
    %v3459 = vld [vmem:[%s7 + $0x100] sm:$0xff]
    %v3460 = vld [vmem:[%s7 + $0x108] sm:$0xff]
    %v3461 = vld [vmem:[%s7 + $0x110] sm:$0xff]
    %v3462 = vld [vmem:[%s7 + $0x118] sm:$0xff]
    %v3464 = vsel %vm60, %v3458, 0
    %3466 = vmatprep.subr.mxu0 0.0
    %3467 = vmatpush1.msra.mxu0 0.0
    %3468 = vmatprep.subr.mxu0 0.0
    %3469 = vmatpush1.msra.mxu0 0.0
    %3470 = vmatprep.subr.mxu0 0.0
    %3471 = vmatpush1.msra.mxu0 0.0
    %3472 = vmatprep.subr.mxu0 0.0
    %3473 = vmatpush1.msra.mxu0 0.0
    %3474 = vmatprep.subr.mxu0 0.0
    %3475 = vmatpush1.msra.mxu0 0.0
    %3476 = vmatprep.subr.mxu0 0.0
    %3477 = vmatpush1.msra.mxu0 0.0
    %3478 = vmatprep.subr.mxu0 0.0
    %3479 = vmatpush1.msra.mxu0 0.0
    %3480 = vmatprep.subr.mxu0 0.0
    %3481 = vmatpush1.msra.mxu0 0.0
    %3482 = vmatprep.subr.mxu0 0.0
    %3483 = vmatpush1.msra.mxu0 0.0
    %3484 = vmatprep.subr.mxu0 0.0
    %3485 = vmatpush1.msra.mxu0 0.0
    %3486 = vmatprep.subr.mxu0 0.0
    %3487 = vmatpush1.msra.mxu0 0.0
    %3488 = vmatprep.subr.mxu0 0.0
    %3489 = vmatpush1.msra.mxu0 0.0
    %3490 = vmatprep.subr.mxu0 0.0
    %3491 = vmatpush1.msra.mxu0 %v3462
    %3492 = vmatprep.subr.mxu0 0.0
    %3493 = vmatpush1.msra.mxu0 %v3461
    %3494 = vmatprep.subr.mxu0 0.0
    %3495 = vmatpush1.msra.mxu0 %v3460
    %3496 = vmatprep.subr.mxu0 0.0
    %3497 = vmatpush1.msra.mxu0 %v3459
    %3498 = vmatprep.subr.mxu0 0.0
    %3499 = vmatpush2.msra.mxu0 0.0
    %3500 = vmatprep.subr.mxu0 0.0
    %3501 = vmatpush2.msra.mxu0 0.0
    %3502 = vmatprep.subr.mxu0 0.0
    %3503 = vmatpush2.msra.mxu0 0.0
    %3504 = vmatprep.subr.mxu0 0.0
    %3505 = vmatpush2.msra.mxu0 0.0
    %3506 = vmatprep.subr.mxu0 0.0
    %3507 = vmatpush2.msra.mxu0 0.0
    %3508 = vmatprep.subr.mxu0 0.0
    %3509 = vmatpush2.msra.mxu0 0.0
    %3510 = vmatprep.subr.mxu0 0.0
    %3511 = vmatpush2.msra.mxu0 0.0
    %3512 = vmatprep.subr.mxu0 0.0
    %3513 = vmatpush2.msra.mxu0 0.0
    %3514 = vmatprep.subr.mxu0 0.0
    %3515 = vmatpush2.msra.mxu0 0.0
    %3516 = vmatprep.subr.mxu0 0.0
    %3517 = vmatpush2.msra.mxu0 0.0
    %3518 = vmatprep.subr.mxu0 0.0
    %3519 = vmatpush2.msra.mxu0 0.0
    %3520 = vmatprep.subr.mxu0 0.0
    %3521 = vmatpush2.msra.mxu0 0.0
    %3522 = vmatprep.subr.mxu0 0.0
    %3523 = vmatpush2.msra.mxu0 0.0
    %3524 = vmatprep.subr.mxu0 0.0
    %3525 = vmatpush2.msra.mxu0 0.0
    %3526 = vmatprep.subr.mxu0 0.0
    %3527 = vmatpush2.msra.mxu0 0.0
    %3528 = vmatprep.subr.mxu0 0.0
    %3529 = vmatpush2.msra.mxu0 0.0
    %3530 = vmatprep.mubr.f32.mxu0 0.0
    %3531 = vmatmul.mubr.f32.gmra.mxu0 %v3464
    %v3532 = vpop.f32.mrf.mxu0
    %v3533 = vadd.f32 0.0, %v3532
    %v3534 = vpop.f32.mrf.mxu0
    %3535 = vdwg.mxu0
    %v3536 = vadd.f32 %v3456, %v3533
    %s3537 = scalar_lea.vmem [#allocation5], 9
    %v3538 = vld [vmem:[%s3537] ss:$10 sm:$0xff]
    %v3539 = vld [vmem:[%s7 + $0x120] sm:$0xff]
    %v3540 = vld [vmem:[%s7 + $0x128] sm:$0xff]
    %v3541 = vld [vmem:[%s7 + $0x130] sm:$0xff]
    %v3542 = vld [vmem:[%s7 + $0x138] sm:$0xff]
    %v3544 = vsel %vm60, %v3538, 0
    %3546 = vmatprep.subr.mxu0 0.0
    %3547 = vmatpush1.msra.mxu0 0.0
    %3548 = vmatprep.subr.mxu0 0.0
    %3549 = vmatpush1.msra.mxu0 0.0
    %3550 = vmatprep.subr.mxu0 0.0
    %3551 = vmatpush1.msra.mxu0 0.0
    %3552 = vmatprep.subr.mxu0 0.0
    %3553 = vmatpush1.msra.mxu0 0.0
    %3554 = vmatprep.subr.mxu0 0.0
    %3555 = vmatpush1.msra.mxu0 0.0
    %3556 = vmatprep.subr.mxu0 0.0
    %3557 = vmatpush1.msra.mxu0 0.0
    %3558 = vmatprep.subr.mxu0 0.0
    %3559 = vmatpush1.msra.mxu0 0.0
    %3560 = vmatprep.subr.mxu0 0.0
    %3561 = vmatpush1.msra.mxu0 0.0
    %3562 = vmatprep.subr.mxu0 0.0
    %3563 = vmatpush1.msra.mxu0 0.0
    %3564 = vmatprep.subr.mxu0 0.0
    %3565 = vmatpush1.msra.mxu0 0.0
    %3566 = vmatprep.subr.mxu0 0.0
    %3567 = vmatpush1.msra.mxu0 0.0
    %3568 = vmatprep.subr.mxu0 0.0
    %3569 = vmatpush1.msra.mxu0 0.0
    %3570 = vmatprep.subr.mxu0 0.0
    %3571 = vmatpush1.msra.mxu0 %v3542
    %3572 = vmatprep.subr.mxu0 0.0
    %3573 = vmatpush1.msra.mxu0 %v3541
    %3574 = vmatprep.subr.mxu0 0.0
    %3575 = vmatpush1.msra.mxu0 %v3540
    %3576 = vmatprep.subr.mxu0 0.0
    %3577 = vmatpush1.msra.mxu0 %v3539
    %3578 = vmatprep.subr.mxu0 0.0
    %3579 = vmatpush2.msra.mxu0 0.0
    %3580 = vmatprep.subr.mxu0 0.0
    %3581 = vmatpush2.msra.mxu0 0.0
    %3582 = vmatprep.subr.mxu0 0.0
    %3583 = vmatpush2.msra.mxu0 0.0
    %3584 = vmatprep.subr.mxu0 0.0
    %3585 = vmatpush2.msra.mxu0 0.0
    %3586 = vmatprep.subr.mxu0 0.0
    %3587 = vmatpush2.msra.mxu0 0.0
    %3588 = vmatprep.subr.mxu0 0.0
    %3589 = vmatpush2.msra.mxu0 0.0
    %3590 = vmatprep.subr.mxu0 0.0
    %3591 = vmatpush2.msra.mxu0 0.0
    %3592 = vmatprep.subr.mxu0 0.0
    %3593 = vmatpush2.msra.mxu0 0.0
    %3594 = vmatprep.subr.mxu0 0.0
    %3595 = vmatpush2.msra.mxu0 0.0
    %3596 = vmatprep.subr.mxu0 0.0
    %3597 = vmatpush2.msra.mxu0 0.0
    %3598 = vmatprep.subr.mxu0 0.0
    %3599 = vmatpush2.msra.mxu0 0.0
    %3600 = vmatprep.subr.mxu0 0.0
    %3601 = vmatpush2.msra.mxu0 0.0
    %3602 = vmatprep.subr.mxu0 0.0
    %3603 = vmatpush2.msra.mxu0 0.0
    %3604 = vmatprep.subr.mxu0 0.0
    %3605 = vmatpush2.msra.mxu0 0.0
    %3606 = vmatprep.subr.mxu0 0.0
    %3607 = vmatpush2.msra.mxu0 0.0
    %3608 = vmatprep.subr.mxu0 0.0
    %3609 = vmatpush2.msra.mxu0 0.0
    %3610 = vmatprep.mubr.f32.mxu0 0.0
    %3611 = vmatmul.mubr.f32.gmra.mxu0 %v3544
    %v3612 = vpop.f32.mrf.mxu0
    %v3613 = vadd.f32 0.0, %v3612
    %v3614 = vpop.f32.mrf.mxu0
    %3615 = vdwg.mxu0
    %v3616 = vadd.f32 %v3536, %v3613
    %vm3617 = vcmask 80896
    %3618 = vst.msk [vmem:[#allocation6] sm:$0xff] %vm3617, %v3616
    // Predicated region
    $region46: #{forward.1} parent=1 // pred_check
      _
    $region47: #{forward.1} parent=1 // pred_check_branch
      %3620 = sbr.rel (0) target = $region49
    $region48: #{forward.1} parent=1 // pred_region
      %s3622 = ssub.s32 128, 128
      %3623 = vsyncadd [#allocation7], %s3622
      %s3625 = sshll.u32 [#allocation6], 4
      %s3626 = int_to_ptr.vmem [resolvable:$true] %s3625
      %3628 = dma.vmem_to_hbm [thread:$0]  %s3626, 128, %s11, [#allocation7]
    $region49: #{forward.1} parent=1 // pred_fallthru
      _
    // Predicated region
    $region50: #{forward.1} parent=1 // pred_check
      _
    $region51: #{forward.1} parent=1 // pred_check_branch
      %3630 = sbr.rel (0) target = $region53
    $region52: #{forward.1} parent=1 // pred_region
      %3631 = dma.done [#allocation7], 128
    $region53: #{forward.1} parent=1 // pred_fallthru
      _
    %3632 = vsyncpa [#allocation7], 1

</llo_original>
